<compile_context>
chip_gen: v7x
topology: tpu7x:2x2x1
jax: 0.10.0
libtpu: 0.0.40
codegen_flags: <defaults>
</compile_context>

<pallas_src>
import jax
import jax.numpy as jnp
from jax.experimental import pallas as pl
from jax.experimental.pallas import tpu as pltpu


# ---------------------------------------------------------------------------
# Fused decoder kernel (one batch element per grid step)
# ---------------------------------------------------------------------------
def _decoder_kernel(x_ref, w1_ref, b1_ref, w2_ref, b2_ref, o_ref):
    # x_ref : (1, H0, W0, C0) f32   channels-last input tile
    # w1_ref: (C1, 9*C0)      bf16  conv3 weights, K ordered (ky, kx, ci)
    # b1_ref: (1, C1)         f32
    # w2_ref: (C2, 9*C1)      bf16  conv4 weights, K ordered (ky, kx, ci)
    # b2_ref: (C2, 1)         f32
    # o_ref : (1, C2, 16*H0*W0) f32 lane-dense output slab (C2, H2*W2)
    _, H0, W0, C0 = x_ref.shape
    C1 = b1_ref.shape[1]

    def upsample2x(img):
        # nearest-neighbour x2 along both spatial dims; channels stay in lanes.
        H, W, C = img.shape
        r = jnp.concatenate([img[:, None], img[:, None]], axis=1)          # (H,2,W,C)
        r = r.reshape(2 * H, W, C)                                         # rows doubled
        c = jnp.concatenate([r[:, :, None, :], r[:, :, None, :]], axis=2)  # (2H,W,2,C)
        return c.reshape(2 * H, 2 * W, C)                                  # cols doubled

    def pad1(img):
        # zero-pad H and W by 1 (padding=1 of the 3x3 conv), built in VMEM.
        H, W, C = img.shape
        zr = jnp.zeros((1, W, C), img.dtype)
        t = jnp.concatenate([zr, img, zr], axis=0)                         # (H+2, W, C)
        zc = jnp.zeros((H + 2, 1, C), img.dtype)
        return jnp.concatenate([zc, t, zc], axis=1)                        # (H+2, W+2, C)

    def im2col3x3(imgp, H, W):
        # imgp: (H+2, W+2, C)  ->  (H*W, 9*C), K ordered (ky, kx, ci)
        C = imgp.shape[-1]
        xw = jnp.concatenate([imgp[:, kx:kx + W, :] for kx in range(3)], axis=-1)  # (H+2, W, 3C)
        pat = jnp.concatenate([xw[ky:ky + H] for ky in range(3)], axis=-1)         # (H, W, 9C)
        return pat.reshape(H * W, 9 * C)

    # ---- stage 1: upsample x2 -> conv3 (C0 -> C1) -> ReLU -----------------
    x = x_ref[0].astype(jnp.bfloat16)                    # (H0, W0, C0) bf16 data path
    H1, W1 = 2 * H0, 2 * W0
    p1 = im2col3x3(pad1(upsample2x(x)), H1, W1)          # (H1*W1, 9*C0) bf16
    a1 = jax.lax.dot_general(                            # (H1*W1, C1), f32 acc
        p1, w1_ref[...],
        (((1,), (1,)), ((), ())), preferred_element_type=jnp.float32)
    a1 = jnp.maximum(a1 + b1_ref[...], 0.0)
    # Cast back to bf16 before the second im2col (it would be cast for the MXU
    # anyway) so the (1024, 144) patch matrix is built with half the vregs.
    img1 = a1.astype(jnp.bfloat16).reshape(H1, W1, C1)   # 16x16x16, stays in VMEM

    # ---- stage 2: upsample x2 -> conv4 (C1 -> C2) -> sigmoid --------------
    H2, W2 = 2 * H1, 2 * W1
    p2 = im2col3x3(pad1(upsample2x(img1)), H2, W2)       # (H2*W2, 9*C1) bf16
    a2 = jax.lax.dot_general(                            # (C2, H2*W2)  lane-dense accumulator
        w2_ref[...], p2,
        (((1,), (1,)), ((), ())), preferred_element_type=jnp.float32)
    a2 = a2 + b2_ref[...]
    # sigmoid = 1 / (1 + exp(-x)): exp and approx reciprocal both run on the EUP.
    o_ref[0] = pl.reciprocal(1.0 + jnp.exp(-a2), approx=True).astype(o_ref.dtype)


# ---------------------------------------------------------------------------
# Decoder forward (public API: NCHW in, NCHW out, like PyTorch)
# ---------------------------------------------------------------------------
def decoder_forward(x_nchw, params):
    N, C0, H0, W0 = x_nchw.shape
    w1, w2 = params["w3"], params["w4"]          # HWIO: (3,3,C0,C1), (3,3,C1,C2)
    C1, C2 = w1.shape[-1], w2.shape[-1]
    H2, W2 = 4 * H0, 4 * W0

    # Layout plumbing (free at this size): channels-last input, matrix weights
    # with K ordered (ky, kx, ci) to match the kernel's im2col.
    x_nhwc = jnp.transpose(x_nchw, (0, 2, 3, 1))
    w1_mat = jnp.transpose(w1, (3, 0, 1, 2)).reshape(C1, 9 * C0).astype(jnp.bfloat16)
    w2_mat = jnp.transpose(w2, (3, 0, 1, 2)).reshape(C2, 9 * C1).astype(jnp.bfloat16)
    b1 = params["b3"].reshape(1, C1).astype(jnp.float32)
    b2 = params["b4"].reshape(C2, 1).astype(jnp.float32)

    out_flat = pl.pallas_call(
        _decoder_kernel,
        out_shape=jax.ShapeDtypeStruct((N, C2, H2 * W2), jnp.float32),
        grid=(N,),
        in_specs=[
            pl.BlockSpec((1, H0, W0, C0), lambda n: (n, 0, 0, 0)),
            pl.BlockSpec((C1, 9 * C0), lambda n: (0, 0)),
            pl.BlockSpec((1, C1), lambda n: (0, 0)),
            pl.BlockSpec((C2, 9 * C1), lambda n: (0, 0)),
            pl.BlockSpec((C2, 1), lambda n: (0, 0)),
        ],
        out_specs=pl.BlockSpec((1, C2, H2 * W2), lambda n: (n, 0, 0)),
        compiler_params=pltpu.CompilerParams(
            dimension_semantics=("parallel",)),   # lets v7x shard batch over 2 TCs
    )(x_nhwc, w1_mat, b1, w2_mat, b2)

    # lane-dense slab -> NCHW (contiguous reshape, effectively free)
    return out_flat.reshape(N, C2, H2, W2)


def init_params(key):
    # Conv2d(8,16,3,pad=1) and Conv2d(16,3,3,pad=1), HWIO layout, PyTorch-style init.
    k3w, k3b, k4w, k4b = jax.random.split(key, 4)
    s3 = 1.0 / jnp.sqrt(8.0 * 9.0)
    s4 = 1.0 / jnp.sqrt(16.0 * 9.0)
    return {
        "w3": jax.random.uniform(k3w, (3, 3, 8, 16), jnp.float32, -s3, s3),
        "b3": jax.random.uniform(k3b, (16,), jnp.float32, -s3, s3),
        "w4": jax.random.uniform(k4w, (3, 3, 16, 3), jnp.float32, -s4, s4),
        "b4": jax.random.uniform(k4b, (3,), jnp.float32, -s4, s4),
    }


# ---------------------------------------------------------------------------
# Pure-JAX reference (f32 everywhere) for a sanity check
# ---------------------------------------------------------------------------
def decoder_reference(x_nchw, params):
    x = jnp.transpose(x_nchw, (0, 2, 3, 1))
    x = jnp.repeat(jnp.repeat(x, 2, axis=1), 2, axis=2)
    x = jax.lax.conv_general_dilated(
        x, params["w3"], (1, 1), "SAME",
        dimension_numbers=("NHWC", "HWIO", "NHWC")) + params["b3"]
    x = jnp.maximum(x, 0.0)
    x = jnp.repeat(jnp.repeat(x, 2, axis=1), 2, axis=2)
    x = jax.lax.conv_general_dilated(
        x, params["w4"], (1, 1), "SAME",
        dimension_numbers=("NHWC", "HWIO", "NHWC")) + params["b4"]
    x = jax.nn.sigmoid(x)
    return jnp.transpose(x, (0, 3, 1, 2))


if __name__ == "__main__":
    key = jax.random.PRNGKey(0)
    kp, kx = jax.random.split(key)
    params = init_params(kp)

    # Decoder input: NCHW, 8 channels, 8x8 spatial (CIFAR-10 AE latent).
    x = jax.random.normal(kx, (2, 8, 8, 8), dtype=jnp.float32)

    out = jax.jit(decoder_forward)(x, params)
    out = jax.block_until_ready(out)
    assert out.shape == (2, 3, 32, 32), out.shape

    ref = jax.block_until_ready(decoder_reference(x, params))
    assert jnp.allclose(out, ref, atol=1e-2, rtol=1e-2), \
        float(jnp.max(jnp.abs(out - ref)))

    print("KERNEL_OK")
</pallas_src>

<mosaic_0001>
module attributes {stable_mosaic.version = 11 : i64} {
  func.func @_decoder_kernel(%arg0: i32, %arg1: memref<1x8x8x8xf32, #tpu.memory_space<vmem>>, %arg2: memref<16x72xbf16, #tpu.memory_space<vmem>>, %arg3: memref<1x16xf32, #tpu.memory_space<vmem>>, %arg4: memref<3x144xbf16, #tpu.memory_space<vmem>>, %arg5: memref<3x1xf32, #tpu.memory_space<vmem>>, %arg6: memref<1x3x1024xf32, #tpu.memory_space<vmem>>) attributes {dimension_semantics = [#tpu.dimension_semantics<parallel>], iteration_bounds = array<i64: 2>, scalar_prefetch = 0 : i64, scratch_operands = 0 : i64, tpu.core_type = #tpu.core_type<tc>, window_params = [{transform_indices = @transform_0, window_bounds = array<i64: 1, 8, 8, 8>}, {pipeline_mode = #tpu.pipeline_mode<synchronous>, transform_indices = @transform_1, window_bounds = array<i64: 16, 72>}, {pipeline_mode = #tpu.pipeline_mode<synchronous>, transform_indices = @transform_2, window_bounds = array<i64: 1, 16>}, {pipeline_mode = #tpu.pipeline_mode<synchronous>, transform_indices = @transform_3, window_bounds = array<i64: 3, 144>}, {pipeline_mode = #tpu.pipeline_mode<synchronous>, transform_indices = @transform_4, window_bounds = array<i64: 3, 1>}, {transform_indices = @transform_5, window_bounds = array<i64: 1, 3, 1024>}]} {
    %c0 = arith.constant 0 : index
    %c0_0 = arith.constant 0 : index
    %c0_1 = arith.constant 0 : index
    %c0_2 = arith.constant 0 : index
    %0 = vector.load %arg1[%c0, %c0_0, %c0_1, %c0_2] : memref<1x8x8x8xf32, #tpu.memory_space<vmem>>, vector<1x8x8x8xf32>
    %1 = vector.shape_cast %0 : vector<1x8x8x8xf32> to vector<8x8x8xf32>
    %2 = arith.truncf %1 : vector<8x8x8xf32> to vector<8x8x8xbf16>
    %3 = vector.shape_cast %2 : vector<8x8x8xbf16> to vector<8x1x8x8xbf16>
    %4 = vector.shape_cast %2 : vector<8x8x8xbf16> to vector<8x1x8x8xbf16>
    %5 = tpu.concatenate %3, %4 in 1 : vector<8x1x8x8xbf16>, vector<8x1x8x8xbf16> -> vector<8x2x8x8xbf16>
    %6 = vector.shape_cast %5 : vector<8x2x8x8xbf16> to vector<16x8x8xbf16>
    %7 = vector.shape_cast %6 : vector<16x8x8xbf16> to vector<16x8x1x8xbf16>
    %8 = vector.shape_cast %6 : vector<16x8x8xbf16> to vector<16x8x1x8xbf16>
    %9 = tpu.concatenate %7, %8 in 2 : vector<16x8x1x8xbf16>, vector<16x8x1x8xbf16> -> vector<16x8x2x8xbf16>
    %10 = vector.shape_cast %9 : vector<16x8x2x8xbf16> to vector<16x16x8xbf16>
    %cst = arith.constant 0.000000e+00 : bf16
    %11 = vector.broadcast %cst : bf16 to vector<1x16x8xbf16>
    %12 = tpu.concatenate %11, %10, %11 in 0 : vector<1x16x8xbf16>, vector<16x16x8xbf16>, vector<1x16x8xbf16> -> vector<18x16x8xbf16>
    %cst_3 = arith.constant 0.000000e+00 : bf16
    %13 = vector.broadcast %cst_3 : bf16 to vector<18x1x8xbf16>
    %14 = tpu.concatenate %13, %12, %13 in 1 : vector<18x1x8xbf16>, vector<18x16x8xbf16>, vector<18x1x8xbf16> -> vector<18x18x8xbf16>
    %15 = vector.extract_strided_slice %14 {offsets = [0, 0, 0], sizes = [18, 16, 8], strides = [1, 1, 1]} : vector<18x18x8xbf16> to vector<18x16x8xbf16>
    %16 = vector.extract_strided_slice %14 {offsets = [0, 1, 0], sizes = [18, 16, 8], strides = [1, 1, 1]} : vector<18x18x8xbf16> to vector<18x16x8xbf16>
    %17 = vector.extract_strided_slice %14 {offsets = [0, 2, 0], sizes = [18, 16, 8], strides = [1, 1, 1]} : vector<18x18x8xbf16> to vector<18x16x8xbf16>
    %18 = tpu.concatenate %15, %16, %17 in 2 : vector<18x16x8xbf16>, vector<18x16x8xbf16>, vector<18x16x8xbf16> -> vector<18x16x24xbf16>
    %19 = vector.extract_strided_slice %18 {offsets = [0, 0, 0], sizes = [16, 16, 24], strides = [1, 1, 1]} : vector<18x16x24xbf16> to vector<16x16x24xbf16>
    %20 = vector.extract_strided_slice %18 {offsets = [1, 0, 0], sizes = [16, 16, 24], strides = [1, 1, 1]} : vector<18x16x24xbf16> to vector<16x16x24xbf16>
    %21 = vector.extract_strided_slice %18 {offsets = [2, 0, 0], sizes = [16, 16, 24], strides = [1, 1, 1]} : vector<18x16x24xbf16> to vector<16x16x24xbf16>
    %22 = tpu.concatenate %19, %20, %21 in 2 : vector<16x16x24xbf16>, vector<16x16x24xbf16>, vector<16x16x24xbf16> -> vector<16x16x72xbf16>
    %23 = vector.shape_cast %22 : vector<16x16x72xbf16> to vector<256x72xbf16>
    %c0_4 = arith.constant 0 : index
    %c0_5 = arith.constant 0 : index
    %24 = vector.load %arg2[%c0_4, %c0_5] : memref<16x72xbf16, #tpu.memory_space<vmem>>, vector<16x72xbf16>
    %cst_6 = arith.constant dense<0.000000e+00> : vector<256x16xf32>
    %25 = tpu.matmul %23, %24, %cst_6 {dimension_numbers = #tpu.dot_dimension_numbers<[1], [1], [0], [0], [0, 0, 1, 0], [], []>} : vector<256x72xbf16>, vector<16x72xbf16>, vector<256x16xf32> -> vector<256x16xf32>
    %c0_7 = arith.constant 0 : index
    %c0_8 = arith.constant 0 : index
    %26 = vector.load %arg3[%c0_7, %c0_8] : memref<1x16xf32, #tpu.memory_space<vmem>>, vector<1x16xf32>
    %27 = vector.broadcast %26 : vector<1x16xf32> to vector<256x16xf32>
    %28 = arith.addf %25, %27 : vector<256x16xf32>
    %cst_9 = arith.constant 0.000000e+00 : f32
    %29 = vector.broadcast %cst_9 : f32 to vector<256x16xf32>
    %30 = arith.maximumf %28, %29 : vector<256x16xf32>
    %31 = arith.truncf %30 : vector<256x16xf32> to vector<256x16xbf16>
    %32 = vector.shape_cast %31 : vector<256x16xbf16> to vector<16x16x16xbf16>
    %33 = vector.shape_cast %32 : vector<16x16x16xbf16> to vector<16x1x16x16xbf16>
    %34 = vector.shape_cast %32 : vector<16x16x16xbf16> to vector<16x1x16x16xbf16>
    %35 = tpu.concatenate %33, %34 in 1 : vector<16x1x16x16xbf16>, vector<16x1x16x16xbf16> -> vector<16x2x16x16xbf16>
    %36 = vector.shape_cast %35 : vector<16x2x16x16xbf16> to vector<32x16x16xbf16>
    %37 = vector.shape_cast %36 : vector<32x16x16xbf16> to vector<32x16x1x16xbf16>
    %38 = vector.shape_cast %36 : vector<32x16x16xbf16> to vector<32x16x1x16xbf16>
    %39 = tpu.concatenate %37, %38 in 2 : vector<32x16x1x16xbf16>, vector<32x16x1x16xbf16> -> vector<32x16x2x16xbf16>
    %40 = vector.shape_cast %39 : vector<32x16x2x16xbf16> to vector<32x32x16xbf16>
    %cst_10 = arith.constant 0.000000e+00 : bf16
    %41 = vector.broadcast %cst_10 : bf16 to vector<1x32x16xbf16>
    %42 = tpu.concatenate %41, %40, %41 in 0 : vector<1x32x16xbf16>, vector<32x32x16xbf16>, vector<1x32x16xbf16> -> vector<34x32x16xbf16>
    %cst_11 = arith.constant 0.000000e+00 : bf16
    %43 = vector.broadcast %cst_11 : bf16 to vector<34x1x16xbf16>
    %44 = tpu.concatenate %43, %42, %43 in 1 : vector<34x1x16xbf16>, vector<34x32x16xbf16>, vector<34x1x16xbf16> -> vector<34x34x16xbf16>
    %45 = vector.extract_strided_slice %44 {offsets = [0, 0, 0], sizes = [34, 32, 16], strides = [1, 1, 1]} : vector<34x34x16xbf16> to vector<34x32x16xbf16>
    %46 = vector.extract_strided_slice %44 {offsets = [0, 1, 0], sizes = [34, 32, 16], strides = [1, 1, 1]} : vector<34x34x16xbf16> to vector<34x32x16xbf16>
    %47 = vector.extract_strided_slice %44 {offsets = [0, 2, 0], sizes = [34, 32, 16], strides = [1, 1, 1]} : vector<34x34x16xbf16> to vector<34x32x16xbf16>
    %48 = tpu.concatenate %45, %46, %47 in 2 : vector<34x32x16xbf16>, vector<34x32x16xbf16>, vector<34x32x16xbf16> -> vector<34x32x48xbf16>
    %49 = vector.extract_strided_slice %48 {offsets = [0, 0, 0], sizes = [32, 32, 48], strides = [1, 1, 1]} : vector<34x32x48xbf16> to vector<32x32x48xbf16>
    %50 = vector.extract_strided_slice %48 {offsets = [1, 0, 0], sizes = [32, 32, 48], strides = [1, 1, 1]} : vector<34x32x48xbf16> to vector<32x32x48xbf16>
    %51 = vector.extract_strided_slice %48 {offsets = [2, 0, 0], sizes = [32, 32, 48], strides = [1, 1, 1]} : vector<34x32x48xbf16> to vector<32x32x48xbf16>
    %52 = tpu.concatenate %49, %50, %51 in 2 : vector<32x32x48xbf16>, vector<32x32x48xbf16>, vector<32x32x48xbf16> -> vector<32x32x144xbf16>
    %53 = vector.shape_cast %52 : vector<32x32x144xbf16> to vector<1024x144xbf16>
    %c0_12 = arith.constant 0 : index
    %c0_13 = arith.constant 0 : index
    %54 = vector.load %arg4[%c0_12, %c0_13] : memref<3x144xbf16, #tpu.memory_space<vmem>>, vector<3x144xbf16>
    %cst_14 = arith.constant dense<0.000000e+00> : vector<3x1024xf32>
    %55 = tpu.matmul %54, %53, %cst_14 {dimension_numbers = #tpu.dot_dimension_numbers<[1], [1], [0], [0], [0, 0, 1, 0], [], []>} : vector<3x144xbf16>, vector<1024x144xbf16>, vector<3x1024xf32> -> vector<3x1024xf32>
    %c0_15 = arith.constant 0 : index
    %c0_16 = arith.constant 0 : index
    %56 = vector.load %arg5[%c0_15, %c0_16] : memref<3x1xf32, #tpu.memory_space<vmem>>, vector<3x1xf32>
    %57 = vector.broadcast %56 : vector<3x1xf32> to vector<3x1024xf32>
    %58 = arith.addf %55, %57 : vector<3x1024xf32>
    %cst_17 = arith.constant 0.000000e+00 : f32
    %59 = vector.broadcast %cst_17 : f32 to vector<3x1024xf32>
    %60 = arith.subf %59, %58 : vector<3x1024xf32>
    %61 = math.exp %60 : vector<3x1024xf32>
    %cst_18 = arith.constant 1.000000e+00 : f32
    %62 = vector.broadcast %cst_18 : f32 to vector<3x1024xf32>
    %63 = arith.addf %62, %61 : vector<3x1024xf32>
    %64 = tpu.reciprocal %63 {approx = true} : vector<3x1024xf32> -> vector<3x1024xf32>
    %c0_19 = arith.constant 0 : index
    %c0_20 = arith.constant 0 : index
    %c0_21 = arith.constant 0 : index
    %65 = vector.load %arg6[%c0_19, %c0_20, %c0_21] : memref<1x3x1024xf32, #tpu.memory_space<vmem>>, vector<1x3x1024xf32>
    %66 = vector.shape_cast %65 : vector<1x3x1024xf32> to vector<3x1024xf32>
    %67 = vector.shape_cast %64 : vector<3x1024xf32> to vector<1x3x1024xf32>
    tpu.vector_store %arg6[%c0_19, %c0_20, %c0_21], %67 {strides = array<i32>} : memref<1x3x1024xf32, #tpu.memory_space<vmem>>, vector<1x3x1024xf32>,
    return
  }
  func.func @transform_0(%arg0: i32) -> (i32, i32, i32, i32) {
    %c0_i32 = arith.constant 0 : i32
    %c0_i32_0 = arith.constant 0 : i32
    %c0_i32_1 = arith.constant 0 : i32
    %c0_i32_2 = arith.constant 0 : i32
    return %arg0, %c0_i32, %c0_i32_0, %c0_i32_1 : i32, i32, i32, i32
  }
  func.func @transform_1(%arg0: i32) -> (i32, i32) {
    %c0_i32 = arith.constant 0 : i32
    %c0_i32_0 = arith.constant 0 : i32
    %c0_i32_1 = arith.constant 0 : i32
    return %c0_i32, %c0_i32_0 : i32, i32
  }
  func.func @transform_2(%arg0: i32) -> (i32, i32) {
    %c0_i32 = arith.constant 0 : i32
    %c0_i32_0 = arith.constant 0 : i32
    %c0_i32_1 = arith.constant 0 : i32
    return %c0_i32, %c0_i32_0 : i32, i32
  }
  func.func @transform_3(%arg0: i32) -> (i32, i32) {
    %c0_i32 = arith.constant 0 : i32
    %c0_i32_0 = arith.constant 0 : i32
    %c0_i32_1 = arith.constant 0 : i32
    return %c0_i32, %c0_i32_0 : i32, i32
  }
  func.func @transform_4(%arg0: i32) -> (i32, i32) {
    %c0_i32 = arith.constant 0 : i32
    %c0_i32_0 = arith.constant 0 : i32
    %c0_i32_1 = arith.constant 0 : i32
    return %c0_i32, %c0_i32_0 : i32, i32
  }
  func.func @transform_5(%arg0: i32) -> (i32, i32, i32) {
    %c0_i32 = arith.constant 0 : i32
    %c0_i32_0 = arith.constant 0 : i32
    %c0_i32_1 = arith.constant 0 : i32
    return %arg0, %c0_i32, %c0_i32_0 : i32, i32, i32
  }
}

</mosaic_0001>

<llo_original>
// kernel: decoder_forward.1
$region0: #{decoder_forward.1}
  #allocation0 [shape = 'u32[]', space=smem, size = 0x4, offset = 0x4, fixed_abs, tag = 'smem constant byte address 0x4 - core index']
  #allocation1 [shape = 'u32[144,128]{1,0:T(1,128)}', space=vmem, size = 0x12000, scoped, tag = 'internal scratch']
  %s0 = inlined_call_operand.vmem [shape: f32[2,8,8,8], index: 0, kind: input, shape index: {}]
  %s1 = inlined_call_operand.vmem [shape: bf16[16,72], index: 1, kind: input, shape index: {}]
  %s2 = inlined_call_operand.vmem [shape: f32[1,16], index: 2, kind: input, shape index: {}]
  %s3 = inlined_call_operand.vmem [shape: bf16[3,144], index: 3, kind: input, shape index: {}]
  %s4 = inlined_call_operand.vmem [shape: f32[3,1], index: 4, kind: input, shape index: {}]
  %s5 = inlined_call_operand.vmem [shape: f32[2,3,1024], index: 5, kind: output, shape index: {}]
  %s6 = sld [smem:[#allocation0]]
  $region53: #{decoder_forward.1} parent=0
    _
  %s8 = ssub.s32 1, %s6
  %s9 = scalar_select 0, %s8, %s6
  loop: start=0, step=1, limit=4
  $region2: #{decoder_forward.1} parent=0 // loop_pre_header
    _
  $region3: #{decoder_forward.1} parent=0 // loop_header
    %s11 = sphi 0, %s15
    %p12 = scmp.ge.s32.totalorder %s11, 4
    %s21 = sphi 0, %s23
    %s24 = sphi 0, %s21
    %s25 = sphi 0, %s24
    %s41 = sphi 0, %s25
    %s45 = sphi 0, %s45
    %s47 = sphi 0, %s45
    %s48 = sphi 0, %s47
    %s62 = sphi 0, %s48
    %s66 = sphi 0, %s66
    %s68 = sphi 0, %s66
    %s69 = sphi 0, %s68
    %s83 = sphi 0, %s69
    %s87 = sphi 0, %s87
    %s89 = sphi 0, %s87
    %s90 = sphi 0, %s89
    %s104 = sphi 0, %s90
    %s108 = sphi 0, %s108
    %s110 = sphi 0, %s108
    %s111 = sphi 0, %s110
    %s125 = sphi 0, %s111
    %s131 = sphi 0, %s133
    %s134 = sphi 0, %s131
    %s135 = sphi 0, %s134
    %s151 = sphi 0, %s135
  $region4: #{decoder_forward.1} parent=0 // loop_header_branch
    %14 = sbr.rel (%p12) target = $region8
  $region5: #{decoder_forward.1} parent=0 // loop_body
    %s16 = ssub.s32 %s11, 1
    %s17 = ssub.s32 %s11, 2
    %s18 = sadd.s32 %s11, 1
    %s19 = ssub.s32 %s11, %s18
    %p20 = scmp.eq.s32.totalorder %s19, 0
    %s22 = sadd.s32 %s21, 1
    %s23 = scalar_select %p20, %s21, %s22
    %p26 = pneg %p20
    %p27 = scmp.eq.s32.totalorder %s11, 1
    %p28 = por %p26, %p27
    %p29 = scmp.ne.s32.totalorder %s21, %s24
    %p30 = scmp.eq.s32.totalorder %s11, 0
    %p31 = por %p29, %p30
    %p32 = scmp.ne.s32.totalorder %s21, %s24
    %p33 = scmp.eq.s32.totalorder %s16, 1
    %p34 = por %p32, %p33
    %p35 = scmp.ne.s32.totalorder %s24, %s25
    %p36 = scmp.eq.s32.totalorder %s16, 0
    %p37 = por %p35, %p36
    %p38 = scmp.ne.s32.totalorder %s24, %s25
    %p39 = scmp.eq.s32.totalorder %s17, 1
    %p40 = por %p38, %p39
    %p42 = scmp.ne.s32.totalorder %s25, %s41
    %p43 = scmp.eq.s32.totalorder %s17, 0
    %p44 = por %p42, %p43
    %s46 = sadd.s32 %s45, 1
    %p49 = scmp.eq.s32.totalorder %s11, 1
    %p50 = scmp.ne.s32.totalorder %s45, %s47
    %p51 = scmp.eq.s32.totalorder %s11, 0
    %p52 = por %p50, %p51
    %p53 = scmp.ne.s32.totalorder %s45, %s47
    %p54 = scmp.eq.s32.totalorder %s16, 1
    %p55 = por %p53, %p54
    %p56 = scmp.ne.s32.totalorder %s47, %s48
    %p57 = scmp.eq.s32.totalorder %s16, 0
    %p58 = por %p56, %p57
    %p59 = scmp.ne.s32.totalorder %s47, %s48
    %p60 = scmp.eq.s32.totalorder %s17, 1
    %p61 = por %p59, %p60
    %p63 = scmp.ne.s32.totalorder %s48, %s62
    %p64 = scmp.eq.s32.totalorder %s17, 0
    %p65 = por %p63, %p64
    %s67 = sadd.s32 %s66, 1
    %p70 = scmp.eq.s32.totalorder %s11, 1
    %p71 = scmp.ne.s32.totalorder %s66, %s68
    %p72 = scmp.eq.s32.totalorder %s11, 0
    %p73 = por %p71, %p72
    %p74 = scmp.ne.s32.totalorder %s66, %s68
    %p75 = scmp.eq.s32.totalorder %s16, 1
    %p76 = por %p74, %p75
    %p77 = scmp.ne.s32.totalorder %s68, %s69
    %p78 = scmp.eq.s32.totalorder %s16, 0
    %p79 = por %p77, %p78
    %p80 = scmp.ne.s32.totalorder %s68, %s69
    %p81 = scmp.eq.s32.totalorder %s17, 1
    %p82 = por %p80, %p81
    %p84 = scmp.ne.s32.totalorder %s69, %s83
    %p85 = scmp.eq.s32.totalorder %s17, 0
    %p86 = por %p84, %p85
    %s88 = sadd.s32 %s87, 1
    %p91 = scmp.eq.s32.totalorder %s11, 1
    %p92 = scmp.ne.s32.totalorder %s87, %s89
    %p93 = scmp.eq.s32.totalorder %s11, 0
    %p94 = por %p92, %p93
    %p95 = scmp.ne.s32.totalorder %s87, %s89
    %p96 = scmp.eq.s32.totalorder %s16, 1
    %p97 = por %p95, %p96
    %p98 = scmp.ne.s32.totalorder %s89, %s90
    %p99 = scmp.eq.s32.totalorder %s16, 0
    %p100 = por %p98, %p99
    %p101 = scmp.ne.s32.totalorder %s89, %s90
    %p102 = scmp.eq.s32.totalorder %s17, 1
    %p103 = por %p101, %p102
    %p105 = scmp.ne.s32.totalorder %s90, %s104
    %p106 = scmp.eq.s32.totalorder %s17, 0
    %p107 = por %p105, %p106
    %s109 = sadd.s32 %s108, 1
    %p112 = scmp.eq.s32.totalorder %s11, 1
    %p113 = scmp.ne.s32.totalorder %s108, %s110
    %p114 = scmp.eq.s32.totalorder %s11, 0
    %p115 = por %p113, %p114
    %p116 = scmp.ne.s32.totalorder %s108, %s110
    %p117 = scmp.eq.s32.totalorder %s16, 1
    %p118 = por %p116, %p117
    %p119 = scmp.ne.s32.totalorder %s110, %s111
    %p120 = scmp.eq.s32.totalorder %s16, 0
    %p121 = por %p119, %p120
    %p122 = scmp.ne.s32.totalorder %s110, %s111
    %p123 = scmp.eq.s32.totalorder %s17, 1
    %p124 = por %p122, %p123
    %p126 = scmp.ne.s32.totalorder %s111, %s125
    %p127 = scmp.eq.s32.totalorder %s17, 0
    %p128 = por %p126, %p127
    %s129 = ssub.s32 %s11, %s18
    %p130 = scmp.eq.s32.totalorder %s129, 0
    %s132 = sadd.s32 %s131, 1
    %s133 = scalar_select %p130, %s131, %s132
    %p136 = pneg %p130
    %p137 = scmp.eq.s32.totalorder %s11, 1
    %p138 = por %p136, %p137
    %p139 = scmp.ne.s32.totalorder %s131, %s134
    %p140 = scmp.eq.s32.totalorder %s11, 0
    %p141 = por %p139, %p140
    %p142 = scmp.ne.s32.totalorder %s131, %s134
    %p143 = scmp.eq.s32.totalorder %s16, 1
    %p144 = por %p142, %p143
    %p145 = scmp.ne.s32.totalorder %s134, %s135
    %p146 = scmp.eq.s32.totalorder %s16, 0
    %p147 = por %p145, %p146
    %p148 = scmp.ne.s32.totalorder %s134, %s135
    %p149 = scmp.eq.s32.totalorder %s17, 1
    %p150 = por %p148, %p149
    %p152 = scmp.ne.s32.totalorder %s135, %s151
    %p153 = scmp.eq.s32.totalorder %s17, 0
    %p154 = por %p152, %p153
    %p155 = scmp.le.s32.totalorder 1, %s11
    %p156 = scmp.lt.s32.totalorder %s11, 3
    %p157 = pnand %p155, %p156
    %p158 = pneg %p157
    // Predicated region
    $region9: #{decoder_forward.1} parent=5 // pred_check
      _
    $region10: #{decoder_forward.1} parent=5 // pred_check_branch
      %160 = sbr.rel (%p157) target = $region12
    $region11: #{decoder_forward.1} parent=5 // pred_region
      %s161 = ssub.s32 %s11, 1
      // Predicated region
      $region13: #{decoder_forward.1} parent=11 // pred_check
        %p162 = pneg %p58
      $region14: #{decoder_forward.1} parent=11 // pred_check_branch
        %164 = sbr.rel (%p162) target = $region16
      $region15: #{decoder_forward.1} parent=11 // pred_region
        _
      $region16: #{decoder_forward.1} parent=11 // pred_fallthru
        _
      // Predicated region
      $region17: #{decoder_forward.1} parent=11 // pred_check
        %p165 = pneg %p79
      $region18: #{decoder_forward.1} parent=11 // pred_check_branch
        %167 = sbr.rel (%p165) target = $region20
      $region19: #{decoder_forward.1} parent=11 // pred_region
        _
      $region20: #{decoder_forward.1} parent=11 // pred_fallthru
        _
      // Predicated region
      $region21: #{decoder_forward.1} parent=11 // pred_check
        %p168 = pneg %p100
      $region22: #{decoder_forward.1} parent=11 // pred_check_branch
        %170 = sbr.rel (%p168) target = $region24
      $region23: #{decoder_forward.1} parent=11 // pred_region
        _
      $region24: #{decoder_forward.1} parent=11 // pred_fallthru
        _
      // Predicated region
      $region25: #{decoder_forward.1} parent=11 // pred_check
        %p171 = pneg %p121
      $region26: #{decoder_forward.1} parent=11 // pred_check_branch
        %173 = sbr.rel (%p171) target = $region28
      $region27: #{decoder_forward.1} parent=11 // pred_region
        _
      $region28: #{decoder_forward.1} parent=11 // pred_fallthru
        _
    $region12: #{decoder_forward.1} parent=5 // pred_fallthru
      _
    %p174 = scmp.lt.s32.totalorder %s11, 2
    // Predicated region
    $region29: #{decoder_forward.1} parent=5 // pred_check
      %p175 = pneg %p174
    $region30: #{decoder_forward.1} parent=5 // pred_check_branch
      %177 = sbr.rel (%p175) target = $region32
    $region31: #{decoder_forward.1} parent=5 // pred_region
      // Predicated region
      $region33: #{decoder_forward.1} parent=31 // pred_check
        %p178 = pneg %p31
      $region34: #{decoder_forward.1} parent=31 // pred_check_branch
        %180 = sbr.rel (%p178) target = $region36
      $region35: #{decoder_forward.1} parent=31 // pred_region
        %p181 = scmp.lt.s32.totalorder %s11, 1
        %s182 = scalar_select %p181, %s11, 1
        %s183 = smul.addr %s182, 8
        %s184 = smul.addr %s183, 8
        %s185 = scalar_lea.vmem %s0, %s184
      $region36: #{decoder_forward.1} parent=31 // pred_fallthru
        _
    $region32: #{decoder_forward.1} parent=5 // pred_fallthru
      _
    %p186 = scmp.le.s32.totalorder 1, %s11
    %p187 = scmp.lt.s32.totalorder %s11, 3
    %p188 = pnand %p186, %p187
    %p189 = pneg %p188
    // Predicated region
    $region37: #{decoder_forward.1} parent=5 // pred_check
      _
    $region38: #{decoder_forward.1} parent=5 // pred_check_branch
      %191 = sbr.rel (%p188) target = $region40
    $region39: #{decoder_forward.1} parent=5 // pred_region
      %s192 = ssub.s32 %s11, 1
      %p193 = scmp.lt.s32.totalorder %s16, 1
      %s194 = scalar_select %p193, %s16, 1
      %s195 = smul.addr %s194, 8
      %s196 = smul.addr %s195, 8
      %s197 = scalar_lea.vmem %s0, %s196
      %p198 = pneg %p37
      %p199 = pneg %p34
      %p200 = pneg %p58
      %p201 = pneg %p55
      %p202 = pneg %p79
      %p203 = pneg %p76
      %p204 = pneg %p100
      %p205 = pneg %p97
      %p206 = pneg %p121
      %p207 = pneg %p118
      %p208 = pneg %p147
      %p209 = pneg %p144
      %p210 = scmp.lt.s32.totalorder %s16, 1
      %s211 = scalar_select %p210, %s16, 1
      %s212 = smul.addr %s211, 8
      %s213 = smul.addr %s212, 4
      %s214 = scalar_lea.vmem %s5, %s213
      %p215 = scmp.lt.s32.totalorder %s16, 1
      %s216 = scalar_select %p215, %s16, 1
      %s217 = smul.addr %s216, 8
      %s218 = smul.addr %s217, 8
      %s219 = scalar_lea.vmem %s0, %s218
      %p220 = scmp.lt.s32.totalorder %s16, 1
      %s221 = scalar_select %p220, %s16, 1
      %s222 = smul.addr %s221, 8
      %s223 = smul.addr %s222, 4
      %s224 = scalar_lea.vmem %s5, %s223
      %v226 = vld [vmem:[%s219] sm:$0xff]
      %v227 = vld [vmem:[%s219 + $0x8] sm:$0xff]
      %v228 = vld [vmem:[%s219 + $0x10] sm:$0xff]
      %v229 = vld [vmem:[%s219 + $0x18] sm:$0xff]
      %v230 = vld [vmem:[%s219 + $0x20] sm:$0xff]
      %v231 = vld [vmem:[%s219 + $0x28] sm:$0xff]
      %v232 = vld [vmem:[%s219 + $0x30] sm:$0xff]
      %v233 = vld [vmem:[%s219 + $0x38] sm:$0xff]
      %v234 = vpack.c.bf16 %v226, %v226
      %v235 = vpack.c.bf16 %v227, %v227
      %v236 = vpack.c.bf16 %v228, %v228
      %v237 = vpack.c.bf16 %v229, %v229
      %v238 = vpack.c.bf16 %v230, %v230
      %v239 = vpack.c.bf16 %v231, %v231
      %v240 = vpack.c.bf16 %v232, %v232
      %v241 = vpack.c.bf16 %v233, %v233
      %v251 = vunpack.c.l.s4 1966171168
      %v252 = vunpack.c.0.s8 %v251
      %v253 = vlaneseq
      %v254 = vshrl.u32 %v253, 7
      %v255 = vsub.s32 %v252, %v254
      %v256 = vrot.slane %v234, %v255
      %v257 = vcombine.high %v256, %v256
      %v259 = vunpack.c.l.s4 1966171168
      %v260 = vunpack.c.0.s8 %v259
      %v261 = vlaneseq
      %v262 = vshrl.u32 %v261, 7
      %v263 = vsub.s32 %v260, %v262
      %v264 = vrot.slane %v256, %v263
      %v266 = vunpack.c.l.s4 1966171168
      %v267 = vunpack.c.0.s8 %v266
      %v268 = vlaneseq
      %v269 = vshrl.u32 %v268, 7
      %v270 = vsub.s32 %v267, %v269
      %v271 = vrot.slane %v257, %v270
      %v272 = vcombine.high %v264, %v264
      %v273 = vcombine.high %v271, %v271
      %v275 = vunpack.c.l.s4 1966171168
      %v276 = vunpack.c.0.s8 %v275
      %v277 = vlaneseq
      %v278 = vshrl.u32 %v277, 7
      %v279 = vsub.s32 %v276, %v278
      %v280 = vrot.slane %v235, %v279
      %v281 = vcombine.high %v280, %v280
      %v283 = vunpack.c.l.s4 1966171168
      %v284 = vunpack.c.0.s8 %v283
      %v285 = vlaneseq
      %v286 = vshrl.u32 %v285, 7
      %v287 = vsub.s32 %v284, %v286
      %v288 = vrot.slane %v280, %v287
      %v290 = vunpack.c.l.s4 1966171168
      %v291 = vunpack.c.0.s8 %v290
      %v292 = vlaneseq
      %v293 = vshrl.u32 %v292, 7
      %v294 = vsub.s32 %v291, %v293
      %v295 = vrot.slane %v281, %v294
      %v296 = vcombine.high %v288, %v288
      %v297 = vcombine.high %v295, %v295
      %v299 = vunpack.c.l.s4 1966171168
      %v300 = vunpack.c.0.s8 %v299
      %v301 = vlaneseq
      %v302 = vshrl.u32 %v301, 7
      %v303 = vsub.s32 %v300, %v302
      %v304 = vrot.slane %v236, %v303
      %v305 = vcombine.high %v304, %v304
      %v307 = vunpack.c.l.s4 1966171168
      %v308 = vunpack.c.0.s8 %v307
      %v309 = vlaneseq
      %v310 = vshrl.u32 %v309, 7
      %v311 = vsub.s32 %v308, %v310
      %v312 = vrot.slane %v304, %v311
      %v314 = vunpack.c.l.s4 1966171168
      %v315 = vunpack.c.0.s8 %v314
      %v316 = vlaneseq
      %v317 = vshrl.u32 %v316, 7
      %v318 = vsub.s32 %v315, %v317
      %v319 = vrot.slane %v305, %v318
      %v320 = vcombine.high %v312, %v312
      %v321 = vcombine.high %v319, %v319
      %v323 = vunpack.c.l.s4 1966171168
      %v324 = vunpack.c.0.s8 %v323
      %v325 = vlaneseq
      %v326 = vshrl.u32 %v325, 7
      %v327 = vsub.s32 %v324, %v326
      %v328 = vrot.slane %v237, %v327
      %v329 = vcombine.high %v328, %v328
      %v331 = vunpack.c.l.s4 1966171168
      %v332 = vunpack.c.0.s8 %v331
      %v333 = vlaneseq
      %v334 = vshrl.u32 %v333, 7
      %v335 = vsub.s32 %v332, %v334
      %v336 = vrot.slane %v328, %v335
      %v338 = vunpack.c.l.s4 1966171168
      %v339 = vunpack.c.0.s8 %v338
      %v340 = vlaneseq
      %v341 = vshrl.u32 %v340, 7
      %v342 = vsub.s32 %v339, %v341
      %v343 = vrot.slane %v329, %v342
      %v344 = vcombine.high %v336, %v336
      %v345 = vcombine.high %v343, %v343
      %v347 = vunpack.c.l.s4 1966171168
      %v348 = vunpack.c.0.s8 %v347
      %v349 = vlaneseq
      %v350 = vshrl.u32 %v349, 7
      %v351 = vsub.s32 %v348, %v350
      %v352 = vrot.slane %v238, %v351
      %v353 = vcombine.high %v352, %v352
      %v355 = vunpack.c.l.s4 1966171168
      %v356 = vunpack.c.0.s8 %v355
      %v357 = vlaneseq
      %v358 = vshrl.u32 %v357, 7
      %v359 = vsub.s32 %v356, %v358
      %v360 = vrot.slane %v352, %v359
      %v362 = vunpack.c.l.s4 1966171168
      %v363 = vunpack.c.0.s8 %v362
      %v364 = vlaneseq
      %v365 = vshrl.u32 %v364, 7
      %v366 = vsub.s32 %v363, %v365
      %v367 = vrot.slane %v353, %v366
      %v368 = vcombine.high %v360, %v360
      %v369 = vcombine.high %v367, %v367
      %v371 = vunpack.c.l.s4 1966171168
      %v372 = vunpack.c.0.s8 %v371
      %v373 = vlaneseq
      %v374 = vshrl.u32 %v373, 7
      %v375 = vsub.s32 %v372, %v374
      %v376 = vrot.slane %v239, %v375
      %v377 = vcombine.high %v376, %v376
      %v379 = vunpack.c.l.s4 1966171168
      %v380 = vunpack.c.0.s8 %v379
      %v381 = vlaneseq
      %v382 = vshrl.u32 %v381, 7
      %v383 = vsub.s32 %v380, %v382
      %v384 = vrot.slane %v376, %v383
      %v386 = vunpack.c.l.s4 1966171168
      %v387 = vunpack.c.0.s8 %v386
      %v388 = vlaneseq
      %v389 = vshrl.u32 %v388, 7
      %v390 = vsub.s32 %v387, %v389
      %v391 = vrot.slane %v377, %v390
      %v392 = vcombine.high %v384, %v384
      %v393 = vcombine.high %v391, %v391
      %v395 = vunpack.c.l.s4 1966171168
      %v396 = vunpack.c.0.s8 %v395
      %v397 = vlaneseq
      %v398 = vshrl.u32 %v397, 7
      %v399 = vsub.s32 %v396, %v398
      %v400 = vrot.slane %v240, %v399
      %v401 = vcombine.high %v400, %v400
      %v403 = vunpack.c.l.s4 1966171168
      %v404 = vunpack.c.0.s8 %v403
      %v405 = vlaneseq
      %v406 = vshrl.u32 %v405, 7
      %v407 = vsub.s32 %v404, %v406
      %v408 = vrot.slane %v400, %v407
      %v410 = vunpack.c.l.s4 1966171168
      %v411 = vunpack.c.0.s8 %v410
      %v412 = vlaneseq
      %v413 = vshrl.u32 %v412, 7
      %v414 = vsub.s32 %v411, %v413
      %v415 = vrot.slane %v401, %v414
      %v416 = vcombine.high %v408, %v408
      %v417 = vcombine.high %v415, %v415
      %v419 = vunpack.c.l.s4 1966171168
      %v420 = vunpack.c.0.s8 %v419
      %v421 = vlaneseq
      %v422 = vshrl.u32 %v421, 7
      %v423 = vsub.s32 %v420, %v422
      %v424 = vrot.slane %v241, %v423
      %v425 = vcombine.high %v424, %v424
      %v427 = vunpack.c.l.s4 1966171168
      %v428 = vunpack.c.0.s8 %v427
      %v429 = vlaneseq
      %v430 = vshrl.u32 %v429, 7
      %v431 = vsub.s32 %v428, %v430
      %v432 = vrot.slane %v424, %v431
      %v434 = vunpack.c.l.s4 1966171168
      %v435 = vunpack.c.0.s8 %v434
      %v436 = vlaneseq
      %v437 = vshrl.u32 %v436, 7
      %v438 = vsub.s32 %v435, %v437
      %v439 = vrot.slane %v425, %v438
      %v440 = vcombine.high %v432, %v432
      %v441 = vcombine.high %v439, %v439
      %v442 = vunpack.i.l.s16 %v264
      %v443 = vunpack.i.h.s16 %v264
      %v444 = vunpack.i.l.s16 %v271
      %v445 = vunpack.i.h.s16 %v271
      %v446 = vunpack.i.l.s16 %v272
      %v447 = vunpack.i.h.s16 %v272
      %v448 = vunpack.i.l.s16 %v273
      %v449 = vunpack.i.h.s16 %v273
      %v450 = vunpack.i.l.s16 %v288
      %v451 = vunpack.i.h.s16 %v288
      %v452 = vunpack.i.l.s16 %v295
      %v453 = vunpack.i.h.s16 %v295
      %v454 = vunpack.i.l.s16 %v296
      %v455 = vunpack.i.h.s16 %v296
      %v456 = vunpack.i.l.s16 %v297
      %v457 = vunpack.i.h.s16 %v297
      %v458 = vunpack.i.l.s16 %v312
      %v459 = vunpack.i.h.s16 %v312
      %v460 = vunpack.i.l.s16 %v319
      %v461 = vunpack.i.h.s16 %v319
      %v462 = vunpack.i.l.s16 %v320
      %v463 = vunpack.i.h.s16 %v320
      %v464 = vunpack.i.l.s16 %v321
      %v465 = vunpack.i.h.s16 %v321
      %v466 = vunpack.i.l.s16 %v336
      %v467 = vunpack.i.h.s16 %v336
      %v468 = vunpack.i.l.s16 %v343
      %v469 = vunpack.i.h.s16 %v343
      %v470 = vunpack.i.l.s16 %v344
      %v471 = vunpack.i.h.s16 %v344
      %v472 = vunpack.i.l.s16 %v345
      %v473 = vunpack.i.h.s16 %v345
      %v474 = vunpack.i.l.s16 %v360
      %v475 = vunpack.i.h.s16 %v360
      %v476 = vunpack.i.l.s16 %v367
      %v477 = vunpack.i.h.s16 %v367
      %v478 = vunpack.i.l.s16 %v368
      %v479 = vunpack.i.h.s16 %v368
      %v480 = vunpack.i.l.s16 %v369
      %v481 = vunpack.i.h.s16 %v369
      %v482 = vunpack.i.l.s16 %v384
      %v483 = vunpack.i.h.s16 %v384
      %v484 = vunpack.i.l.s16 %v391
      %v485 = vunpack.i.h.s16 %v391
      %v486 = vunpack.i.l.s16 %v392
      %v487 = vunpack.i.h.s16 %v392
      %v488 = vunpack.i.l.s16 %v393
      %v489 = vunpack.i.h.s16 %v393
      %v490 = vunpack.i.l.s16 %v408
      %v491 = vunpack.i.h.s16 %v408
      %v492 = vunpack.i.l.s16 %v415
      %v493 = vunpack.i.h.s16 %v415
      %v494 = vunpack.i.l.s16 %v416
      %v495 = vunpack.i.h.s16 %v416
      %v496 = vunpack.i.l.s16 %v417
      %v497 = vunpack.i.h.s16 %v417
      %v498 = vunpack.i.l.s16 %v432
      %v499 = vunpack.i.h.s16 %v432
      %v500 = vunpack.i.l.s16 %v439
      %v501 = vunpack.i.h.s16 %v439
      %v502 = vunpack.i.l.s16 %v440
      %v503 = vunpack.i.h.s16 %v440
      %v504 = vunpack.i.l.s16 %v441
      %v505 = vunpack.i.h.s16 %v441
      %v506 = vpack.i.b16 %v442, %v442
      %v507 = vpack.i.b16 %v443, %v443
      %v508 = vpack.i.b16 %v444, %v444
      %v509 = vpack.i.b16 %v445, %v445
      %v510 = vpack.i.b16 %v446, %v446
      %v511 = vpack.i.b16 %v447, %v447
      %v512 = vpack.i.b16 %v448, %v448
      %v513 = vpack.i.b16 %v449, %v449
      %v514 = vpack.i.b16 %v450, %v450
      %v515 = vpack.i.b16 %v451, %v451
      %v516 = vpack.i.b16 %v452, %v452
      %v517 = vpack.i.b16 %v453, %v453
      %v518 = vpack.i.b16 %v454, %v454
      %v519 = vpack.i.b16 %v455, %v455
      %v520 = vpack.i.b16 %v456, %v456
      %v521 = vpack.i.b16 %v457, %v457
      %v522 = vpack.i.b16 %v458, %v458
      %v523 = vpack.i.b16 %v459, %v459
      %v524 = vpack.i.b16 %v460, %v460
      %v525 = vpack.i.b16 %v461, %v461
      %v526 = vpack.i.b16 %v462, %v462
      %v527 = vpack.i.b16 %v463, %v463
      %v528 = vpack.i.b16 %v464, %v464
      %v529 = vpack.i.b16 %v465, %v465
      %v530 = vpack.i.b16 %v466, %v466
      %v531 = vpack.i.b16 %v467, %v467
      %v532 = vpack.i.b16 %v468, %v468
      %v533 = vpack.i.b16 %v469, %v469
      %v534 = vpack.i.b16 %v470, %v470
      %v535 = vpack.i.b16 %v471, %v471
      %v536 = vpack.i.b16 %v472, %v472
      %v537 = vpack.i.b16 %v473, %v473
      %v538 = vpack.i.b16 %v474, %v474
      %v539 = vpack.i.b16 %v475, %v475
      %v540 = vpack.i.b16 %v476, %v476
      %v541 = vpack.i.b16 %v477, %v477
      %v542 = vpack.i.b16 %v478, %v478
      %v543 = vpack.i.b16 %v479, %v479
      %v544 = vpack.i.b16 %v480, %v480
      %v545 = vpack.i.b16 %v481, %v481
      %v546 = vpack.i.b16 %v482, %v482
      %v547 = vpack.i.b16 %v483, %v483
      %v548 = vpack.i.b16 %v484, %v484
      %v549 = vpack.i.b16 %v485, %v485
      %v550 = vpack.i.b16 %v486, %v486
      %v551 = vpack.i.b16 %v487, %v487
      %v552 = vpack.i.b16 %v488, %v488
      %v553 = vpack.i.b16 %v489, %v489
      %v554 = vpack.i.b16 %v490, %v490
      %v555 = vpack.i.b16 %v491, %v491
      %v556 = vpack.i.b16 %v492, %v492
      %v557 = vpack.i.b16 %v493, %v493
      %v558 = vpack.i.b16 %v494, %v494
      %v559 = vpack.i.b16 %v495, %v495
      %v560 = vpack.i.b16 %v496, %v496
      %v561 = vpack.i.b16 %v497, %v497
      %v562 = vpack.i.b16 %v498, %v498
      %v563 = vpack.i.b16 %v499, %v499
      %v564 = vpack.i.b16 %v500, %v500
      %v565 = vpack.i.b16 %v501, %v501
      %v566 = vpack.i.b16 %v502, %v502
      %v567 = vpack.i.b16 %v503, %v503
      %v568 = vpack.i.b16 %v504, %v504
      %v569 = vpack.i.b16 %v505, %v505
      %v570 = vlaneseq
      %v571 = vshrl.u32 %v570, 7
      %v572 = vsub.s32 0, %v571
      %v573 = vrot.slane %v506, %v572
      %v574 = vlaneseq
      %v575 = vshrl.u32 %v574, 7
      %v576 = vsub.s32 0, %v575
      %v577 = vrot.slane %v507, %v576
      %v578 = vlaneseq
      %v579 = vshrl.u32 %v578, 7
      %v580 = vsub.s32 0, %v579
      %v581 = vrot.slane %v508, %v580
      %v582 = vlaneseq
      %v583 = vshrl.u32 %v582, 7
      %v584 = vsub.s32 0, %v583
      %v585 = vrot.slane %v509, %v584
      %v586 = vlaneseq
      %v587 = vshrl.u32 %v586, 7
      %v588 = vsub.s32 0, %v587
      %v589 = vrot.slane %v510, %v588
      %v590 = vlaneseq
      %v591 = vshrl.u32 %v590, 7
      %v592 = vsub.s32 0, %v591
      %v593 = vrot.slane %v511, %v592
      %v594 = vlaneseq
      %v595 = vshrl.u32 %v594, 7
      %v596 = vsub.s32 0, %v595
      %v597 = vrot.slane %v512, %v596
      %v598 = vlaneseq
      %v599 = vshrl.u32 %v598, 7
      %v600 = vsub.s32 0, %v599
      %v601 = vrot.slane %v513, %v600
      %v602 = vlaneseq
      %v603 = vshrl.u32 %v602, 7
      %v604 = vsub.s32 0, %v603
      %v605 = vrot.slane %v514, %v604
      %v606 = vlaneseq
      %v607 = vshrl.u32 %v606, 7
      %v608 = vsub.s32 0, %v607
      %v609 = vrot.slane %v515, %v608
      %v610 = vlaneseq
      %v611 = vshrl.u32 %v610, 7
      %v612 = vsub.s32 0, %v611
      %v613 = vrot.slane %v516, %v612
      %v614 = vlaneseq
      %v615 = vshrl.u32 %v614, 7
      %v616 = vsub.s32 0, %v615
      %v617 = vrot.slane %v517, %v616
      %v618 = vlaneseq
      %v619 = vshrl.u32 %v618, 7
      %v620 = vsub.s32 0, %v619
      %v621 = vrot.slane %v518, %v620
      %v622 = vlaneseq
      %v623 = vshrl.u32 %v622, 7
      %v624 = vsub.s32 0, %v623
      %v625 = vrot.slane %v519, %v624
      %v626 = vlaneseq
      %v627 = vshrl.u32 %v626, 7
      %v628 = vsub.s32 0, %v627
      %v629 = vrot.slane %v520, %v628
      %v630 = vlaneseq
      %v631 = vshrl.u32 %v630, 7
      %v632 = vsub.s32 0, %v631
      %v633 = vrot.slane %v521, %v632
      %v634 = vlaneseq
      %v635 = vshrl.u32 %v634, 7
      %v636 = vsub.s32 0, %v635
      %v637 = vrot.slane %v522, %v636
      %v638 = vlaneseq
      %v639 = vshrl.u32 %v638, 7
      %v640 = vsub.s32 0, %v639
      %v641 = vrot.slane %v523, %v640
      %v642 = vlaneseq
      %v643 = vshrl.u32 %v642, 7
      %v644 = vsub.s32 0, %v643
      %v645 = vrot.slane %v524, %v644
      %v646 = vlaneseq
      %v647 = vshrl.u32 %v646, 7
      %v648 = vsub.s32 0, %v647
      %v649 = vrot.slane %v525, %v648
      %v650 = vlaneseq
      %v651 = vshrl.u32 %v650, 7
      %v652 = vsub.s32 0, %v651
      %v653 = vrot.slane %v526, %v652
      %v654 = vlaneseq
      %v655 = vshrl.u32 %v654, 7
      %v656 = vsub.s32 0, %v655
      %v657 = vrot.slane %v527, %v656
      %v658 = vlaneseq
      %v659 = vshrl.u32 %v658, 7
      %v660 = vsub.s32 0, %v659
      %v661 = vrot.slane %v528, %v660
      %v662 = vlaneseq
      %v663 = vshrl.u32 %v662, 7
      %v664 = vsub.s32 0, %v663
      %v665 = vrot.slane %v529, %v664
      %v666 = vlaneseq
      %v667 = vshrl.u32 %v666, 7
      %v668 = vsub.s32 0, %v667
      %v669 = vrot.slane %v530, %v668
      %v670 = vlaneseq
      %v671 = vshrl.u32 %v670, 7
      %v672 = vsub.s32 0, %v671
      %v673 = vrot.slane %v531, %v672
      %v674 = vlaneseq
      %v675 = vshrl.u32 %v674, 7
      %v676 = vsub.s32 0, %v675
      %v677 = vrot.slane %v532, %v676
      %v678 = vlaneseq
      %v679 = vshrl.u32 %v678, 7
      %v680 = vsub.s32 0, %v679
      %v681 = vrot.slane %v533, %v680
      %v682 = vlaneseq
      %v683 = vshrl.u32 %v682, 7
      %v684 = vsub.s32 0, %v683
      %v685 = vrot.slane %v534, %v684
      %v686 = vlaneseq
      %v687 = vshrl.u32 %v686, 7
      %v688 = vsub.s32 0, %v687
      %v689 = vrot.slane %v535, %v688
      %v690 = vlaneseq
      %v691 = vshrl.u32 %v690, 7
      %v692 = vsub.s32 0, %v691
      %v693 = vrot.slane %v536, %v692
      %v694 = vlaneseq
      %v695 = vshrl.u32 %v694, 7
      %v696 = vsub.s32 0, %v695
      %v697 = vrot.slane %v537, %v696
      %v698 = vlaneseq
      %v699 = vshrl.u32 %v698, 7
      %v700 = vsub.s32 0, %v699
      %v701 = vrot.slane %v538, %v700
      %v702 = vlaneseq
      %v703 = vshrl.u32 %v702, 7
      %v704 = vsub.s32 0, %v703
      %v705 = vrot.slane %v539, %v704
      %v706 = vlaneseq
      %v707 = vshrl.u32 %v706, 7
      %v708 = vsub.s32 0, %v707
      %v709 = vrot.slane %v540, %v708
      %v710 = vlaneseq
      %v711 = vshrl.u32 %v710, 7
      %v712 = vsub.s32 0, %v711
      %v713 = vrot.slane %v541, %v712
      %v714 = vlaneseq
      %v715 = vshrl.u32 %v714, 7
      %v716 = vsub.s32 0, %v715
      %v717 = vrot.slane %v542, %v716
      %v718 = vlaneseq
      %v719 = vshrl.u32 %v718, 7
      %v720 = vsub.s32 0, %v719
      %v721 = vrot.slane %v543, %v720
      %v722 = vlaneseq
      %v723 = vshrl.u32 %v722, 7
      %v724 = vsub.s32 0, %v723
      %v725 = vrot.slane %v544, %v724
      %v726 = vlaneseq
      %v727 = vshrl.u32 %v726, 7
      %v728 = vsub.s32 0, %v727
      %v729 = vrot.slane %v545, %v728
      %v730 = vlaneseq
      %v731 = vshrl.u32 %v730, 7
      %v732 = vsub.s32 0, %v731
      %v733 = vrot.slane %v546, %v732
      %v734 = vlaneseq
      %v735 = vshrl.u32 %v734, 7
      %v736 = vsub.s32 0, %v735
      %v737 = vrot.slane %v547, %v736
      %v738 = vlaneseq
      %v739 = vshrl.u32 %v738, 7
      %v740 = vsub.s32 0, %v739
      %v741 = vrot.slane %v548, %v740
      %v742 = vlaneseq
      %v743 = vshrl.u32 %v742, 7
      %v744 = vsub.s32 0, %v743
      %v745 = vrot.slane %v549, %v744
      %v746 = vlaneseq
      %v747 = vshrl.u32 %v746, 7
      %v748 = vsub.s32 0, %v747
      %v749 = vrot.slane %v550, %v748
      %v750 = vlaneseq
      %v751 = vshrl.u32 %v750, 7
      %v752 = vsub.s32 0, %v751
      %v753 = vrot.slane %v551, %v752
      %v754 = vlaneseq
      %v755 = vshrl.u32 %v754, 7
      %v756 = vsub.s32 0, %v755
      %v757 = vrot.slane %v552, %v756
      %v758 = vlaneseq
      %v759 = vshrl.u32 %v758, 7
      %v760 = vsub.s32 0, %v759
      %v761 = vrot.slane %v553, %v760
      %v762 = vlaneseq
      %v763 = vshrl.u32 %v762, 7
      %v764 = vsub.s32 0, %v763
      %v765 = vrot.slane %v554, %v764
      %v766 = vlaneseq
      %v767 = vshrl.u32 %v766, 7
      %v768 = vsub.s32 0, %v767
      %v769 = vrot.slane %v555, %v768
      %v770 = vlaneseq
      %v771 = vshrl.u32 %v770, 7
      %v772 = vsub.s32 0, %v771
      %v773 = vrot.slane %v556, %v772
      %v774 = vlaneseq
      %v775 = vshrl.u32 %v774, 7
      %v776 = vsub.s32 0, %v775
      %v777 = vrot.slane %v557, %v776
      %v778 = vlaneseq
      %v779 = vshrl.u32 %v778, 7
      %v780 = vsub.s32 0, %v779
      %v781 = vrot.slane %v558, %v780
      %v782 = vlaneseq
      %v783 = vshrl.u32 %v782, 7
      %v784 = vsub.s32 0, %v783
      %v785 = vrot.slane %v559, %v784
      %v786 = vlaneseq
      %v787 = vshrl.u32 %v786, 7
      %v788 = vsub.s32 0, %v787
      %v789 = vrot.slane %v560, %v788
      %v790 = vlaneseq
      %v791 = vshrl.u32 %v790, 7
      %v792 = vsub.s32 0, %v791
      %v793 = vrot.slane %v561, %v792
      %v794 = vlaneseq
      %v795 = vshrl.u32 %v794, 7
      %v796 = vsub.s32 0, %v795
      %v797 = vrot.slane %v562, %v796
      %v798 = vlaneseq
      %v799 = vshrl.u32 %v798, 7
      %v800 = vsub.s32 0, %v799
      %v801 = vrot.slane %v563, %v800
      %v802 = vlaneseq
      %v803 = vshrl.u32 %v802, 7
      %v804 = vsub.s32 0, %v803
      %v805 = vrot.slane %v564, %v804
      %v806 = vlaneseq
      %v807 = vshrl.u32 %v806, 7
      %v808 = vsub.s32 0, %v807
      %v809 = vrot.slane %v565, %v808
      %v810 = vlaneseq
      %v811 = vshrl.u32 %v810, 7
      %v812 = vsub.s32 0, %v811
      %v813 = vrot.slane %v566, %v812
      %v814 = vlaneseq
      %v815 = vshrl.u32 %v814, 7
      %v816 = vsub.s32 0, %v815
      %v817 = vrot.slane %v567, %v816
      %v818 = vlaneseq
      %v819 = vshrl.u32 %v818, 7
      %v820 = vsub.s32 0, %v819
      %v821 = vrot.slane %v568, %v820
      %v822 = vlaneseq
      %v823 = vshrl.u32 %v822, 7
      %v824 = vsub.s32 0, %v823
      %v825 = vrot.slane %v569, %v824
      %vm890 = vcmask 1040384
      %vm891 = vsmask.f32 256
      %vm892 = vmand %vm890, %vm891
      %v957 = vcombine.low %v573, %v577
      %v958 = vcombine.low %v581, %v585
      %v959 = vcombine.low %v589, %v593
      %v960 = vcombine.low %v597, %v601
      %v962 = vunpack.c.l.s4 1966171168
      %v963 = vunpack.c.0.s8 %v962
      %v964 = vlaneseq
      %v965 = vshrl.u32 %v964, 7
      %v966 = vsub.s32 %v963, %v965
      %v967 = vrot.slane %v957, %v966
      %v969 = vunpack.c.l.s4 1966171168
      %v970 = vunpack.c.0.s8 %v969
      %v971 = vlaneseq
      %v972 = vshrl.u32 %v971, 7
      %v973 = vsub.s32 %v970, %v972
      %v974 = vrot.slane %v958, %v973
      %v976 = vunpack.c.l.s4 1966171168
      %v977 = vunpack.c.0.s8 %v976
      %v978 = vlaneseq
      %v979 = vshrl.u32 %v978, 7
      %v980 = vsub.s32 %v977, %v979
      %v981 = vrot.slane %v959, %v980
      %v983 = vunpack.c.l.s4 1966171168
      %v984 = vunpack.c.0.s8 %v983
      %v985 = vlaneseq
      %v986 = vshrl.u32 %v985, 7
      %v987 = vsub.s32 %v984, %v986
      %v988 = vrot.slane %v960, %v987
      %v989 = vcombine.low %v967, %v974
      %v990 = vcombine.low %v981, %v988
      %v992 = vunpack.c.l.s4 1966171168
      %v993 = vunpack.c.0.s8 %v992
      %v994 = vlaneseq
      %v995 = vshrl.u32 %v994, 7
      %v996 = vsub.s32 %v993, %v995
      %v997 = vrot.slane %v989, %v996
      %v999 = vunpack.c.l.s4 1966171168
      %v1000 = vunpack.c.0.s8 %v999
      %v1001 = vlaneseq
      %v1002 = vshrl.u32 %v1001, 7
      %v1003 = vsub.s32 %v1000, %v1002
      %v1004 = vrot.slane %v990, %v1003
      %v1005 = vcombine.low %v997, %v1004
      %v1006 = vcombine.low %v605, %v609
      %v1007 = vcombine.low %v613, %v617
      %v1008 = vcombine.low %v621, %v625
      %v1009 = vcombine.low %v629, %v633
      %v1011 = vunpack.c.l.s4 1966171168
      %v1012 = vunpack.c.0.s8 %v1011
      %v1013 = vlaneseq
      %v1014 = vshrl.u32 %v1013, 7
      %v1015 = vsub.s32 %v1012, %v1014
      %v1016 = vrot.slane %v1006, %v1015
      %v1018 = vunpack.c.l.s4 1966171168
      %v1019 = vunpack.c.0.s8 %v1018
      %v1020 = vlaneseq
      %v1021 = vshrl.u32 %v1020, 7
      %v1022 = vsub.s32 %v1019, %v1021
      %v1023 = vrot.slane %v1007, %v1022
      %v1025 = vunpack.c.l.s4 1966171168
      %v1026 = vunpack.c.0.s8 %v1025
      %v1027 = vlaneseq
      %v1028 = vshrl.u32 %v1027, 7
      %v1029 = vsub.s32 %v1026, %v1028
      %v1030 = vrot.slane %v1008, %v1029
      %v1032 = vunpack.c.l.s4 1966171168
      %v1033 = vunpack.c.0.s8 %v1032
      %v1034 = vlaneseq
      %v1035 = vshrl.u32 %v1034, 7
      %v1036 = vsub.s32 %v1033, %v1035
      %v1037 = vrot.slane %v1009, %v1036
      %v1038 = vcombine.low %v1016, %v1023
      %v1039 = vcombine.low %v1030, %v1037
      %v1041 = vunpack.c.l.s4 1966171168
      %v1042 = vunpack.c.0.s8 %v1041
      %v1043 = vlaneseq
      %v1044 = vshrl.u32 %v1043, 7
      %v1045 = vsub.s32 %v1042, %v1044
      %v1046 = vrot.slane %v1038, %v1045
      %v1048 = vunpack.c.l.s4 1966171168
      %v1049 = vunpack.c.0.s8 %v1048
      %v1050 = vlaneseq
      %v1051 = vshrl.u32 %v1050, 7
      %v1052 = vsub.s32 %v1049, %v1051
      %v1053 = vrot.slane %v1039, %v1052
      %v1054 = vcombine.low %v1046, %v1053
      %v1055 = vcombine.low %v637, %v641
      %v1056 = vcombine.low %v645, %v649
      %v1057 = vcombine.low %v653, %v657
      %v1058 = vcombine.low %v661, %v665
      %v1060 = vunpack.c.l.s4 1966171168
      %v1061 = vunpack.c.0.s8 %v1060
      %v1062 = vlaneseq
      %v1063 = vshrl.u32 %v1062, 7
      %v1064 = vsub.s32 %v1061, %v1063
      %v1065 = vrot.slane %v1055, %v1064
      %v1067 = vunpack.c.l.s4 1966171168
      %v1068 = vunpack.c.0.s8 %v1067
      %v1069 = vlaneseq
      %v1070 = vshrl.u32 %v1069, 7
      %v1071 = vsub.s32 %v1068, %v1070
      %v1072 = vrot.slane %v1056, %v1071
      %v1074 = vunpack.c.l.s4 1966171168
      %v1075 = vunpack.c.0.s8 %v1074
      %v1076 = vlaneseq
      %v1077 = vshrl.u32 %v1076, 7
      %v1078 = vsub.s32 %v1075, %v1077
      %v1079 = vrot.slane %v1057, %v1078
      %v1081 = vunpack.c.l.s4 1966171168
      %v1082 = vunpack.c.0.s8 %v1081
      %v1083 = vlaneseq
      %v1084 = vshrl.u32 %v1083, 7
      %v1085 = vsub.s32 %v1082, %v1084
      %v1086 = vrot.slane %v1058, %v1085
      %v1087 = vcombine.low %v1065, %v1072
      %v1088 = vcombine.low %v1079, %v1086
      %v1090 = vunpack.c.l.s4 1966171168
      %v1091 = vunpack.c.0.s8 %v1090
      %v1092 = vlaneseq
      %v1093 = vshrl.u32 %v1092, 7
      %v1094 = vsub.s32 %v1091, %v1093
      %v1095 = vrot.slane %v1087, %v1094
      %v1097 = vunpack.c.l.s4 1966171168
      %v1098 = vunpack.c.0.s8 %v1097
      %v1099 = vlaneseq
      %v1100 = vshrl.u32 %v1099, 7
      %v1101 = vsub.s32 %v1098, %v1100
      %v1102 = vrot.slane %v1088, %v1101
      %v1103 = vcombine.low %v1095, %v1102
      %v1104 = vcombine.low %v669, %v673
      %v1105 = vcombine.low %v677, %v681
      %v1106 = vcombine.low %v685, %v689
      %v1107 = vcombine.low %v693, %v697
      %v1109 = vunpack.c.l.s4 1966171168
      %v1110 = vunpack.c.0.s8 %v1109
      %v1111 = vlaneseq
      %v1112 = vshrl.u32 %v1111, 7
      %v1113 = vsub.s32 %v1110, %v1112
      %v1114 = vrot.slane %v1104, %v1113
      %v1116 = vunpack.c.l.s4 1966171168
      %v1117 = vunpack.c.0.s8 %v1116
      %v1118 = vlaneseq
      %v1119 = vshrl.u32 %v1118, 7
      %v1120 = vsub.s32 %v1117, %v1119
      %v1121 = vrot.slane %v1105, %v1120
      %v1123 = vunpack.c.l.s4 1966171168
      %v1124 = vunpack.c.0.s8 %v1123
      %v1125 = vlaneseq
      %v1126 = vshrl.u32 %v1125, 7
      %v1127 = vsub.s32 %v1124, %v1126
      %v1128 = vrot.slane %v1106, %v1127
      %v1130 = vunpack.c.l.s4 1966171168
      %v1131 = vunpack.c.0.s8 %v1130
      %v1132 = vlaneseq
      %v1133 = vshrl.u32 %v1132, 7
      %v1134 = vsub.s32 %v1131, %v1133
      %v1135 = vrot.slane %v1107, %v1134
      %v1136 = vcombine.low %v1114, %v1121
      %v1137 = vcombine.low %v1128, %v1135
      %v1139 = vunpack.c.l.s4 1966171168
      %v1140 = vunpack.c.0.s8 %v1139
      %v1141 = vlaneseq
      %v1142 = vshrl.u32 %v1141, 7
      %v1143 = vsub.s32 %v1140, %v1142
      %v1144 = vrot.slane %v1136, %v1143
      %v1146 = vunpack.c.l.s4 1966171168
      %v1147 = vunpack.c.0.s8 %v1146
      %v1148 = vlaneseq
      %v1149 = vshrl.u32 %v1148, 7
      %v1150 = vsub.s32 %v1147, %v1149
      %v1151 = vrot.slane %v1137, %v1150
      %v1152 = vcombine.low %v1144, %v1151
      %v1153 = vcombine.low %v701, %v705
      %v1154 = vcombine.low %v709, %v713
      %v1155 = vcombine.low %v717, %v721
      %v1156 = vcombine.low %v725, %v729
      %v1158 = vunpack.c.l.s4 1966171168
      %v1159 = vunpack.c.0.s8 %v1158
      %v1160 = vlaneseq
      %v1161 = vshrl.u32 %v1160, 7
      %v1162 = vsub.s32 %v1159, %v1161
      %v1163 = vrot.slane %v1153, %v1162
      %v1165 = vunpack.c.l.s4 1966171168
      %v1166 = vunpack.c.0.s8 %v1165
      %v1167 = vlaneseq
      %v1168 = vshrl.u32 %v1167, 7
      %v1169 = vsub.s32 %v1166, %v1168
      %v1170 = vrot.slane %v1154, %v1169
      %v1172 = vunpack.c.l.s4 1966171168
      %v1173 = vunpack.c.0.s8 %v1172
      %v1174 = vlaneseq
      %v1175 = vshrl.u32 %v1174, 7
      %v1176 = vsub.s32 %v1173, %v1175
      %v1177 = vrot.slane %v1155, %v1176
      %v1179 = vunpack.c.l.s4 1966171168
      %v1180 = vunpack.c.0.s8 %v1179
      %v1181 = vlaneseq
      %v1182 = vshrl.u32 %v1181, 7
      %v1183 = vsub.s32 %v1180, %v1182
      %v1184 = vrot.slane %v1156, %v1183
      %v1185 = vcombine.low %v1163, %v1170
      %v1186 = vcombine.low %v1177, %v1184
      %v1188 = vunpack.c.l.s4 1966171168
      %v1189 = vunpack.c.0.s8 %v1188
      %v1190 = vlaneseq
      %v1191 = vshrl.u32 %v1190, 7
      %v1192 = vsub.s32 %v1189, %v1191
      %v1193 = vrot.slane %v1185, %v1192
      %v1195 = vunpack.c.l.s4 1966171168
      %v1196 = vunpack.c.0.s8 %v1195
      %v1197 = vlaneseq
      %v1198 = vshrl.u32 %v1197, 7
      %v1199 = vsub.s32 %v1196, %v1198
      %v1200 = vrot.slane %v1186, %v1199
      %v1201 = vcombine.low %v1193, %v1200
      %v1202 = vcombine.low %v733, %v737
      %v1203 = vcombine.low %v741, %v745
      %v1204 = vcombine.low %v749, %v753
      %v1205 = vcombine.low %v757, %v761
      %v1207 = vunpack.c.l.s4 1966171168
      %v1208 = vunpack.c.0.s8 %v1207
      %v1209 = vlaneseq
      %v1210 = vshrl.u32 %v1209, 7
      %v1211 = vsub.s32 %v1208, %v1210
      %v1212 = vrot.slane %v1202, %v1211
      %v1214 = vunpack.c.l.s4 1966171168
      %v1215 = vunpack.c.0.s8 %v1214
      %v1216 = vlaneseq
      %v1217 = vshrl.u32 %v1216, 7
      %v1218 = vsub.s32 %v1215, %v1217
      %v1219 = vrot.slane %v1203, %v1218
      %v1221 = vunpack.c.l.s4 1966171168
      %v1222 = vunpack.c.0.s8 %v1221
      %v1223 = vlaneseq
      %v1224 = vshrl.u32 %v1223, 7
      %v1225 = vsub.s32 %v1222, %v1224
      %v1226 = vrot.slane %v1204, %v1225
      %v1228 = vunpack.c.l.s4 1966171168
      %v1229 = vunpack.c.0.s8 %v1228
      %v1230 = vlaneseq
      %v1231 = vshrl.u32 %v1230, 7
      %v1232 = vsub.s32 %v1229, %v1231
      %v1233 = vrot.slane %v1205, %v1232
      %v1234 = vcombine.low %v1212, %v1219
      %v1235 = vcombine.low %v1226, %v1233
      %v1237 = vunpack.c.l.s4 1966171168
      %v1238 = vunpack.c.0.s8 %v1237
      %v1239 = vlaneseq
      %v1240 = vshrl.u32 %v1239, 7
      %v1241 = vsub.s32 %v1238, %v1240
      %v1242 = vrot.slane %v1234, %v1241
      %v1244 = vunpack.c.l.s4 1966171168
      %v1245 = vunpack.c.0.s8 %v1244
      %v1246 = vlaneseq
      %v1247 = vshrl.u32 %v1246, 7
      %v1248 = vsub.s32 %v1245, %v1247
      %v1249 = vrot.slane %v1235, %v1248
      %v1250 = vcombine.low %v1242, %v1249
      %v1251 = vcombine.low %v765, %v769
      %v1252 = vcombine.low %v773, %v777
      %v1253 = vcombine.low %v781, %v785
      %v1254 = vcombine.low %v789, %v793
      %v1256 = vunpack.c.l.s4 1966171168
      %v1257 = vunpack.c.0.s8 %v1256
      %v1258 = vlaneseq
      %v1259 = vshrl.u32 %v1258, 7
      %v1260 = vsub.s32 %v1257, %v1259
      %v1261 = vrot.slane %v1251, %v1260
      %v1263 = vunpack.c.l.s4 1966171168
      %v1264 = vunpack.c.0.s8 %v1263
      %v1265 = vlaneseq
      %v1266 = vshrl.u32 %v1265, 7
      %v1267 = vsub.s32 %v1264, %v1266
      %v1268 = vrot.slane %v1252, %v1267
      %v1270 = vunpack.c.l.s4 1966171168
      %v1271 = vunpack.c.0.s8 %v1270
      %v1272 = vlaneseq
      %v1273 = vshrl.u32 %v1272, 7
      %v1274 = vsub.s32 %v1271, %v1273
      %v1275 = vrot.slane %v1253, %v1274
      %v1277 = vunpack.c.l.s4 1966171168
      %v1278 = vunpack.c.0.s8 %v1277
      %v1279 = vlaneseq
      %v1280 = vshrl.u32 %v1279, 7
      %v1281 = vsub.s32 %v1278, %v1280
      %v1282 = vrot.slane %v1254, %v1281
      %v1283 = vcombine.low %v1261, %v1268
      %v1284 = vcombine.low %v1275, %v1282
      %v1286 = vunpack.c.l.s4 1966171168
      %v1287 = vunpack.c.0.s8 %v1286
      %v1288 = vlaneseq
      %v1289 = vshrl.u32 %v1288, 7
      %v1290 = vsub.s32 %v1287, %v1289
      %v1291 = vrot.slane %v1283, %v1290
      %v1293 = vunpack.c.l.s4 1966171168
      %v1294 = vunpack.c.0.s8 %v1293
      %v1295 = vlaneseq
      %v1296 = vshrl.u32 %v1295, 7
      %v1297 = vsub.s32 %v1294, %v1296
      %v1298 = vrot.slane %v1284, %v1297
      %v1299 = vcombine.low %v1291, %v1298
      %v1300 = vcombine.low %v797, %v801
      %v1301 = vcombine.low %v805, %v809
      %v1302 = vcombine.low %v813, %v817
      %v1303 = vcombine.low %v821, %v825
      %v1305 = vunpack.c.l.s4 1966171168
      %v1306 = vunpack.c.0.s8 %v1305
      %v1307 = vlaneseq
      %v1308 = vshrl.u32 %v1307, 7
      %v1309 = vsub.s32 %v1306, %v1308
      %v1310 = vrot.slane %v1300, %v1309
      %v1312 = vunpack.c.l.s4 1966171168
      %v1313 = vunpack.c.0.s8 %v1312
      %v1314 = vlaneseq
      %v1315 = vshrl.u32 %v1314, 7
      %v1316 = vsub.s32 %v1313, %v1315
      %v1317 = vrot.slane %v1301, %v1316
      %v1319 = vunpack.c.l.s4 1966171168
      %v1320 = vunpack.c.0.s8 %v1319
      %v1321 = vlaneseq
      %v1322 = vshrl.u32 %v1321, 7
      %v1323 = vsub.s32 %v1320, %v1322
      %v1324 = vrot.slane %v1302, %v1323
      %v1326 = vunpack.c.l.s4 1966171168
      %v1327 = vunpack.c.0.s8 %v1326
      %v1328 = vlaneseq
      %v1329 = vshrl.u32 %v1328, 7
      %v1330 = vsub.s32 %v1327, %v1329
      %v1331 = vrot.slane %v1303, %v1330
      %v1332 = vcombine.low %v1310, %v1317
      %v1333 = vcombine.low %v1324, %v1331
      %v1335 = vunpack.c.l.s4 1966171168
      %v1336 = vunpack.c.0.s8 %v1335
      %v1337 = vlaneseq
      %v1338 = vshrl.u32 %v1337, 7
      %v1339 = vsub.s32 %v1336, %v1338
      %v1340 = vrot.slane %v1332, %v1339
      %v1342 = vunpack.c.l.s4 1966171168
      %v1343 = vunpack.c.0.s8 %v1342
      %v1344 = vlaneseq
      %v1345 = vshrl.u32 %v1344, 7
      %v1346 = vsub.s32 %v1343, %v1345
      %v1347 = vrot.slane %v1333, %v1346
      %v1348 = vcombine.low %v1340, %v1347
      %v1350 = vshrl.u32 0, 16
      %v1352 = vrot.slane %v1350, 7
      %v1353 = vshll.u32 0, 16
      %v1355 = vor.u32 %v1352, %v1353
      %v1357 = vshrl.u32 %v1005, 16
      %v1359 = vrot.slane %v1357, 7
      %v1360 = vshll.u32 %v1005, 16
      %v1362 = vor.u32 %v1359, %v1360
      %v1364 = vshrl.u32 %v1054, 16
      %v1366 = vrot.slane %v1364, 7
      %v1367 = vshll.u32 %v1054, 16
      %v1369 = vor.u32 %v1366, %v1367
      %v1371 = vshrl.u32 %v1103, 16
      %v1373 = vrot.slane %v1371, 7
      %v1374 = vshll.u32 %v1103, 16
      %v1376 = vor.u32 %v1373, %v1374
      %v1378 = vshrl.u32 %v1152, 16
      %v1380 = vrot.slane %v1378, 7
      %v1381 = vshll.u32 %v1152, 16
      %v1383 = vor.u32 %v1380, %v1381
      %v1385 = vshrl.u32 %v1201, 16
      %v1387 = vrot.slane %v1385, 7
      %v1388 = vshll.u32 %v1201, 16
      %v1390 = vor.u32 %v1387, %v1388
      %v1392 = vshrl.u32 %v1250, 16
      %v1394 = vrot.slane %v1392, 7
      %v1395 = vshll.u32 %v1250, 16
      %v1397 = vor.u32 %v1394, %v1395
      %v1399 = vshrl.u32 %v1299, 16
      %v1401 = vrot.slane %v1399, 7
      %v1402 = vshll.u32 %v1299, 16
      %v1404 = vor.u32 %v1401, %v1402
      %v1406 = vshrl.u32 %v1348, 16
      %v1408 = vrot.slane %v1406, 7
      %v1409 = vshll.u32 %v1348, 16
      %v1411 = vor.u32 %v1408, %v1409
      %v1430 = vsel %vm892, 0, %v1355
      %v1431 = vsel %vm892, 0, %v1362
      %v1432 = vsel %vm892, 0, %v1369
      %v1433 = vsel %vm892, 0, %v1376
      %v1434 = vsel %vm892, 0, %v1383
      %v1435 = vsel %vm892, 0, %v1390
      %v1436 = vsel %vm892, 0, %v1397
      %v1437 = vsel %vm892, 0, %v1404
      %v1438 = vsel %vm892, 0, %v1411
      %v1439 = vsel %vm892, %v1352, 0
      %v1440 = vsel %vm892, %v1359, 0
      %v1441 = vsel %vm892, %v1366, 0
      %v1442 = vsel %vm892, %v1373, 0
      %v1443 = vsel %vm892, %v1380, 0
      %v1444 = vsel %vm892, %v1387, 0
      %v1445 = vsel %vm892, %v1394, 0
      %v1446 = vsel %vm892, %v1401, 0
      %v1447 = vsel %vm892, %v1408, 0
      %vm1448 = vsmask.f32 7424
      %v1450 = vshrl.u32 %v1430, 16
      %v1452 = vshll.u32 %v1430, 16
      %v1454 = vrot.slane %v1452, 1
      %v1455 = vor.u32 %v1450, %v1454
      %v1457 = vshll.u32 %v1439, 16
      %v1459 = vrot.slane %v1457, 1
      %v1460 = vsel %vm1448, %v1455, %v1459
      %v1462 = vshrl.u32 %v1431, 16
      %v1464 = vshll.u32 %v1431, 16
      %v1466 = vrot.slane %v1464, 1
      %v1467 = vor.u32 %v1462, %v1466
      %v1469 = vshll.u32 %v1440, 16
      %v1471 = vrot.slane %v1469, 1
      %v1472 = vsel %vm1448, %v1467, %v1471
      %v1474 = vshrl.u32 %v1432, 16
      %v1476 = vshll.u32 %v1432, 16
      %v1478 = vrot.slane %v1476, 1
      %v1479 = vor.u32 %v1474, %v1478
      %v1481 = vshll.u32 %v1441, 16
      %v1483 = vrot.slane %v1481, 1
      %v1484 = vsel %vm1448, %v1479, %v1483
      %v1486 = vshrl.u32 %v1433, 16
      %v1488 = vshll.u32 %v1433, 16
      %v1490 = vrot.slane %v1488, 1
      %v1491 = vor.u32 %v1486, %v1490
      %v1493 = vshll.u32 %v1442, 16
      %v1495 = vrot.slane %v1493, 1
      %v1496 = vsel %vm1448, %v1491, %v1495
      %v1498 = vshrl.u32 %v1434, 16
      %v1500 = vshll.u32 %v1434, 16
      %v1502 = vrot.slane %v1500, 1
      %v1503 = vor.u32 %v1498, %v1502
      %v1505 = vshll.u32 %v1443, 16
      %v1507 = vrot.slane %v1505, 1
      %v1508 = vsel %vm1448, %v1503, %v1507
      %v1510 = vshrl.u32 %v1435, 16
      %v1512 = vshll.u32 %v1435, 16
      %v1514 = vrot.slane %v1512, 1
      %v1515 = vor.u32 %v1510, %v1514
      %v1517 = vshll.u32 %v1444, 16
      %v1519 = vrot.slane %v1517, 1
      %v1520 = vsel %vm1448, %v1515, %v1519
      %v1522 = vshrl.u32 %v1436, 16
      %v1524 = vshll.u32 %v1436, 16
      %v1526 = vrot.slane %v1524, 1
      %v1527 = vor.u32 %v1522, %v1526
      %v1529 = vshll.u32 %v1445, 16
      %v1531 = vrot.slane %v1529, 1
      %v1532 = vsel %vm1448, %v1527, %v1531
      %v1534 = vshrl.u32 %v1437, 16
      %v1536 = vshll.u32 %v1437, 16
      %v1538 = vrot.slane %v1536, 1
      %v1539 = vor.u32 %v1534, %v1538
      %v1541 = vshll.u32 %v1446, 16
      %v1543 = vrot.slane %v1541, 1
      %v1544 = vsel %vm1448, %v1539, %v1543
      %v1546 = vshrl.u32 %v1438, 16
      %v1548 = vshll.u32 %v1438, 16
      %v1550 = vrot.slane %v1548, 1
      %v1551 = vor.u32 %v1546, %v1550
      %v1553 = vshll.u32 %v1447, 16
      %v1555 = vrot.slane %v1553, 1
      %v1556 = vsel %vm1448, %v1551, %v1555
      %1557 = vrot.lane.b32.xlu0 %v1460, 8
      %v1558 = vpop.permute.xlu0 %1557
      %1559 = vrot.lane.b32.xlu0 %v1472, 8
      %v1560 = vpop.permute.xlu0 %1559
      %1561 = vrot.lane.b32.xlu0 %v1484, 8
      %v1562 = vpop.permute.xlu0 %1561
      %1563 = vrot.lane.b32.xlu0 %v1496, 8
      %v1564 = vpop.permute.xlu0 %1563
      %1565 = vrot.lane.b32.xlu0 %v1508, 8
      %v1566 = vpop.permute.xlu0 %1565
      %1567 = vrot.lane.b32.xlu0 %v1520, 8
      %v1568 = vpop.permute.xlu0 %1567
      %1569 = vrot.lane.b32.xlu0 %v1532, 8
      %v1570 = vpop.permute.xlu0 %1569
      %1571 = vrot.lane.b32.xlu0 %v1544, 8
      %v1572 = vpop.permute.xlu0 %1571
      %1573 = vrot.lane.b32.xlu0 %v1556, 8
      %v1574 = vpop.permute.xlu0 %1573
      %vm1593 = vcmask 1046528
      %v1594 = vrot.slane %v1430, 1
      %v1595 = vrot.slane %v1439, 1
      %v1596 = vsel %vm1593, %v1594, %v1595
      %v1597 = vrot.slane %v1431, 1
      %v1598 = vrot.slane %v1440, 1
      %v1599 = vsel %vm1593, %v1597, %v1598
      %v1600 = vrot.slane %v1432, 1
      %v1601 = vrot.slane %v1441, 1
      %v1602 = vsel %vm1593, %v1600, %v1601
      %v1603 = vrot.slane %v1433, 1
      %v1604 = vrot.slane %v1442, 1
      %v1605 = vsel %vm1593, %v1603, %v1604
      %v1606 = vrot.slane %v1434, 1
      %v1607 = vrot.slane %v1443, 1
      %v1608 = vsel %vm1593, %v1606, %v1607
      %v1609 = vrot.slane %v1435, 1
      %v1610 = vrot.slane %v1444, 1
      %v1611 = vsel %vm1593, %v1609, %v1610
      %v1612 = vrot.slane %v1436, 1
      %v1613 = vrot.slane %v1445, 1
      %v1614 = vsel %vm1593, %v1612, %v1613
      %v1615 = vrot.slane %v1437, 1
      %v1616 = vrot.slane %v1446, 1
      %v1617 = vsel %vm1593, %v1615, %v1616
      %v1618 = vrot.slane %v1438, 1
      %v1619 = vrot.slane %v1447, 1
      %v1620 = vsel %vm1593, %v1618, %v1619
      %1621 = vrot.lane.b32.xlu0 %v1596, 16
      %v1622 = vpop.permute.xlu0 %1621
      %1623 = vrot.lane.b32.xlu0 %v1599, 16
      %v1624 = vpop.permute.xlu0 %1623
      %1625 = vrot.lane.b32.xlu0 %v1602, 16
      %v1626 = vpop.permute.xlu0 %1625
      %1627 = vrot.lane.b32.xlu0 %v1605, 16
      %v1628 = vpop.permute.xlu0 %1627
      %1629 = vrot.lane.b32.xlu0 %v1608, 16
      %v1630 = vpop.permute.xlu0 %1629
      %1631 = vrot.lane.b32.xlu0 %v1611, 16
      %v1632 = vpop.permute.xlu0 %1631
      %1633 = vrot.lane.b32.xlu0 %v1614, 16
      %v1634 = vpop.permute.xlu0 %1633
      %1635 = vrot.lane.b32.xlu0 %v1617, 16
      %v1636 = vpop.permute.xlu0 %1635
      %1637 = vrot.lane.b32.xlu0 %v1620, 16
      %v1638 = vpop.permute.xlu0 %1637
      %vm1639 = vcmask 64512
      %v1641 = vsel %vm1639, %v1430, %v1558
      %v1643 = vsel %vm1639, %v1431, %v1560
      %v1645 = vsel %vm1639, %v1432, %v1562
      %v1647 = vsel %vm1639, %v1433, %v1564
      %v1649 = vsel %vm1639, %v1434, %v1566
      %v1651 = vsel %vm1639, %v1435, %v1568
      %v1653 = vsel %vm1639, %v1436, %v1570
      %v1655 = vsel %vm1639, %v1437, %v1572
      %v1657 = vsel %vm1639, %v1438, %v1574
      %vm1658 = vcmask 130048
      %v1660 = vsel %vm1658, %v1641, %v1622
      %v1662 = vsel %vm1658, %v1643, %v1624
      %v1664 = vsel %vm1658, %v1645, %v1626
      %v1666 = vsel %vm1658, %v1647, %v1628
      %v1668 = vsel %vm1658, %v1649, %v1630
      %v1670 = vsel %vm1658, %v1651, %v1632
      %v1672 = vsel %vm1658, %v1653, %v1634
      %v1674 = vsel %vm1658, %v1655, %v1636
      %v1676 = vsel %vm1658, %v1657, %v1638
      %1685 = vrot.lane.b32.xlu0 %v1662, 24
      %v1686 = vpop.permute.xlu0 %1685
      %1687 = vrot.lane.b32.xlu0 %v1664, 24
      %v1688 = vpop.permute.xlu0 %1687
      %1689 = vrot.lane.b32.xlu0 %v1666, 24
      %v1690 = vpop.permute.xlu0 %1689
      %1691 = vrot.lane.b32.xlu0 %v1668, 24
      %v1692 = vpop.permute.xlu0 %1691
      %1693 = vrot.lane.b32.xlu0 %v1670, 24
      %v1694 = vpop.permute.xlu0 %1693
      %1695 = vrot.lane.b32.xlu0 %v1672, 24
      %v1696 = vpop.permute.xlu0 %1695
      %1697 = vrot.lane.b32.xlu0 %v1674, 24
      %v1698 = vpop.permute.xlu0 %1697
      %1699 = vrot.lane.b32.xlu0 %v1676, 24
      %v1700 = vpop.permute.xlu0 %1699
      %1702 = vrot.lane.b32.xlu0 %v1662, 48
      %v1703 = vpop.permute.xlu0 %1702
      %1704 = vrot.lane.b32.xlu0 %v1664, 48
      %v1705 = vpop.permute.xlu0 %1704
      %1706 = vrot.lane.b32.xlu0 %v1666, 48
      %v1707 = vpop.permute.xlu0 %1706
      %1708 = vrot.lane.b32.xlu0 %v1668, 48
      %v1709 = vpop.permute.xlu0 %1708
      %1710 = vrot.lane.b32.xlu0 %v1670, 48
      %v1711 = vpop.permute.xlu0 %1710
      %1712 = vrot.lane.b32.xlu0 %v1672, 48
      %v1713 = vpop.permute.xlu0 %1712
      %1714 = vrot.lane.b32.xlu0 %v1674, 48
      %v1715 = vpop.permute.xlu0 %1714
      %1716 = vrot.lane.b32.xlu0 %v1676, 48
      %v1717 = vpop.permute.xlu0 %1716
      %1718 = vrot.lane.b32.xlu0 %v1660, 48
      %v1719 = vpop.permute.xlu0 %1718
      %vm1720 = vcmask 195584
      %v1722 = vsel %vm1720, %v1660, %v1686
      %v1723 = vsel %vm1720, %v1662, %v1686
      %v1725 = vsel %vm1720, %v1662, %v1688
      %v1726 = vsel %vm1720, %v1664, %v1688
      %v1728 = vsel %vm1720, %v1664, %v1690
      %v1729 = vsel %vm1720, %v1666, %v1690
      %v1731 = vsel %vm1720, %v1666, %v1692
      %v1732 = vsel %vm1720, %v1668, %v1692
      %v1734 = vsel %vm1720, %v1668, %v1694
      %v1735 = vsel %vm1720, %v1670, %v1694
      %v1737 = vsel %vm1720, %v1670, %v1696
      %v1738 = vsel %vm1720, %v1672, %v1696
      %v1740 = vsel %vm1720, %v1672, %v1698
      %v1741 = vsel %vm1720, %v1674, %v1698
      %v1743 = vsel %vm1720, %v1674, %v1700
      %v1744 = vsel %vm1720, %v1676, %v1700
      %vm1745 = vcmask 392192
      %v1747 = vsel %vm1745, %v1722, %v1703
      %v1749 = vsel %vm1745, %v1723, %v1705
      %v1750 = vsel %vm1745, %v1725, %v1705
      %v1752 = vsel %vm1745, %v1726, %v1707
      %v1753 = vsel %vm1745, %v1728, %v1707
      %v1755 = vsel %vm1745, %v1729, %v1709
      %v1756 = vsel %vm1745, %v1731, %v1709
      %v1758 = vsel %vm1745, %v1732, %v1711
      %v1759 = vsel %vm1745, %v1734, %v1711
      %v1761 = vsel %vm1745, %v1735, %v1713
      %v1762 = vsel %vm1745, %v1737, %v1713
      %v1764 = vsel %vm1745, %v1738, %v1715
      %v1765 = vsel %vm1745, %v1740, %v1715
      %v1767 = vsel %vm1745, %v1741, %v1717
      %v1768 = vsel %vm1745, %v1743, %v1717
      %v1770 = vsel %vm1745, %v1744, %v1719
      %v1771 = vld [vmem:[%s1] sm:$0xf]
      %v1772 = vld [vmem:[%s1 + $0x4] sm:$0xf]
      %v1773 = vld [vmem:[%s2] sm:$0x1]
      %v1775 = vlaneseq
      %v1776 = vshrl.u32 %v1775, 7
      %v1777 = vsub.s32 0, %v1776
      %v1778 = vrot.slane %v1773, %v1777
      %v1782 = vunpack.c.l.b16 %v1771
      %v1783 = vunpack.c.l.b16 %v1772
      %v1784 = vpack.c.b16 %v1783, %v1782
      %vm1785 = vcmask 588800
      %v1786 = vsel %vm1785, %v1747, 0
      %v1788 = vsel %vm1785, %v1749, 0
      %v1790 = vsel %vm1785, %v1750, 0
      %v1792 = vsel %vm1785, %v1752, 0
      %v1794 = vsel %vm1785, %v1753, 0
      %v1796 = vsel %vm1785, %v1755, 0
      %v1798 = vsel %vm1785, %v1756, 0
      %v1800 = vsel %vm1785, %v1758, 0
      %v1802 = vsel %vm1785, %v1759, 0
      %v1804 = vsel %vm1785, %v1761, 0
      %v1806 = vsel %vm1785, %v1762, 0
      %v1808 = vsel %vm1785, %v1764, 0
      %v1810 = vsel %vm1785, %v1765, 0
      %v1812 = vsel %vm1785, %v1767, 0
      %v1814 = vsel %vm1785, %v1768, 0
      %v1816 = vsel %vm1785, %v1770, 0
      %v1819 = vsel %vm1785, %v1784, 0
      %1821 = vmatprep.subr.bf16.mxu0 0
      %1822 = vmatpush1.bf16.xpose.msra.mxu0 %v1819
      %1823 = vmatprep.subr.bf16.mxu0 0
      %1824 = vmatpush1.bf16.xpose.msra.mxu0 0
      %1825 = vmatprep.subr.bf16.mxu0 0
      %1826 = vmatpush1.bf16.xpose.msra.mxu0 0
      %1827 = vmatprep.subr.bf16.mxu0 0
      %1828 = vmatpush1.bf16.xpose.msra.mxu0 0
      %1829 = vmatprep.subr.bf16.mxu0 0
      %1830 = vmatpush1.bf16.xpose.msra.mxu0 0
      %1831 = vmatprep.subr.bf16.mxu0 0
      %1832 = vmatpush1.bf16.xpose.msra.mxu0 0
      %1833 = vmatprep.subr.bf16.mxu0 0
      %1834 = vmatpush1.bf16.xpose.msra.mxu0 0
      %1835 = vmatprep.subr.bf16.mxu0 0
      %1836 = vmatpush1.bf16.xpose.msra.mxu0 0
      %1837 = vmatprep.subr.bf16.mxu0 0
      %1838 = vmatpush1.bf16.xpose.msra.mxu0 0
      %1839 = vmatprep.subr.bf16.mxu0 0
      %1840 = vmatpush1.bf16.xpose.msra.mxu0 0
      %1841 = vmatprep.subr.bf16.mxu0 0
      %1842 = vmatpush1.bf16.xpose.msra.mxu0 0
      %1843 = vmatprep.subr.bf16.mxu0 0
      %1844 = vmatpush1.bf16.xpose.msra.mxu0 0
      %1845 = vmatprep.subr.bf16.mxu0 0
      %1846 = vmatpush1.bf16.xpose.msra.mxu0 0
      %1847 = vmatprep.subr.bf16.mxu0 0
      %1848 = vmatpush1.bf16.xpose.msra.mxu0 0
      %1849 = vmatprep.subr.bf16.mxu0 0
      %1850 = vmatpush1.bf16.xpose.msra.mxu0 0
      %1851 = vmatprep.subr.bf16.mxu0 0
      %1852 = vmatpush1.bf16.xpose.msra.mxu0 0
      %1853 = vmatprep.mubr.bf16.mxu0 0
      %1854 = vmatmul.mubr.bf16.gmra.mrb[0].mxu0 %v1786
      %v1855 = vpop.f32.mrb[0].mxu0
      %v1856 = vadd.f32 %v1778, %v1855
      %v1857 = vpop.f32.mrb[0].mxu0
      %v1858 = vpop.f32.mrb[0].mxu0
      %v1859 = vadd.f32 %v1778, %v1858
      %v1860 = vpop.f32.mrb[0].mxu0
      %1861 = vmatprep.mubr.bf16.mxu0 0
      %1862 = vmatmul.mubr.bf16.gmra.mrb[0].mxu0 %v1788
      %v1863 = vpop.f32.mrb[0].mxu0
      %v1864 = vadd.f32 %v1778, %v1863
      %v1865 = vpop.f32.mrb[0].mxu0
      %v1866 = vpop.f32.mrb[0].mxu0
      %v1867 = vadd.f32 %v1778, %v1866
      %v1868 = vpop.f32.mrb[0].mxu0
      %1869 = vmatprep.mubr.bf16.mxu0 0
      %1870 = vmatmul.mubr.bf16.gmra.mrb[0].mxu0 %v1790
      %v1871 = vpop.f32.mrb[0].mxu0
      %v1872 = vadd.f32 %v1778, %v1871
      %v1873 = vpop.f32.mrb[0].mxu0
      %v1874 = vpop.f32.mrb[0].mxu0
      %v1875 = vadd.f32 %v1778, %v1874
      %v1876 = vpop.f32.mrb[0].mxu0
      %1877 = vmatprep.mubr.bf16.mxu0 0
      %1878 = vmatmul.mubr.bf16.gmra.mrb[0].mxu0 %v1792
      %v1879 = vpop.f32.mrb[0].mxu0
      %v1880 = vadd.f32 %v1778, %v1879
      %v1881 = vpop.f32.mrb[0].mxu0
      %v1882 = vpop.f32.mrb[0].mxu0
      %v1883 = vadd.f32 %v1778, %v1882
      %v1884 = vpop.f32.mrb[0].mxu0
      %1885 = vmatprep.mubr.bf16.mxu0 0
      %1886 = vmatmul.mubr.bf16.gmra.mrb[0].mxu0 %v1794
      %v1887 = vpop.f32.mrb[0].mxu0
      %v1888 = vadd.f32 %v1778, %v1887
      %v1889 = vpop.f32.mrb[0].mxu0
      %v1890 = vpop.f32.mrb[0].mxu0
      %v1891 = vadd.f32 %v1778, %v1890
      %v1892 = vpop.f32.mrb[0].mxu0
      %1893 = vmatprep.mubr.bf16.mxu0 0
      %1894 = vmatmul.mubr.bf16.gmra.mrb[0].mxu0 %v1796
      %v1895 = vpop.f32.mrb[0].mxu0
      %v1896 = vadd.f32 %v1778, %v1895
      %v1897 = vpop.f32.mrb[0].mxu0
      %v1898 = vpop.f32.mrb[0].mxu0
      %v1899 = vadd.f32 %v1778, %v1898
      %v1900 = vpop.f32.mrb[0].mxu0
      %1901 = vmatprep.mubr.bf16.mxu0 0
      %1902 = vmatmul.mubr.bf16.gmra.mrb[0].mxu0 %v1798
      %v1903 = vpop.f32.mrb[0].mxu0
      %v1904 = vadd.f32 %v1778, %v1903
      %v1905 = vpop.f32.mrb[0].mxu0
      %v1906 = vpop.f32.mrb[0].mxu0
      %v1907 = vadd.f32 %v1778, %v1906
      %v1908 = vpop.f32.mrb[0].mxu0
      %1909 = vmatprep.mubr.bf16.mxu0 0
      %1910 = vmatmul.mubr.bf16.gmra.mrb[0].mxu0 %v1800
      %v1911 = vpop.f32.mrb[0].mxu0
      %v1912 = vadd.f32 %v1778, %v1911
      %v1913 = vpop.f32.mrb[0].mxu0
      %v1914 = vpop.f32.mrb[0].mxu0
      %v1915 = vadd.f32 %v1778, %v1914
      %v1916 = vpop.f32.mrb[0].mxu0
      %1917 = vmatprep.mubr.bf16.mxu0 0
      %1918 = vmatmul.mubr.bf16.gmra.mrb[0].mxu0 %v1802
      %v1919 = vpop.f32.mrb[0].mxu0
      %v1920 = vadd.f32 %v1778, %v1919
      %v1921 = vpop.f32.mrb[0].mxu0
      %v1922 = vpop.f32.mrb[0].mxu0
      %v1923 = vadd.f32 %v1778, %v1922
      %v1924 = vpop.f32.mrb[0].mxu0
      %1925 = vmatprep.mubr.bf16.mxu0 0
      %1926 = vmatmul.mubr.bf16.gmra.mrb[0].mxu0 %v1804
      %v1927 = vpop.f32.mrb[0].mxu0
      %v1928 = vadd.f32 %v1778, %v1927
      %v1929 = vpop.f32.mrb[0].mxu0
      %v1930 = vpop.f32.mrb[0].mxu0
      %v1931 = vadd.f32 %v1778, %v1930
      %v1932 = vpop.f32.mrb[0].mxu0
      %1933 = vmatprep.mubr.bf16.mxu0 0
      %1934 = vmatmul.mubr.bf16.gmra.mrb[0].mxu0 %v1806
      %v1935 = vpop.f32.mrb[0].mxu0
      %v1936 = vadd.f32 %v1778, %v1935
      %v1937 = vpop.f32.mrb[0].mxu0
      %v1938 = vpop.f32.mrb[0].mxu0
      %v1939 = vadd.f32 %v1778, %v1938
      %v1940 = vpop.f32.mrb[0].mxu0
      %1941 = vmatprep.mubr.bf16.mxu0 0
      %1942 = vmatmul.mubr.bf16.gmra.mrb[0].mxu0 %v1808
      %v1943 = vpop.f32.mrb[0].mxu0
      %v1944 = vadd.f32 %v1778, %v1943
      %v1945 = vpop.f32.mrb[0].mxu0
      %v1946 = vpop.f32.mrb[0].mxu0
      %v1947 = vadd.f32 %v1778, %v1946
      %v1948 = vpop.f32.mrb[0].mxu0
      %1949 = vmatprep.mubr.bf16.mxu0 0
      %1950 = vmatmul.mubr.bf16.gmra.mrb[0].mxu0 %v1810
      %v1951 = vpop.f32.mrb[0].mxu0
      %v1952 = vadd.f32 %v1778, %v1951
      %v1953 = vpop.f32.mrb[0].mxu0
      %v1954 = vpop.f32.mrb[0].mxu0
      %v1955 = vadd.f32 %v1778, %v1954
      %v1956 = vpop.f32.mrb[0].mxu0
      %1957 = vmatprep.mubr.bf16.mxu0 0
      %1958 = vmatmul.mubr.bf16.gmra.mrb[0].mxu0 %v1812
      %v1959 = vpop.f32.mrb[0].mxu0
      %v1960 = vadd.f32 %v1778, %v1959
      %v1961 = vpop.f32.mrb[0].mxu0
      %v1962 = vpop.f32.mrb[0].mxu0
      %v1963 = vadd.f32 %v1778, %v1962
      %v1964 = vpop.f32.mrb[0].mxu0
      %1965 = vmatprep.mubr.bf16.mxu0 0
      %1966 = vmatmul.mubr.bf16.gmra.mrb[0].mxu0 %v1814
      %v1967 = vpop.f32.mrb[0].mxu0
      %v1968 = vadd.f32 %v1778, %v1967
      %v1969 = vpop.f32.mrb[0].mxu0
      %v1970 = vpop.f32.mrb[0].mxu0
      %v1971 = vadd.f32 %v1778, %v1970
      %v1972 = vpop.f32.mrb[0].mxu0
      %1973 = vmatprep.mubr.bf16.mxu0 0
      %1974 = vmatmul.mubr.bf16.gmra.mrb[0].mxu0 %v1816
      %v1975 = vpop.f32.mrb[0].mxu0
      %v1976 = vadd.f32 %v1778, %v1975
      %v1977 = vpop.f32.mrb[0].mxu0
      %v1978 = vpop.f32.mrb[0].mxu0
      %v1979 = vadd.f32 %v1778, %v1978
      %v1980 = vpop.f32.mrb[0].mxu0
      %1981 = vdwg.mxu0
      %v1982 = vmax.f32 %v1856, 0.0
      %v1983 = vmax.f32 %v1859, 0.0
      %v1984 = vmax.f32 %v1864, 0.0
      %v1985 = vmax.f32 %v1867, 0.0
      %v1986 = vmax.f32 %v1872, 0.0
      %v1987 = vmax.f32 %v1875, 0.0
      %v1988 = vmax.f32 %v1880, 0.0
      %v1989 = vmax.f32 %v1883, 0.0
      %v1990 = vmax.f32 %v1888, 0.0
      %v1991 = vmax.f32 %v1891, 0.0
      %v1992 = vmax.f32 %v1896, 0.0
      %v1993 = vmax.f32 %v1899, 0.0
      %v1994 = vmax.f32 %v1904, 0.0
      %v1995 = vmax.f32 %v1907, 0.0
      %v1996 = vmax.f32 %v1912, 0.0
      %v1997 = vmax.f32 %v1915, 0.0
      %v1998 = vmax.f32 %v1920, 0.0
      %v1999 = vmax.f32 %v1923, 0.0
      %v2000 = vmax.f32 %v1928, 0.0
      %v2001 = vmax.f32 %v1931, 0.0
      %v2002 = vmax.f32 %v1936, 0.0
      %v2003 = vmax.f32 %v1939, 0.0
      %v2004 = vmax.f32 %v1944, 0.0
      %v2005 = vmax.f32 %v1947, 0.0
      %v2006 = vmax.f32 %v1952, 0.0
      %v2007 = vmax.f32 %v1955, 0.0
      %v2008 = vmax.f32 %v1960, 0.0
      %v2009 = vmax.f32 %v1963, 0.0
      %v2010 = vmax.f32 %v1968, 0.0
      %v2011 = vmax.f32 %v1971, 0.0
      %v2012 = vmax.f32 %v1976, 0.0
      %v2013 = vmax.f32 %v1979, 0.0
      %v2014 = vpack.c.bf16 %v1983, %v1982
      %v2015 = vpack.c.bf16 %v1985, %v1984
      %v2016 = vpack.c.bf16 %v1987, %v1986
      %v2017 = vpack.c.bf16 %v1989, %v1988
      %v2018 = vpack.c.bf16 %v1991, %v1990
      %v2019 = vpack.c.bf16 %v1993, %v1992
      %v2020 = vpack.c.bf16 %v1995, %v1994
      %v2021 = vpack.c.bf16 %v1997, %v1996
      %v2022 = vpack.c.bf16 %v1999, %v1998
      %v2023 = vpack.c.bf16 %v2001, %v2000
      %v2024 = vpack.c.bf16 %v2003, %v2002
      %v2025 = vpack.c.bf16 %v2005, %v2004
      %v2026 = vpack.c.bf16 %v2007, %v2006
      %v2027 = vpack.c.bf16 %v2009, %v2008
      %v2028 = vpack.c.bf16 %v2011, %v2010
      %v2029 = vpack.c.bf16 %v2013, %v2012
      %v2046 = vcombine.high %v2014, %v2014
      %v2048 = vunpack.c.l.s4 1966171168
      %v2049 = vunpack.c.0.s8 %v2048
      %v2050 = vlaneseq
      %v2051 = vshrl.u32 %v2050, 7
      %v2052 = vsub.s32 %v2049, %v2051
      %v2053 = vrot.slane %v2014, %v2052
      %v2055 = vunpack.c.l.s4 1966171168
      %v2056 = vunpack.c.0.s8 %v2055
      %v2057 = vlaneseq
      %v2058 = vshrl.u32 %v2057, 7
      %v2059 = vsub.s32 %v2056, %v2058
      %v2060 = vrot.slane %v2046, %v2059
      %v2061 = vcombine.high %v2053, %v2053
      %v2062 = vcombine.high %v2060, %v2060
      %v2064 = vunpack.c.l.s4 1966171168
      %v2065 = vunpack.c.0.s8 %v2064
      %v2066 = vlaneseq
      %v2067 = vshrl.u32 %v2066, 7
      %v2068 = vsub.s32 %v2065, %v2067
      %v2069 = vrot.slane %v2053, %v2068
      %v2071 = vunpack.c.l.s4 1966171168
      %v2072 = vunpack.c.0.s8 %v2071
      %v2073 = vlaneseq
      %v2074 = vshrl.u32 %v2073, 7
      %v2075 = vsub.s32 %v2072, %v2074
      %v2076 = vrot.slane %v2060, %v2075
      %v2078 = vunpack.c.l.s4 1966171168
      %v2079 = vunpack.c.0.s8 %v2078
      %v2080 = vlaneseq
      %v2081 = vshrl.u32 %v2080, 7
      %v2082 = vsub.s32 %v2079, %v2081
      %v2083 = vrot.slane %v2061, %v2082
      %v2085 = vunpack.c.l.s4 1966171168
      %v2086 = vunpack.c.0.s8 %v2085
      %v2087 = vlaneseq
      %v2088 = vshrl.u32 %v2087, 7
      %v2089 = vsub.s32 %v2086, %v2088
      %v2090 = vrot.slane %v2062, %v2089
      %v2091 = vcombine.high %v2069, %v2069
      %v2092 = vcombine.high %v2076, %v2076
      %v2093 = vcombine.high %v2083, %v2083
      %v2094 = vcombine.high %v2090, %v2090
      %v2095 = vcombine.high %v2015, %v2015
      %v2097 = vunpack.c.l.s4 1966171168
      %v2098 = vunpack.c.0.s8 %v2097
      %v2099 = vlaneseq
      %v2100 = vshrl.u32 %v2099, 7
      %v2101 = vsub.s32 %v2098, %v2100
      %v2102 = vrot.slane %v2015, %v2101
      %v2104 = vunpack.c.l.s4 1966171168
      %v2105 = vunpack.c.0.s8 %v2104
      %v2106 = vlaneseq
      %v2107 = vshrl.u32 %v2106, 7
      %v2108 = vsub.s32 %v2105, %v2107
      %v2109 = vrot.slane %v2095, %v2108
      %v2110 = vcombine.high %v2102, %v2102
      %v2111 = vcombine.high %v2109, %v2109
      %v2113 = vunpack.c.l.s4 1966171168
      %v2114 = vunpack.c.0.s8 %v2113
      %v2115 = vlaneseq
      %v2116 = vshrl.u32 %v2115, 7
      %v2117 = vsub.s32 %v2114, %v2116
      %v2118 = vrot.slane %v2102, %v2117
      %v2120 = vunpack.c.l.s4 1966171168
      %v2121 = vunpack.c.0.s8 %v2120
      %v2122 = vlaneseq
      %v2123 = vshrl.u32 %v2122, 7
      %v2124 = vsub.s32 %v2121, %v2123
      %v2125 = vrot.slane %v2109, %v2124
      %v2127 = vunpack.c.l.s4 1966171168
      %v2128 = vunpack.c.0.s8 %v2127
      %v2129 = vlaneseq
      %v2130 = vshrl.u32 %v2129, 7
      %v2131 = vsub.s32 %v2128, %v2130
      %v2132 = vrot.slane %v2110, %v2131
      %v2134 = vunpack.c.l.s4 1966171168
      %v2135 = vunpack.c.0.s8 %v2134
      %v2136 = vlaneseq
      %v2137 = vshrl.u32 %v2136, 7
      %v2138 = vsub.s32 %v2135, %v2137
      %v2139 = vrot.slane %v2111, %v2138
      %v2140 = vcombine.high %v2118, %v2118
      %v2141 = vcombine.high %v2125, %v2125
      %v2142 = vcombine.high %v2132, %v2132
      %v2143 = vcombine.high %v2139, %v2139
      %v2144 = vcombine.high %v2016, %v2016
      %v2146 = vunpack.c.l.s4 1966171168
      %v2147 = vunpack.c.0.s8 %v2146
      %v2148 = vlaneseq
      %v2149 = vshrl.u32 %v2148, 7
      %v2150 = vsub.s32 %v2147, %v2149
      %v2151 = vrot.slane %v2016, %v2150
      %v2153 = vunpack.c.l.s4 1966171168
      %v2154 = vunpack.c.0.s8 %v2153
      %v2155 = vlaneseq
      %v2156 = vshrl.u32 %v2155, 7
      %v2157 = vsub.s32 %v2154, %v2156
      %v2158 = vrot.slane %v2144, %v2157
      %v2159 = vcombine.high %v2151, %v2151
      %v2160 = vcombine.high %v2158, %v2158
      %v2162 = vunpack.c.l.s4 1966171168
      %v2163 = vunpack.c.0.s8 %v2162
      %v2164 = vlaneseq
      %v2165 = vshrl.u32 %v2164, 7
      %v2166 = vsub.s32 %v2163, %v2165
      %v2167 = vrot.slane %v2151, %v2166
      %v2169 = vunpack.c.l.s4 1966171168
      %v2170 = vunpack.c.0.s8 %v2169
      %v2171 = vlaneseq
      %v2172 = vshrl.u32 %v2171, 7
      %v2173 = vsub.s32 %v2170, %v2172
      %v2174 = vrot.slane %v2158, %v2173
      %v2176 = vunpack.c.l.s4 1966171168
      %v2177 = vunpack.c.0.s8 %v2176
      %v2178 = vlaneseq
      %v2179 = vshrl.u32 %v2178, 7
      %v2180 = vsub.s32 %v2177, %v2179
      %v2181 = vrot.slane %v2159, %v2180
      %v2183 = vunpack.c.l.s4 1966171168
      %v2184 = vunpack.c.0.s8 %v2183
      %v2185 = vlaneseq
      %v2186 = vshrl.u32 %v2185, 7
      %v2187 = vsub.s32 %v2184, %v2186
      %v2188 = vrot.slane %v2160, %v2187
      %v2189 = vcombine.high %v2167, %v2167
      %v2190 = vcombine.high %v2174, %v2174
      %v2191 = vcombine.high %v2181, %v2181
      %v2192 = vcombine.high %v2188, %v2188
      %v2193 = vcombine.high %v2017, %v2017
      %v2195 = vunpack.c.l.s4 1966171168
      %v2196 = vunpack.c.0.s8 %v2195
      %v2197 = vlaneseq
      %v2198 = vshrl.u32 %v2197, 7
      %v2199 = vsub.s32 %v2196, %v2198
      %v2200 = vrot.slane %v2017, %v2199
      %v2202 = vunpack.c.l.s4 1966171168
      %v2203 = vunpack.c.0.s8 %v2202
      %v2204 = vlaneseq
      %v2205 = vshrl.u32 %v2204, 7
      %v2206 = vsub.s32 %v2203, %v2205
      %v2207 = vrot.slane %v2193, %v2206
      %v2208 = vcombine.high %v2200, %v2200
      %v2209 = vcombine.high %v2207, %v2207
      %v2211 = vunpack.c.l.s4 1966171168
      %v2212 = vunpack.c.0.s8 %v2211
      %v2213 = vlaneseq
      %v2214 = vshrl.u32 %v2213, 7
      %v2215 = vsub.s32 %v2212, %v2214
      %v2216 = vrot.slane %v2200, %v2215
      %v2218 = vunpack.c.l.s4 1966171168
      %v2219 = vunpack.c.0.s8 %v2218
      %v2220 = vlaneseq
      %v2221 = vshrl.u32 %v2220, 7
      %v2222 = vsub.s32 %v2219, %v2221
      %v2223 = vrot.slane %v2207, %v2222
      %v2225 = vunpack.c.l.s4 1966171168
      %v2226 = vunpack.c.0.s8 %v2225
      %v2227 = vlaneseq
      %v2228 = vshrl.u32 %v2227, 7
      %v2229 = vsub.s32 %v2226, %v2228
      %v2230 = vrot.slane %v2208, %v2229
      %v2232 = vunpack.c.l.s4 1966171168
      %v2233 = vunpack.c.0.s8 %v2232
      %v2234 = vlaneseq
      %v2235 = vshrl.u32 %v2234, 7
      %v2236 = vsub.s32 %v2233, %v2235
      %v2237 = vrot.slane %v2209, %v2236
      %v2238 = vcombine.high %v2216, %v2216
      %v2239 = vcombine.high %v2223, %v2223
      %v2240 = vcombine.high %v2230, %v2230
      %v2241 = vcombine.high %v2237, %v2237
      %v2242 = vcombine.high %v2018, %v2018
      %v2244 = vunpack.c.l.s4 1966171168
      %v2245 = vunpack.c.0.s8 %v2244
      %v2246 = vlaneseq
      %v2247 = vshrl.u32 %v2246, 7
      %v2248 = vsub.s32 %v2245, %v2247
      %v2249 = vrot.slane %v2018, %v2248
      %v2251 = vunpack.c.l.s4 1966171168
      %v2252 = vunpack.c.0.s8 %v2251
      %v2253 = vlaneseq
      %v2254 = vshrl.u32 %v2253, 7
      %v2255 = vsub.s32 %v2252, %v2254
      %v2256 = vrot.slane %v2242, %v2255
      %v2257 = vcombine.high %v2249, %v2249
      %v2258 = vcombine.high %v2256, %v2256
      %v2260 = vunpack.c.l.s4 1966171168
      %v2261 = vunpack.c.0.s8 %v2260
      %v2262 = vlaneseq
      %v2263 = vshrl.u32 %v2262, 7
      %v2264 = vsub.s32 %v2261, %v2263
      %v2265 = vrot.slane %v2249, %v2264
      %v2267 = vunpack.c.l.s4 1966171168
      %v2268 = vunpack.c.0.s8 %v2267
      %v2269 = vlaneseq
      %v2270 = vshrl.u32 %v2269, 7
      %v2271 = vsub.s32 %v2268, %v2270
      %v2272 = vrot.slane %v2256, %v2271
      %v2274 = vunpack.c.l.s4 1966171168
      %v2275 = vunpack.c.0.s8 %v2274
      %v2276 = vlaneseq
      %v2277 = vshrl.u32 %v2276, 7
      %v2278 = vsub.s32 %v2275, %v2277
      %v2279 = vrot.slane %v2257, %v2278
      %v2281 = vunpack.c.l.s4 1966171168
      %v2282 = vunpack.c.0.s8 %v2281
      %v2283 = vlaneseq
      %v2284 = vshrl.u32 %v2283, 7
      %v2285 = vsub.s32 %v2282, %v2284
      %v2286 = vrot.slane %v2258, %v2285
      %v2287 = vcombine.high %v2265, %v2265
      %v2288 = vcombine.high %v2272, %v2272
      %v2289 = vcombine.high %v2279, %v2279
      %v2290 = vcombine.high %v2286, %v2286
      %v2291 = vcombine.high %v2019, %v2019
      %v2293 = vunpack.c.l.s4 1966171168
      %v2294 = vunpack.c.0.s8 %v2293
      %v2295 = vlaneseq
      %v2296 = vshrl.u32 %v2295, 7
      %v2297 = vsub.s32 %v2294, %v2296
      %v2298 = vrot.slane %v2019, %v2297
      %v2300 = vunpack.c.l.s4 1966171168
      %v2301 = vunpack.c.0.s8 %v2300
      %v2302 = vlaneseq
      %v2303 = vshrl.u32 %v2302, 7
      %v2304 = vsub.s32 %v2301, %v2303
      %v2305 = vrot.slane %v2291, %v2304
      %v2306 = vcombine.high %v2298, %v2298
      %v2307 = vcombine.high %v2305, %v2305
      %v2309 = vunpack.c.l.s4 1966171168
      %v2310 = vunpack.c.0.s8 %v2309
      %v2311 = vlaneseq
      %v2312 = vshrl.u32 %v2311, 7
      %v2313 = vsub.s32 %v2310, %v2312
      %v2314 = vrot.slane %v2298, %v2313
      %v2316 = vunpack.c.l.s4 1966171168
      %v2317 = vunpack.c.0.s8 %v2316
      %v2318 = vlaneseq
      %v2319 = vshrl.u32 %v2318, 7
      %v2320 = vsub.s32 %v2317, %v2319
      %v2321 = vrot.slane %v2305, %v2320
      %v2323 = vunpack.c.l.s4 1966171168
      %v2324 = vunpack.c.0.s8 %v2323
      %v2325 = vlaneseq
      %v2326 = vshrl.u32 %v2325, 7
      %v2327 = vsub.s32 %v2324, %v2326
      %v2328 = vrot.slane %v2306, %v2327
      %v2330 = vunpack.c.l.s4 1966171168
      %v2331 = vunpack.c.0.s8 %v2330
      %v2332 = vlaneseq
      %v2333 = vshrl.u32 %v2332, 7
      %v2334 = vsub.s32 %v2331, %v2333
      %v2335 = vrot.slane %v2307, %v2334
      %v2336 = vcombine.high %v2314, %v2314
      %v2337 = vcombine.high %v2321, %v2321
      %v2338 = vcombine.high %v2328, %v2328
      %v2339 = vcombine.high %v2335, %v2335
      %v2340 = vcombine.high %v2020, %v2020
      %v2342 = vunpack.c.l.s4 1966171168
      %v2343 = vunpack.c.0.s8 %v2342
      %v2344 = vlaneseq
      %v2345 = vshrl.u32 %v2344, 7
      %v2346 = vsub.s32 %v2343, %v2345
      %v2347 = vrot.slane %v2020, %v2346
      %v2349 = vunpack.c.l.s4 1966171168
      %v2350 = vunpack.c.0.s8 %v2349
      %v2351 = vlaneseq
      %v2352 = vshrl.u32 %v2351, 7
      %v2353 = vsub.s32 %v2350, %v2352
      %v2354 = vrot.slane %v2340, %v2353
      %v2355 = vcombine.high %v2347, %v2347
      %v2356 = vcombine.high %v2354, %v2354
      %v2358 = vunpack.c.l.s4 1966171168
      %v2359 = vunpack.c.0.s8 %v2358
      %v2360 = vlaneseq
      %v2361 = vshrl.u32 %v2360, 7
      %v2362 = vsub.s32 %v2359, %v2361
      %v2363 = vrot.slane %v2347, %v2362
      %v2365 = vunpack.c.l.s4 1966171168
      %v2366 = vunpack.c.0.s8 %v2365
      %v2367 = vlaneseq
      %v2368 = vshrl.u32 %v2367, 7
      %v2369 = vsub.s32 %v2366, %v2368
      %v2370 = vrot.slane %v2354, %v2369
      %v2372 = vunpack.c.l.s4 1966171168
      %v2373 = vunpack.c.0.s8 %v2372
      %v2374 = vlaneseq
      %v2375 = vshrl.u32 %v2374, 7
      %v2376 = vsub.s32 %v2373, %v2375
      %v2377 = vrot.slane %v2355, %v2376
      %v2379 = vunpack.c.l.s4 1966171168
      %v2380 = vunpack.c.0.s8 %v2379
      %v2381 = vlaneseq
      %v2382 = vshrl.u32 %v2381, 7
      %v2383 = vsub.s32 %v2380, %v2382
      %v2384 = vrot.slane %v2356, %v2383
      %v2385 = vcombine.high %v2363, %v2363
      %v2386 = vcombine.high %v2370, %v2370
      %v2387 = vcombine.high %v2377, %v2377
      %v2388 = vcombine.high %v2384, %v2384
      %v2389 = vcombine.high %v2021, %v2021
      %v2391 = vunpack.c.l.s4 1966171168
      %v2392 = vunpack.c.0.s8 %v2391
      %v2393 = vlaneseq
      %v2394 = vshrl.u32 %v2393, 7
      %v2395 = vsub.s32 %v2392, %v2394
      %v2396 = vrot.slane %v2021, %v2395
      %v2398 = vunpack.c.l.s4 1966171168
      %v2399 = vunpack.c.0.s8 %v2398
      %v2400 = vlaneseq
      %v2401 = vshrl.u32 %v2400, 7
      %v2402 = vsub.s32 %v2399, %v2401
      %v2403 = vrot.slane %v2389, %v2402
      %v2404 = vcombine.high %v2396, %v2396
      %v2405 = vcombine.high %v2403, %v2403
      %v2407 = vunpack.c.l.s4 1966171168
      %v2408 = vunpack.c.0.s8 %v2407
      %v2409 = vlaneseq
      %v2410 = vshrl.u32 %v2409, 7
      %v2411 = vsub.s32 %v2408, %v2410
      %v2412 = vrot.slane %v2396, %v2411
      %v2414 = vunpack.c.l.s4 1966171168
      %v2415 = vunpack.c.0.s8 %v2414
      %v2416 = vlaneseq
      %v2417 = vshrl.u32 %v2416, 7
      %v2418 = vsub.s32 %v2415, %v2417
      %v2419 = vrot.slane %v2403, %v2418
      %v2421 = vunpack.c.l.s4 1966171168
      %v2422 = vunpack.c.0.s8 %v2421
      %v2423 = vlaneseq
      %v2424 = vshrl.u32 %v2423, 7
      %v2425 = vsub.s32 %v2422, %v2424
      %v2426 = vrot.slane %v2404, %v2425
      %v2428 = vunpack.c.l.s4 1966171168
      %v2429 = vunpack.c.0.s8 %v2428
      %v2430 = vlaneseq
      %v2431 = vshrl.u32 %v2430, 7
      %v2432 = vsub.s32 %v2429, %v2431
      %v2433 = vrot.slane %v2405, %v2432
      %v2434 = vcombine.high %v2412, %v2412
      %v2435 = vcombine.high %v2419, %v2419
      %v2436 = vcombine.high %v2426, %v2426
      %v2437 = vcombine.high %v2433, %v2433
      %v2438 = vcombine.high %v2022, %v2022
      %v2440 = vunpack.c.l.s4 1966171168
      %v2441 = vunpack.c.0.s8 %v2440
      %v2442 = vlaneseq
      %v2443 = vshrl.u32 %v2442, 7
      %v2444 = vsub.s32 %v2441, %v2443
      %v2445 = vrot.slane %v2022, %v2444
      %v2447 = vunpack.c.l.s4 1966171168
      %v2448 = vunpack.c.0.s8 %v2447
      %v2449 = vlaneseq
      %v2450 = vshrl.u32 %v2449, 7
      %v2451 = vsub.s32 %v2448, %v2450
      %v2452 = vrot.slane %v2438, %v2451
      %v2453 = vcombine.high %v2445, %v2445
      %v2454 = vcombine.high %v2452, %v2452
      %v2456 = vunpack.c.l.s4 1966171168
      %v2457 = vunpack.c.0.s8 %v2456
      %v2458 = vlaneseq
      %v2459 = vshrl.u32 %v2458, 7
      %v2460 = vsub.s32 %v2457, %v2459
      %v2461 = vrot.slane %v2445, %v2460
      %v2463 = vunpack.c.l.s4 1966171168
      %v2464 = vunpack.c.0.s8 %v2463
      %v2465 = vlaneseq
      %v2466 = vshrl.u32 %v2465, 7
      %v2467 = vsub.s32 %v2464, %v2466
      %v2468 = vrot.slane %v2452, %v2467
      %v2470 = vunpack.c.l.s4 1966171168
      %v2471 = vunpack.c.0.s8 %v2470
      %v2472 = vlaneseq
      %v2473 = vshrl.u32 %v2472, 7
      %v2474 = vsub.s32 %v2471, %v2473
      %v2475 = vrot.slane %v2453, %v2474
      %v2477 = vunpack.c.l.s4 1966171168
      %v2478 = vunpack.c.0.s8 %v2477
      %v2479 = vlaneseq
      %v2480 = vshrl.u32 %v2479, 7
      %v2481 = vsub.s32 %v2478, %v2480
      %v2482 = vrot.slane %v2454, %v2481
      %v2483 = vcombine.high %v2461, %v2461
      %v2484 = vcombine.high %v2468, %v2468
      %v2485 = vcombine.high %v2475, %v2475
      %v2486 = vcombine.high %v2482, %v2482
      %v2487 = vcombine.high %v2023, %v2023
      %v2489 = vunpack.c.l.s4 1966171168
      %v2490 = vunpack.c.0.s8 %v2489
      %v2491 = vlaneseq
      %v2492 = vshrl.u32 %v2491, 7
      %v2493 = vsub.s32 %v2490, %v2492
      %v2494 = vrot.slane %v2023, %v2493
      %v2496 = vunpack.c.l.s4 1966171168
      %v2497 = vunpack.c.0.s8 %v2496
      %v2498 = vlaneseq
      %v2499 = vshrl.u32 %v2498, 7
      %v2500 = vsub.s32 %v2497, %v2499
      %v2501 = vrot.slane %v2487, %v2500
      %v2502 = vcombine.high %v2494, %v2494
      %v2503 = vcombine.high %v2501, %v2501
      %v2505 = vunpack.c.l.s4 1966171168
      %v2506 = vunpack.c.0.s8 %v2505
      %v2507 = vlaneseq
      %v2508 = vshrl.u32 %v2507, 7
      %v2509 = vsub.s32 %v2506, %v2508
      %v2510 = vrot.slane %v2494, %v2509
      %v2512 = vunpack.c.l.s4 1966171168
      %v2513 = vunpack.c.0.s8 %v2512
      %v2514 = vlaneseq
      %v2515 = vshrl.u32 %v2514, 7
      %v2516 = vsub.s32 %v2513, %v2515
      %v2517 = vrot.slane %v2501, %v2516
      %v2519 = vunpack.c.l.s4 1966171168
      %v2520 = vunpack.c.0.s8 %v2519
      %v2521 = vlaneseq
      %v2522 = vshrl.u32 %v2521, 7
      %v2523 = vsub.s32 %v2520, %v2522
      %v2524 = vrot.slane %v2502, %v2523
      %v2526 = vunpack.c.l.s4 1966171168
      %v2527 = vunpack.c.0.s8 %v2526
      %v2528 = vlaneseq
      %v2529 = vshrl.u32 %v2528, 7
      %v2530 = vsub.s32 %v2527, %v2529
      %v2531 = vrot.slane %v2503, %v2530
      %v2532 = vcombine.high %v2510, %v2510
      %v2533 = vcombine.high %v2517, %v2517
      %v2534 = vcombine.high %v2524, %v2524
      %v2535 = vcombine.high %v2531, %v2531
      %v2536 = vcombine.high %v2024, %v2024
      %v2538 = vunpack.c.l.s4 1966171168
      %v2539 = vunpack.c.0.s8 %v2538
      %v2540 = vlaneseq
      %v2541 = vshrl.u32 %v2540, 7
      %v2542 = vsub.s32 %v2539, %v2541
      %v2543 = vrot.slane %v2024, %v2542
      %v2545 = vunpack.c.l.s4 1966171168
      %v2546 = vunpack.c.0.s8 %v2545
      %v2547 = vlaneseq
      %v2548 = vshrl.u32 %v2547, 7
      %v2549 = vsub.s32 %v2546, %v2548
      %v2550 = vrot.slane %v2536, %v2549
      %v2551 = vcombine.high %v2543, %v2543
      %v2552 = vcombine.high %v2550, %v2550
      %v2554 = vunpack.c.l.s4 1966171168
      %v2555 = vunpack.c.0.s8 %v2554
      %v2556 = vlaneseq
      %v2557 = vshrl.u32 %v2556, 7
      %v2558 = vsub.s32 %v2555, %v2557
      %v2559 = vrot.slane %v2543, %v2558
      %v2561 = vunpack.c.l.s4 1966171168
      %v2562 = vunpack.c.0.s8 %v2561
      %v2563 = vlaneseq
      %v2564 = vshrl.u32 %v2563, 7
      %v2565 = vsub.s32 %v2562, %v2564
      %v2566 = vrot.slane %v2550, %v2565
      %v2568 = vunpack.c.l.s4 1966171168
      %v2569 = vunpack.c.0.s8 %v2568
      %v2570 = vlaneseq
      %v2571 = vshrl.u32 %v2570, 7
      %v2572 = vsub.s32 %v2569, %v2571
      %v2573 = vrot.slane %v2551, %v2572
      %v2575 = vunpack.c.l.s4 1966171168
      %v2576 = vunpack.c.0.s8 %v2575
      %v2577 = vlaneseq
      %v2578 = vshrl.u32 %v2577, 7
      %v2579 = vsub.s32 %v2576, %v2578
      %v2580 = vrot.slane %v2552, %v2579
      %v2581 = vcombine.high %v2559, %v2559
      %v2582 = vcombine.high %v2566, %v2566
      %v2583 = vcombine.high %v2573, %v2573
      %v2584 = vcombine.high %v2580, %v2580
      %v2585 = vcombine.high %v2025, %v2025
      %v2587 = vunpack.c.l.s4 1966171168
      %v2588 = vunpack.c.0.s8 %v2587
      %v2589 = vlaneseq
      %v2590 = vshrl.u32 %v2589, 7
      %v2591 = vsub.s32 %v2588, %v2590
      %v2592 = vrot.slane %v2025, %v2591
      %v2594 = vunpack.c.l.s4 1966171168
      %v2595 = vunpack.c.0.s8 %v2594
      %v2596 = vlaneseq
      %v2597 = vshrl.u32 %v2596, 7
      %v2598 = vsub.s32 %v2595, %v2597
      %v2599 = vrot.slane %v2585, %v2598
      %v2600 = vcombine.high %v2592, %v2592
      %v2601 = vcombine.high %v2599, %v2599
      %v2603 = vunpack.c.l.s4 1966171168
      %v2604 = vunpack.c.0.s8 %v2603
      %v2605 = vlaneseq
      %v2606 = vshrl.u32 %v2605, 7
      %v2607 = vsub.s32 %v2604, %v2606
      %v2608 = vrot.slane %v2592, %v2607
      %v2610 = vunpack.c.l.s4 1966171168
      %v2611 = vunpack.c.0.s8 %v2610
      %v2612 = vlaneseq
      %v2613 = vshrl.u32 %v2612, 7
      %v2614 = vsub.s32 %v2611, %v2613
      %v2615 = vrot.slane %v2599, %v2614
      %v2617 = vunpack.c.l.s4 1966171168
      %v2618 = vunpack.c.0.s8 %v2617
      %v2619 = vlaneseq
      %v2620 = vshrl.u32 %v2619, 7
      %v2621 = vsub.s32 %v2618, %v2620
      %v2622 = vrot.slane %v2600, %v2621
      %v2624 = vunpack.c.l.s4 1966171168
      %v2625 = vunpack.c.0.s8 %v2624
      %v2626 = vlaneseq
      %v2627 = vshrl.u32 %v2626, 7
      %v2628 = vsub.s32 %v2625, %v2627
      %v2629 = vrot.slane %v2601, %v2628
      %v2630 = vcombine.high %v2608, %v2608
      %v2631 = vcombine.high %v2615, %v2615
      %v2632 = vcombine.high %v2622, %v2622
      %v2633 = vcombine.high %v2629, %v2629
      %v2634 = vcombine.high %v2026, %v2026
      %v2636 = vunpack.c.l.s4 1966171168
      %v2637 = vunpack.c.0.s8 %v2636
      %v2638 = vlaneseq
      %v2639 = vshrl.u32 %v2638, 7
      %v2640 = vsub.s32 %v2637, %v2639
      %v2641 = vrot.slane %v2026, %v2640
      %v2643 = vunpack.c.l.s4 1966171168
      %v2644 = vunpack.c.0.s8 %v2643
      %v2645 = vlaneseq
      %v2646 = vshrl.u32 %v2645, 7
      %v2647 = vsub.s32 %v2644, %v2646
      %v2648 = vrot.slane %v2634, %v2647
      %v2649 = vcombine.high %v2641, %v2641
      %v2650 = vcombine.high %v2648, %v2648
      %v2652 = vunpack.c.l.s4 1966171168
      %v2653 = vunpack.c.0.s8 %v2652
      %v2654 = vlaneseq
      %v2655 = vshrl.u32 %v2654, 7
      %v2656 = vsub.s32 %v2653, %v2655
      %v2657 = vrot.slane %v2641, %v2656
      %v2659 = vunpack.c.l.s4 1966171168
      %v2660 = vunpack.c.0.s8 %v2659
      %v2661 = vlaneseq
      %v2662 = vshrl.u32 %v2661, 7
      %v2663 = vsub.s32 %v2660, %v2662
      %v2664 = vrot.slane %v2648, %v2663
      %v2666 = vunpack.c.l.s4 1966171168
      %v2667 = vunpack.c.0.s8 %v2666
      %v2668 = vlaneseq
      %v2669 = vshrl.u32 %v2668, 7
      %v2670 = vsub.s32 %v2667, %v2669
      %v2671 = vrot.slane %v2649, %v2670
      %v2673 = vunpack.c.l.s4 1966171168
      %v2674 = vunpack.c.0.s8 %v2673
      %v2675 = vlaneseq
      %v2676 = vshrl.u32 %v2675, 7
      %v2677 = vsub.s32 %v2674, %v2676
      %v2678 = vrot.slane %v2650, %v2677
      %v2679 = vcombine.high %v2657, %v2657
      %v2680 = vcombine.high %v2664, %v2664
      %v2681 = vcombine.high %v2671, %v2671
      %v2682 = vcombine.high %v2678, %v2678
      %v2683 = vcombine.high %v2027, %v2027
      %v2685 = vunpack.c.l.s4 1966171168
      %v2686 = vunpack.c.0.s8 %v2685
      %v2687 = vlaneseq
      %v2688 = vshrl.u32 %v2687, 7
      %v2689 = vsub.s32 %v2686, %v2688
      %v2690 = vrot.slane %v2027, %v2689
      %v2692 = vunpack.c.l.s4 1966171168
      %v2693 = vunpack.c.0.s8 %v2692
      %v2694 = vlaneseq
      %v2695 = vshrl.u32 %v2694, 7
      %v2696 = vsub.s32 %v2693, %v2695
      %v2697 = vrot.slane %v2683, %v2696
      %v2698 = vcombine.high %v2690, %v2690
      %v2699 = vcombine.high %v2697, %v2697
      %v2701 = vunpack.c.l.s4 1966171168
      %v2702 = vunpack.c.0.s8 %v2701
      %v2703 = vlaneseq
      %v2704 = vshrl.u32 %v2703, 7
      %v2705 = vsub.s32 %v2702, %v2704
      %v2706 = vrot.slane %v2690, %v2705
      %v2708 = vunpack.c.l.s4 1966171168
      %v2709 = vunpack.c.0.s8 %v2708
      %v2710 = vlaneseq
      %v2711 = vshrl.u32 %v2710, 7
      %v2712 = vsub.s32 %v2709, %v2711
      %v2713 = vrot.slane %v2697, %v2712
      %v2715 = vunpack.c.l.s4 1966171168
      %v2716 = vunpack.c.0.s8 %v2715
      %v2717 = vlaneseq
      %v2718 = vshrl.u32 %v2717, 7
      %v2719 = vsub.s32 %v2716, %v2718
      %v2720 = vrot.slane %v2698, %v2719
      %v2722 = vunpack.c.l.s4 1966171168
      %v2723 = vunpack.c.0.s8 %v2722
      %v2724 = vlaneseq
      %v2725 = vshrl.u32 %v2724, 7
      %v2726 = vsub.s32 %v2723, %v2725
      %v2727 = vrot.slane %v2699, %v2726
      %v2728 = vcombine.high %v2706, %v2706
      %v2729 = vcombine.high %v2713, %v2713
      %v2730 = vcombine.high %v2720, %v2720
      %v2731 = vcombine.high %v2727, %v2727
      %v2732 = vcombine.high %v2028, %v2028
      %v2734 = vunpack.c.l.s4 1966171168
      %v2735 = vunpack.c.0.s8 %v2734
      %v2736 = vlaneseq
      %v2737 = vshrl.u32 %v2736, 7
      %v2738 = vsub.s32 %v2735, %v2737
      %v2739 = vrot.slane %v2028, %v2738
      %v2741 = vunpack.c.l.s4 1966171168
      %v2742 = vunpack.c.0.s8 %v2741
      %v2743 = vlaneseq
      %v2744 = vshrl.u32 %v2743, 7
      %v2745 = vsub.s32 %v2742, %v2744
      %v2746 = vrot.slane %v2732, %v2745
      %v2747 = vcombine.high %v2739, %v2739
      %v2748 = vcombine.high %v2746, %v2746
      %v2750 = vunpack.c.l.s4 1966171168
      %v2751 = vunpack.c.0.s8 %v2750
      %v2752 = vlaneseq
      %v2753 = vshrl.u32 %v2752, 7
      %v2754 = vsub.s32 %v2751, %v2753
      %v2755 = vrot.slane %v2739, %v2754
      %v2757 = vunpack.c.l.s4 1966171168
      %v2758 = vunpack.c.0.s8 %v2757
      %v2759 = vlaneseq
      %v2760 = vshrl.u32 %v2759, 7
      %v2761 = vsub.s32 %v2758, %v2760
      %v2762 = vrot.slane %v2746, %v2761
      %v2764 = vunpack.c.l.s4 1966171168
      %v2765 = vunpack.c.0.s8 %v2764
      %v2766 = vlaneseq
      %v2767 = vshrl.u32 %v2766, 7
      %v2768 = vsub.s32 %v2765, %v2767
      %v2769 = vrot.slane %v2747, %v2768
      %v2771 = vunpack.c.l.s4 1966171168
      %v2772 = vunpack.c.0.s8 %v2771
      %v2773 = vlaneseq
      %v2774 = vshrl.u32 %v2773, 7
      %v2775 = vsub.s32 %v2772, %v2774
      %v2776 = vrot.slane %v2748, %v2775
      %v2777 = vcombine.high %v2755, %v2755
      %v2778 = vcombine.high %v2762, %v2762
      %v2779 = vcombine.high %v2769, %v2769
      %v2780 = vcombine.high %v2776, %v2776
      %v2781 = vcombine.high %v2029, %v2029
      %v2783 = vunpack.c.l.s4 1966171168
      %v2784 = vunpack.c.0.s8 %v2783
      %v2785 = vlaneseq
      %v2786 = vshrl.u32 %v2785, 7
      %v2787 = vsub.s32 %v2784, %v2786
      %v2788 = vrot.slane %v2029, %v2787
      %v2790 = vunpack.c.l.s4 1966171168
      %v2791 = vunpack.c.0.s8 %v2790
      %v2792 = vlaneseq
      %v2793 = vshrl.u32 %v2792, 7
      %v2794 = vsub.s32 %v2791, %v2793
      %v2795 = vrot.slane %v2781, %v2794
      %v2796 = vcombine.high %v2788, %v2788
      %v2797 = vcombine.high %v2795, %v2795
      %v2799 = vunpack.c.l.s4 1966171168
      %v2800 = vunpack.c.0.s8 %v2799
      %v2801 = vlaneseq
      %v2802 = vshrl.u32 %v2801, 7
      %v2803 = vsub.s32 %v2800, %v2802
      %v2804 = vrot.slane %v2788, %v2803
      %v2806 = vunpack.c.l.s4 1966171168
      %v2807 = vunpack.c.0.s8 %v2806
      %v2808 = vlaneseq
      %v2809 = vshrl.u32 %v2808, 7
      %v2810 = vsub.s32 %v2807, %v2809
      %v2811 = vrot.slane %v2795, %v2810
      %v2813 = vunpack.c.l.s4 1966171168
      %v2814 = vunpack.c.0.s8 %v2813
      %v2815 = vlaneseq
      %v2816 = vshrl.u32 %v2815, 7
      %v2817 = vsub.s32 %v2814, %v2816
      %v2818 = vrot.slane %v2796, %v2817
      %v2820 = vunpack.c.l.s4 1966171168
      %v2821 = vunpack.c.0.s8 %v2820
      %v2822 = vlaneseq
      %v2823 = vshrl.u32 %v2822, 7
      %v2824 = vsub.s32 %v2821, %v2823
      %v2825 = vrot.slane %v2797, %v2824
      %v2826 = vcombine.high %v2804, %v2804
      %v2827 = vcombine.high %v2811, %v2811
      %v2828 = vcombine.high %v2818, %v2818
      %v2829 = vcombine.high %v2825, %v2825
      %v2830 = vunpack.i.l.s16 %v2069
      %v2831 = vunpack.i.h.s16 %v2069
      %v2832 = vunpack.i.l.s16 %v2083
      %v2833 = vunpack.i.h.s16 %v2083
      %v2834 = vunpack.i.l.s16 %v2091
      %v2835 = vunpack.i.h.s16 %v2091
      %v2836 = vunpack.i.l.s16 %v2093
      %v2837 = vunpack.i.h.s16 %v2093
      %v2838 = vunpack.i.l.s16 %v2076
      %v2839 = vunpack.i.h.s16 %v2076
      %v2840 = vunpack.i.l.s16 %v2090
      %v2841 = vunpack.i.h.s16 %v2090
      %v2842 = vunpack.i.l.s16 %v2092
      %v2843 = vunpack.i.h.s16 %v2092
      %v2844 = vunpack.i.l.s16 %v2094
      %v2845 = vunpack.i.h.s16 %v2094
      %v2846 = vunpack.i.l.s16 %v2118
      %v2847 = vunpack.i.h.s16 %v2118
      %v2848 = vunpack.i.l.s16 %v2132
      %v2849 = vunpack.i.h.s16 %v2132
      %v2850 = vunpack.i.l.s16 %v2140
      %v2851 = vunpack.i.h.s16 %v2140
      %v2852 = vunpack.i.l.s16 %v2142
      %v2853 = vunpack.i.h.s16 %v2142
      %v2854 = vunpack.i.l.s16 %v2125
      %v2855 = vunpack.i.h.s16 %v2125
      %v2856 = vunpack.i.l.s16 %v2139
      %v2857 = vunpack.i.h.s16 %v2139
      %v2858 = vunpack.i.l.s16 %v2141
      %v2859 = vunpack.i.h.s16 %v2141
      %v2860 = vunpack.i.l.s16 %v2143
      %v2861 = vunpack.i.h.s16 %v2143
      %v2862 = vunpack.i.l.s16 %v2167
      %v2863 = vunpack.i.h.s16 %v2167
      %v2864 = vunpack.i.l.s16 %v2181
      %v2865 = vunpack.i.h.s16 %v2181
      %v2866 = vunpack.i.l.s16 %v2189
      %v2867 = vunpack.i.h.s16 %v2189
      %v2868 = vunpack.i.l.s16 %v2191
      %v2869 = vunpack.i.h.s16 %v2191
      %v2870 = vunpack.i.l.s16 %v2174
      %v2871 = vunpack.i.h.s16 %v2174
      %v2872 = vunpack.i.l.s16 %v2188
      %v2873 = vunpack.i.h.s16 %v2188
      %v2874 = vunpack.i.l.s16 %v2190
      %v2875 = vunpack.i.h.s16 %v2190
      %v2876 = vunpack.i.l.s16 %v2192
      %v2877 = vunpack.i.h.s16 %v2192
      %v2878 = vunpack.i.l.s16 %v2216
      %v2879 = vunpack.i.h.s16 %v2216
      %v2880 = vunpack.i.l.s16 %v2230
      %v2881 = vunpack.i.h.s16 %v2230
      %v2882 = vunpack.i.l.s16 %v2238
      %v2883 = vunpack.i.h.s16 %v2238
      %v2884 = vunpack.i.l.s16 %v2240
      %v2885 = vunpack.i.h.s16 %v2240
      %v2886 = vunpack.i.l.s16 %v2223
      %v2887 = vunpack.i.h.s16 %v2223
      %v2888 = vunpack.i.l.s16 %v2237
      %v2889 = vunpack.i.h.s16 %v2237
      %v2890 = vunpack.i.l.s16 %v2239
      %v2891 = vunpack.i.h.s16 %v2239
      %v2892 = vunpack.i.l.s16 %v2241
      %v2893 = vunpack.i.h.s16 %v2241
      %v2894 = vunpack.i.l.s16 %v2265
      %v2895 = vunpack.i.h.s16 %v2265
      %v2896 = vunpack.i.l.s16 %v2279
      %v2897 = vunpack.i.h.s16 %v2279
      %v2898 = vunpack.i.l.s16 %v2287
      %v2899 = vunpack.i.h.s16 %v2287
      %v2900 = vunpack.i.l.s16 %v2289
      %v2901 = vunpack.i.h.s16 %v2289
      %v2902 = vunpack.i.l.s16 %v2272
      %v2903 = vunpack.i.h.s16 %v2272
      %v2904 = vunpack.i.l.s16 %v2286
      %v2905 = vunpack.i.h.s16 %v2286
      %v2906 = vunpack.i.l.s16 %v2288
      %v2907 = vunpack.i.h.s16 %v2288
      %v2908 = vunpack.i.l.s16 %v2290
      %v2909 = vunpack.i.h.s16 %v2290
      %v2910 = vunpack.i.l.s16 %v2314
      %v2911 = vunpack.i.h.s16 %v2314
      %v2912 = vunpack.i.l.s16 %v2328
      %v2913 = vunpack.i.h.s16 %v2328
      %v2914 = vunpack.i.l.s16 %v2336
      %v2915 = vunpack.i.h.s16 %v2336
      %v2916 = vunpack.i.l.s16 %v2338
      %v2917 = vunpack.i.h.s16 %v2338
      %v2918 = vunpack.i.l.s16 %v2321
      %v2919 = vunpack.i.h.s16 %v2321
      %v2920 = vunpack.i.l.s16 %v2335
      %v2921 = vunpack.i.h.s16 %v2335
      %v2922 = vunpack.i.l.s16 %v2337
      %v2923 = vunpack.i.h.s16 %v2337
      %v2924 = vunpack.i.l.s16 %v2339
      %v2925 = vunpack.i.h.s16 %v2339
      %v2926 = vunpack.i.l.s16 %v2363
      %v2927 = vunpack.i.h.s16 %v2363
      %v2928 = vunpack.i.l.s16 %v2377
      %v2929 = vunpack.i.h.s16 %v2377
      %v2930 = vunpack.i.l.s16 %v2385
      %v2931 = vunpack.i.h.s16 %v2385
      %v2932 = vunpack.i.l.s16 %v2387
      %v2933 = vunpack.i.h.s16 %v2387
      %v2934 = vunpack.i.l.s16 %v2370
      %v2935 = vunpack.i.h.s16 %v2370
      %v2936 = vunpack.i.l.s16 %v2384
      %v2937 = vunpack.i.h.s16 %v2384
      %v2938 = vunpack.i.l.s16 %v2386
      %v2939 = vunpack.i.h.s16 %v2386
      %v2940 = vunpack.i.l.s16 %v2388
      %v2941 = vunpack.i.h.s16 %v2388
      %v2942 = vunpack.i.l.s16 %v2412
      %v2943 = vunpack.i.h.s16 %v2412
      %v2944 = vunpack.i.l.s16 %v2426
      %v2945 = vunpack.i.h.s16 %v2426
      %v2946 = vunpack.i.l.s16 %v2434
      %v2947 = vunpack.i.h.s16 %v2434
      %v2948 = vunpack.i.l.s16 %v2436
      %v2949 = vunpack.i.h.s16 %v2436
      %v2950 = vunpack.i.l.s16 %v2419
      %v2951 = vunpack.i.h.s16 %v2419
      %v2952 = vunpack.i.l.s16 %v2433
      %v2953 = vunpack.i.h.s16 %v2433
      %v2954 = vunpack.i.l.s16 %v2435
      %v2955 = vunpack.i.h.s16 %v2435
      %v2956 = vunpack.i.l.s16 %v2437
      %v2957 = vunpack.i.h.s16 %v2437
      %v2958 = vunpack.i.l.s16 %v2461
      %v2959 = vunpack.i.h.s16 %v2461
      %v2960 = vunpack.i.l.s16 %v2475
      %v2961 = vunpack.i.h.s16 %v2475
      %v2962 = vunpack.i.l.s16 %v2483
      %v2963 = vunpack.i.h.s16 %v2483
      %v2964 = vunpack.i.l.s16 %v2485
      %v2965 = vunpack.i.h.s16 %v2485
      %v2966 = vunpack.i.l.s16 %v2468
      %v2967 = vunpack.i.h.s16 %v2468
      %v2968 = vunpack.i.l.s16 %v2482
      %v2969 = vunpack.i.h.s16 %v2482
      %v2970 = vunpack.i.l.s16 %v2484
      %v2971 = vunpack.i.h.s16 %v2484
      %v2972 = vunpack.i.l.s16 %v2486
      %v2973 = vunpack.i.h.s16 %v2486
      %v2974 = vunpack.i.l.s16 %v2510
      %v2975 = vunpack.i.h.s16 %v2510
      %v2976 = vunpack.i.l.s16 %v2524
      %v2977 = vunpack.i.h.s16 %v2524
      %v2978 = vunpack.i.l.s16 %v2532
      %v2979 = vunpack.i.h.s16 %v2532
      %v2980 = vunpack.i.l.s16 %v2534
      %v2981 = vunpack.i.h.s16 %v2534
      %v2982 = vunpack.i.l.s16 %v2517
      %v2983 = vunpack.i.h.s16 %v2517
      %v2984 = vunpack.i.l.s16 %v2531
      %v2985 = vunpack.i.h.s16 %v2531
      %v2986 = vunpack.i.l.s16 %v2533
      %v2987 = vunpack.i.h.s16 %v2533
      %v2988 = vunpack.i.l.s16 %v2535
      %v2989 = vunpack.i.h.s16 %v2535
      %v2990 = vunpack.i.l.s16 %v2559
      %v2991 = vunpack.i.h.s16 %v2559
      %v2992 = vunpack.i.l.s16 %v2573
      %v2993 = vunpack.i.h.s16 %v2573
      %v2994 = vunpack.i.l.s16 %v2581
      %v2995 = vunpack.i.h.s16 %v2581
      %v2996 = vunpack.i.l.s16 %v2583
      %v2997 = vunpack.i.h.s16 %v2583
      %v2998 = vunpack.i.l.s16 %v2566
      %v2999 = vunpack.i.h.s16 %v2566
      %v3000 = vunpack.i.l.s16 %v2580
      %v3001 = vunpack.i.h.s16 %v2580
      %v3002 = vunpack.i.l.s16 %v2582
      %v3003 = vunpack.i.h.s16 %v2582
      %v3004 = vunpack.i.l.s16 %v2584
      %v3005 = vunpack.i.h.s16 %v2584
      %v3006 = vunpack.i.l.s16 %v2608
      %v3007 = vunpack.i.h.s16 %v2608
      %v3008 = vunpack.i.l.s16 %v2622
      %v3009 = vunpack.i.h.s16 %v2622
      %v3010 = vunpack.i.l.s16 %v2630
      %v3011 = vunpack.i.h.s16 %v2630
      %v3012 = vunpack.i.l.s16 %v2632
      %v3013 = vunpack.i.h.s16 %v2632
      %v3014 = vunpack.i.l.s16 %v2615
      %v3015 = vunpack.i.h.s16 %v2615
      %v3016 = vunpack.i.l.s16 %v2629
      %v3017 = vunpack.i.h.s16 %v2629
      %v3018 = vunpack.i.l.s16 %v2631
      %v3019 = vunpack.i.h.s16 %v2631
      %v3020 = vunpack.i.l.s16 %v2633
      %v3021 = vunpack.i.h.s16 %v2633
      %v3022 = vunpack.i.l.s16 %v2657
      %v3023 = vunpack.i.h.s16 %v2657
      %v3024 = vunpack.i.l.s16 %v2671
      %v3025 = vunpack.i.h.s16 %v2671
      %v3026 = vunpack.i.l.s16 %v2679
      %v3027 = vunpack.i.h.s16 %v2679
      %v3028 = vunpack.i.l.s16 %v2681
      %v3029 = vunpack.i.h.s16 %v2681
      %v3030 = vunpack.i.l.s16 %v2664
      %v3031 = vunpack.i.h.s16 %v2664
      %v3032 = vunpack.i.l.s16 %v2678
      %v3033 = vunpack.i.h.s16 %v2678
      %v3034 = vunpack.i.l.s16 %v2680
      %v3035 = vunpack.i.h.s16 %v2680
      %v3036 = vunpack.i.l.s16 %v2682
      %v3037 = vunpack.i.h.s16 %v2682
      %v3038 = vunpack.i.l.s16 %v2706
      %v3039 = vunpack.i.h.s16 %v2706
      %v3040 = vunpack.i.l.s16 %v2720
      %v3041 = vunpack.i.h.s16 %v2720
      %v3042 = vunpack.i.l.s16 %v2728
      %v3043 = vunpack.i.h.s16 %v2728
      %v3044 = vunpack.i.l.s16 %v2730
      %v3045 = vunpack.i.h.s16 %v2730
      %v3046 = vunpack.i.l.s16 %v2713
      %v3047 = vunpack.i.h.s16 %v2713
      %v3048 = vunpack.i.l.s16 %v2727
      %v3049 = vunpack.i.h.s16 %v2727
      %v3050 = vunpack.i.l.s16 %v2729
      %v3051 = vunpack.i.h.s16 %v2729
      %v3052 = vunpack.i.l.s16 %v2731
      %v3053 = vunpack.i.h.s16 %v2731
      %v3054 = vunpack.i.l.s16 %v2755
      %v3055 = vunpack.i.h.s16 %v2755
      %v3056 = vunpack.i.l.s16 %v2769
      %v3057 = vunpack.i.h.s16 %v2769
      %v3058 = vunpack.i.l.s16 %v2777
      %v3059 = vunpack.i.h.s16 %v2777
      %v3060 = vunpack.i.l.s16 %v2779
      %v3061 = vunpack.i.h.s16 %v2779
      %v3062 = vunpack.i.l.s16 %v2762
      %v3063 = vunpack.i.h.s16 %v2762
      %v3064 = vunpack.i.l.s16 %v2776
      %v3065 = vunpack.i.h.s16 %v2776
      %v3066 = vunpack.i.l.s16 %v2778
      %v3067 = vunpack.i.h.s16 %v2778
      %v3068 = vunpack.i.l.s16 %v2780
      %v3069 = vunpack.i.h.s16 %v2780
      %v3070 = vunpack.i.l.s16 %v2804
      %v3071 = vunpack.i.h.s16 %v2804
      %v3072 = vunpack.i.l.s16 %v2818
      %v3073 = vunpack.i.h.s16 %v2818
      %v3074 = vunpack.i.l.s16 %v2826
      %v3075 = vunpack.i.h.s16 %v2826
      %v3076 = vunpack.i.l.s16 %v2828
      %v3077 = vunpack.i.h.s16 %v2828
      %v3078 = vunpack.i.l.s16 %v2811
      %v3079 = vunpack.i.h.s16 %v2811
      %v3080 = vunpack.i.l.s16 %v2825
      %v3081 = vunpack.i.h.s16 %v2825
      %v3082 = vunpack.i.l.s16 %v2827
      %v3083 = vunpack.i.h.s16 %v2827
      %v3084 = vunpack.i.l.s16 %v2829
      %v3085 = vunpack.i.h.s16 %v2829
      %v3086 = vpack.i.b16 %v2830, %v2830
      %v3087 = vpack.i.b16 %v2831, %v2831
      %v3088 = vpack.i.b16 %v2832, %v2832
      %v3089 = vpack.i.b16 %v2833, %v2833
      %v3090 = vpack.i.b16 %v2834, %v2834
      %v3091 = vpack.i.b16 %v2835, %v2835
      %v3092 = vpack.i.b16 %v2836, %v2836
      %v3093 = vpack.i.b16 %v2837, %v2837
      %v3094 = vpack.i.b16 %v2838, %v2838
      %v3095 = vpack.i.b16 %v2839, %v2839
      %v3096 = vpack.i.b16 %v2840, %v2840
      %v3097 = vpack.i.b16 %v2841, %v2841
      %v3098 = vpack.i.b16 %v2842, %v2842
      %v3099 = vpack.i.b16 %v2843, %v2843
      %v3100 = vpack.i.b16 %v2844, %v2844
      %v3101 = vpack.i.b16 %v2845, %v2845
      %v3102 = vpack.i.b16 %v2846, %v2846
      %v3103 = vpack.i.b16 %v2847, %v2847
      %v3104 = vpack.i.b16 %v2848, %v2848
      %v3105 = vpack.i.b16 %v2849, %v2849
      %v3106 = vpack.i.b16 %v2850, %v2850
      %v3107 = vpack.i.b16 %v2851, %v2851
      %v3108 = vpack.i.b16 %v2852, %v2852
      %v3109 = vpack.i.b16 %v2853, %v2853
      %v3110 = vpack.i.b16 %v2854, %v2854
      %v3111 = vpack.i.b16 %v2855, %v2855
      %v3112 = vpack.i.b16 %v2856, %v2856
      %v3113 = vpack.i.b16 %v2857, %v2857
      %v3114 = vpack.i.b16 %v2858, %v2858
      %v3115 = vpack.i.b16 %v2859, %v2859
      %v3116 = vpack.i.b16 %v2860, %v2860
      %v3117 = vpack.i.b16 %v2861, %v2861
      %v3118 = vpack.i.b16 %v2862, %v2862
      %v3119 = vpack.i.b16 %v2863, %v2863
      %v3120 = vpack.i.b16 %v2864, %v2864
      %v3121 = vpack.i.b16 %v2865, %v2865
      %v3122 = vpack.i.b16 %v2866, %v2866
      %v3123 = vpack.i.b16 %v2867, %v2867
      %v3124 = vpack.i.b16 %v2868, %v2868
      %v3125 = vpack.i.b16 %v2869, %v2869
      %v3126 = vpack.i.b16 %v2870, %v2870
      %v3127 = vpack.i.b16 %v2871, %v2871
      %v3128 = vpack.i.b16 %v2872, %v2872
      %v3129 = vpack.i.b16 %v2873, %v2873
      %v3130 = vpack.i.b16 %v2874, %v2874
      %v3131 = vpack.i.b16 %v2875, %v2875
      %v3132 = vpack.i.b16 %v2876, %v2876
      %v3133 = vpack.i.b16 %v2877, %v2877
      %v3134 = vpack.i.b16 %v2878, %v2878
      %v3135 = vpack.i.b16 %v2879, %v2879
      %v3136 = vpack.i.b16 %v2880, %v2880
      %v3137 = vpack.i.b16 %v2881, %v2881
      %v3138 = vpack.i.b16 %v2882, %v2882
      %v3139 = vpack.i.b16 %v2883, %v2883
      %v3140 = vpack.i.b16 %v2884, %v2884
      %v3141 = vpack.i.b16 %v2885, %v2885
      %v3142 = vpack.i.b16 %v2886, %v2886
      %v3143 = vpack.i.b16 %v2887, %v2887
      %v3144 = vpack.i.b16 %v2888, %v2888
      %v3145 = vpack.i.b16 %v2889, %v2889
      %v3146 = vpack.i.b16 %v2890, %v2890
      %v3147 = vpack.i.b16 %v2891, %v2891
      %v3148 = vpack.i.b16 %v2892, %v2892
      %v3149 = vpack.i.b16 %v2893, %v2893
      %v3150 = vpack.i.b16 %v2894, %v2894
      %v3151 = vpack.i.b16 %v2895, %v2895
      %v3152 = vpack.i.b16 %v2896, %v2896
      %v3153 = vpack.i.b16 %v2897, %v2897
      %v3154 = vpack.i.b16 %v2898, %v2898
      %v3155 = vpack.i.b16 %v2899, %v2899
      %v3156 = vpack.i.b16 %v2900, %v2900
      %v3157 = vpack.i.b16 %v2901, %v2901
      %v3158 = vpack.i.b16 %v2902, %v2902
      %v3159 = vpack.i.b16 %v2903, %v2903
      %v3160 = vpack.i.b16 %v2904, %v2904
      %v3161 = vpack.i.b16 %v2905, %v2905
      %v3162 = vpack.i.b16 %v2906, %v2906
      %v3163 = vpack.i.b16 %v2907, %v2907
      %v3164 = vpack.i.b16 %v2908, %v2908
      %v3165 = vpack.i.b16 %v2909, %v2909
      %v3166 = vpack.i.b16 %v2910, %v2910
      %v3167 = vpack.i.b16 %v2911, %v2911
      %v3168 = vpack.i.b16 %v2912, %v2912
      %v3169 = vpack.i.b16 %v2913, %v2913
      %v3170 = vpack.i.b16 %v2914, %v2914
      %v3171 = vpack.i.b16 %v2915, %v2915
      %v3172 = vpack.i.b16 %v2916, %v2916
      %v3173 = vpack.i.b16 %v2917, %v2917
      %v3174 = vpack.i.b16 %v2918, %v2918
      %v3175 = vpack.i.b16 %v2919, %v2919
      %v3176 = vpack.i.b16 %v2920, %v2920
      %v3177 = vpack.i.b16 %v2921, %v2921
      %v3178 = vpack.i.b16 %v2922, %v2922
      %v3179 = vpack.i.b16 %v2923, %v2923
      %v3180 = vpack.i.b16 %v2924, %v2924
      %v3181 = vpack.i.b16 %v2925, %v2925
      %v3182 = vpack.i.b16 %v2926, %v2926
      %v3183 = vpack.i.b16 %v2927, %v2927
      %v3184 = vpack.i.b16 %v2928, %v2928
      %v3185 = vpack.i.b16 %v2929, %v2929
      %v3186 = vpack.i.b16 %v2930, %v2930
      %v3187 = vpack.i.b16 %v2931, %v2931
      %v3188 = vpack.i.b16 %v2932, %v2932
      %v3189 = vpack.i.b16 %v2933, %v2933
      %v3190 = vpack.i.b16 %v2934, %v2934
      %v3191 = vpack.i.b16 %v2935, %v2935
      %v3192 = vpack.i.b16 %v2936, %v2936
      %v3193 = vpack.i.b16 %v2937, %v2937
      %v3194 = vpack.i.b16 %v2938, %v2938
      %v3195 = vpack.i.b16 %v2939, %v2939
      %v3196 = vpack.i.b16 %v2940, %v2940
      %v3197 = vpack.i.b16 %v2941, %v2941
      %v3198 = vpack.i.b16 %v2942, %v2942
      %v3199 = vpack.i.b16 %v2943, %v2943
      %v3200 = vpack.i.b16 %v2944, %v2944
      %v3201 = vpack.i.b16 %v2945, %v2945
      %v3202 = vpack.i.b16 %v2946, %v2946
      %v3203 = vpack.i.b16 %v2947, %v2947
      %v3204 = vpack.i.b16 %v2948, %v2948
      %v3205 = vpack.i.b16 %v2949, %v2949
      %v3206 = vpack.i.b16 %v2950, %v2950
      %v3207 = vpack.i.b16 %v2951, %v2951
      %v3208 = vpack.i.b16 %v2952, %v2952
      %v3209 = vpack.i.b16 %v2953, %v2953
      %v3210 = vpack.i.b16 %v2954, %v2954
      %v3211 = vpack.i.b16 %v2955, %v2955
      %v3212 = vpack.i.b16 %v2956, %v2956
      %v3213 = vpack.i.b16 %v2957, %v2957
      %v3214 = vpack.i.b16 %v2958, %v2958
      %v3215 = vpack.i.b16 %v2959, %v2959
      %v3216 = vpack.i.b16 %v2960, %v2960
      %v3217 = vpack.i.b16 %v2961, %v2961
      %v3218 = vpack.i.b16 %v2962, %v2962
      %v3219 = vpack.i.b16 %v2963, %v2963
      %v3220 = vpack.i.b16 %v2964, %v2964
      %v3221 = vpack.i.b16 %v2965, %v2965
      %v3222 = vpack.i.b16 %v2966, %v2966
      %v3223 = vpack.i.b16 %v2967, %v2967
      %v3224 = vpack.i.b16 %v2968, %v2968
      %v3225 = vpack.i.b16 %v2969, %v2969
      %v3226 = vpack.i.b16 %v2970, %v2970
      %v3227 = vpack.i.b16 %v2971, %v2971
      %v3228 = vpack.i.b16 %v2972, %v2972
      %v3229 = vpack.i.b16 %v2973, %v2973
      %v3230 = vpack.i.b16 %v2974, %v2974
      %v3231 = vpack.i.b16 %v2975, %v2975
      %v3232 = vpack.i.b16 %v2976, %v2976
      %v3233 = vpack.i.b16 %v2977, %v2977
      %v3234 = vpack.i.b16 %v2978, %v2978
      %v3235 = vpack.i.b16 %v2979, %v2979
      %v3236 = vpack.i.b16 %v2980, %v2980
      %v3237 = vpack.i.b16 %v2981, %v2981
      %v3238 = vpack.i.b16 %v2982, %v2982
      %v3239 = vpack.i.b16 %v2983, %v2983
      %v3240 = vpack.i.b16 %v2984, %v2984
      %v3241 = vpack.i.b16 %v2985, %v2985
      %v3242 = vpack.i.b16 %v2986, %v2986
      %v3243 = vpack.i.b16 %v2987, %v2987
      %v3244 = vpack.i.b16 %v2988, %v2988
      %v3245 = vpack.i.b16 %v2989, %v2989
      %v3246 = vpack.i.b16 %v2990, %v2990
      %v3247 = vpack.i.b16 %v2991, %v2991
      %v3248 = vpack.i.b16 %v2992, %v2992
      %v3249 = vpack.i.b16 %v2993, %v2993
      %v3250 = vpack.i.b16 %v2994, %v2994
      %v3251 = vpack.i.b16 %v2995, %v2995
      %v3252 = vpack.i.b16 %v2996, %v2996
      %v3253 = vpack.i.b16 %v2997, %v2997
      %v3254 = vpack.i.b16 %v2998, %v2998
      %v3255 = vpack.i.b16 %v2999, %v2999
      %v3256 = vpack.i.b16 %v3000, %v3000
      %v3257 = vpack.i.b16 %v3001, %v3001
      %v3258 = vpack.i.b16 %v3002, %v3002
      %v3259 = vpack.i.b16 %v3003, %v3003
      %v3260 = vpack.i.b16 %v3004, %v3004
      %v3261 = vpack.i.b16 %v3005, %v3005
      %v3262 = vpack.i.b16 %v3006, %v3006
      %v3263 = vpack.i.b16 %v3007, %v3007
      %v3264 = vpack.i.b16 %v3008, %v3008
      %v3265 = vpack.i.b16 %v3009, %v3009
      %v3266 = vpack.i.b16 %v3010, %v3010
      %v3267 = vpack.i.b16 %v3011, %v3011
      %v3268 = vpack.i.b16 %v3012, %v3012
      %v3269 = vpack.i.b16 %v3013, %v3013
      %v3270 = vpack.i.b16 %v3014, %v3014
      %v3271 = vpack.i.b16 %v3015, %v3015
      %v3272 = vpack.i.b16 %v3016, %v3016
      %v3273 = vpack.i.b16 %v3017, %v3017
      %v3274 = vpack.i.b16 %v3018, %v3018
      %v3275 = vpack.i.b16 %v3019, %v3019
      %v3276 = vpack.i.b16 %v3020, %v3020
      %v3277 = vpack.i.b16 %v3021, %v3021
      %v3278 = vpack.i.b16 %v3022, %v3022
      %v3279 = vpack.i.b16 %v3023, %v3023
      %v3280 = vpack.i.b16 %v3024, %v3024
      %v3281 = vpack.i.b16 %v3025, %v3025
      %v3282 = vpack.i.b16 %v3026, %v3026
      %v3283 = vpack.i.b16 %v3027, %v3027
      %v3284 = vpack.i.b16 %v3028, %v3028
      %v3285 = vpack.i.b16 %v3029, %v3029
      %v3286 = vpack.i.b16 %v3030, %v3030
      %v3287 = vpack.i.b16 %v3031, %v3031
      %v3288 = vpack.i.b16 %v3032, %v3032
      %v3289 = vpack.i.b16 %v3033, %v3033
      %v3290 = vpack.i.b16 %v3034, %v3034
      %v3291 = vpack.i.b16 %v3035, %v3035
      %v3292 = vpack.i.b16 %v3036, %v3036
      %v3293 = vpack.i.b16 %v3037, %v3037
      %v3294 = vpack.i.b16 %v3038, %v3038
      %v3295 = vpack.i.b16 %v3039, %v3039
      %v3296 = vpack.i.b16 %v3040, %v3040
      %v3297 = vpack.i.b16 %v3041, %v3041
      %v3298 = vpack.i.b16 %v3042, %v3042
      %v3299 = vpack.i.b16 %v3043, %v3043
      %v3300 = vpack.i.b16 %v3044, %v3044
      %v3301 = vpack.i.b16 %v3045, %v3045
      %v3302 = vpack.i.b16 %v3046, %v3046
      %v3303 = vpack.i.b16 %v3047, %v3047
      %v3304 = vpack.i.b16 %v3048, %v3048
      %v3305 = vpack.i.b16 %v3049, %v3049
      %v3306 = vpack.i.b16 %v3050, %v3050
      %v3307 = vpack.i.b16 %v3051, %v3051
      %v3308 = vpack.i.b16 %v3052, %v3052
      %v3309 = vpack.i.b16 %v3053, %v3053
      %v3310 = vpack.i.b16 %v3054, %v3054
      %v3311 = vpack.i.b16 %v3055, %v3055
      %v3312 = vpack.i.b16 %v3056, %v3056
      %v3313 = vpack.i.b16 %v3057, %v3057
      %v3314 = vpack.i.b16 %v3058, %v3058
      %v3315 = vpack.i.b16 %v3059, %v3059
      %v3316 = vpack.i.b16 %v3060, %v3060
      %v3317 = vpack.i.b16 %v3061, %v3061
      %v3318 = vpack.i.b16 %v3062, %v3062
      %v3319 = vpack.i.b16 %v3063, %v3063
      %v3320 = vpack.i.b16 %v3064, %v3064
      %v3321 = vpack.i.b16 %v3065, %v3065
      %v3322 = vpack.i.b16 %v3066, %v3066
      %v3323 = vpack.i.b16 %v3067, %v3067
      %v3324 = vpack.i.b16 %v3068, %v3068
      %v3325 = vpack.i.b16 %v3069, %v3069
      %v3326 = vpack.i.b16 %v3070, %v3070
      %v3327 = vpack.i.b16 %v3071, %v3071
      %v3328 = vpack.i.b16 %v3072, %v3072
      %v3329 = vpack.i.b16 %v3073, %v3073
      %v3330 = vpack.i.b16 %v3074, %v3074
      %v3331 = vpack.i.b16 %v3075, %v3075
      %v3332 = vpack.i.b16 %v3076, %v3076
      %v3333 = vpack.i.b16 %v3077, %v3077
      %v3334 = vpack.i.b16 %v3078, %v3078
      %v3335 = vpack.i.b16 %v3079, %v3079
      %v3336 = vpack.i.b16 %v3080, %v3080
      %v3337 = vpack.i.b16 %v3081, %v3081
      %v3338 = vpack.i.b16 %v3082, %v3082
      %v3339 = vpack.i.b16 %v3083, %v3083
      %v3340 = vpack.i.b16 %v3084, %v3084
      %v3341 = vpack.i.b16 %v3085, %v3085
      %v3342 = vlaneseq
      %v3343 = vshrl.u32 %v3342, 7
      %v3344 = vsub.s32 0, %v3343
      %v3345 = vrot.slane %v3086, %v3344
      %v3346 = vlaneseq
      %v3347 = vshrl.u32 %v3346, 7
      %v3348 = vsub.s32 0, %v3347
      %v3349 = vrot.slane %v3087, %v3348
      %v3350 = vlaneseq
      %v3351 = vshrl.u32 %v3350, 7
      %v3352 = vsub.s32 0, %v3351
      %v3353 = vrot.slane %v3088, %v3352
      %v3354 = vlaneseq
      %v3355 = vshrl.u32 %v3354, 7
      %v3356 = vsub.s32 0, %v3355
      %v3357 = vrot.slane %v3089, %v3356
      %v3358 = vlaneseq
      %v3359 = vshrl.u32 %v3358, 7
      %v3360 = vsub.s32 0, %v3359
      %v3361 = vrot.slane %v3090, %v3360
      %v3362 = vlaneseq
      %v3363 = vshrl.u32 %v3362, 7
      %v3364 = vsub.s32 0, %v3363
      %v3365 = vrot.slane %v3091, %v3364
      %v3366 = vlaneseq
      %v3367 = vshrl.u32 %v3366, 7
      %v3368 = vsub.s32 0, %v3367
      %v3369 = vrot.slane %v3092, %v3368
      %v3370 = vlaneseq
      %v3371 = vshrl.u32 %v3370, 7
      %v3372 = vsub.s32 0, %v3371
      %v3373 = vrot.slane %v3093, %v3372
      %v3374 = vlaneseq
      %v3375 = vshrl.u32 %v3374, 7
      %v3376 = vsub.s32 0, %v3375
      %v3377 = vrot.slane %v3094, %v3376
      %v3378 = vlaneseq
      %v3379 = vshrl.u32 %v3378, 7
      %v3380 = vsub.s32 0, %v3379
      %v3381 = vrot.slane %v3095, %v3380
      %v3382 = vlaneseq
      %v3383 = vshrl.u32 %v3382, 7
      %v3384 = vsub.s32 0, %v3383
      %v3385 = vrot.slane %v3096, %v3384
      %v3386 = vlaneseq
      %v3387 = vshrl.u32 %v3386, 7
      %v3388 = vsub.s32 0, %v3387
      %v3389 = vrot.slane %v3097, %v3388
      %v3390 = vlaneseq
      %v3391 = vshrl.u32 %v3390, 7
      %v3392 = vsub.s32 0, %v3391
      %v3393 = vrot.slane %v3098, %v3392
      %v3394 = vlaneseq
      %v3395 = vshrl.u32 %v3394, 7
      %v3396 = vsub.s32 0, %v3395
      %v3397 = vrot.slane %v3099, %v3396
      %v3398 = vlaneseq
      %v3399 = vshrl.u32 %v3398, 7
      %v3400 = vsub.s32 0, %v3399
      %v3401 = vrot.slane %v3100, %v3400
      %v3402 = vlaneseq
      %v3403 = vshrl.u32 %v3402, 7
      %v3404 = vsub.s32 0, %v3403
      %v3405 = vrot.slane %v3101, %v3404
      %v3406 = vlaneseq
      %v3407 = vshrl.u32 %v3406, 7
      %v3408 = vsub.s32 0, %v3407
      %v3409 = vrot.slane %v3102, %v3408
      %v3410 = vlaneseq
      %v3411 = vshrl.u32 %v3410, 7
      %v3412 = vsub.s32 0, %v3411
      %v3413 = vrot.slane %v3103, %v3412
      %v3414 = vlaneseq
      %v3415 = vshrl.u32 %v3414, 7
      %v3416 = vsub.s32 0, %v3415
      %v3417 = vrot.slane %v3104, %v3416
      %v3418 = vlaneseq
      %v3419 = vshrl.u32 %v3418, 7
      %v3420 = vsub.s32 0, %v3419
      %v3421 = vrot.slane %v3105, %v3420
      %v3422 = vlaneseq
      %v3423 = vshrl.u32 %v3422, 7
      %v3424 = vsub.s32 0, %v3423
      %v3425 = vrot.slane %v3106, %v3424
      %v3426 = vlaneseq
      %v3427 = vshrl.u32 %v3426, 7
      %v3428 = vsub.s32 0, %v3427
      %v3429 = vrot.slane %v3107, %v3428
      %v3430 = vlaneseq
      %v3431 = vshrl.u32 %v3430, 7
      %v3432 = vsub.s32 0, %v3431
      %v3433 = vrot.slane %v3108, %v3432
      %v3434 = vlaneseq
      %v3435 = vshrl.u32 %v3434, 7
      %v3436 = vsub.s32 0, %v3435
      %v3437 = vrot.slane %v3109, %v3436
      %v3438 = vlaneseq
      %v3439 = vshrl.u32 %v3438, 7
      %v3440 = vsub.s32 0, %v3439
      %v3441 = vrot.slane %v3110, %v3440
      %v3442 = vlaneseq
      %v3443 = vshrl.u32 %v3442, 7
      %v3444 = vsub.s32 0, %v3443
      %v3445 = vrot.slane %v3111, %v3444
      %v3446 = vlaneseq
      %v3447 = vshrl.u32 %v3446, 7
      %v3448 = vsub.s32 0, %v3447
      %v3449 = vrot.slane %v3112, %v3448
      %v3450 = vlaneseq
      %v3451 = vshrl.u32 %v3450, 7
      %v3452 = vsub.s32 0, %v3451
      %v3453 = vrot.slane %v3113, %v3452
      %v3454 = vlaneseq
      %v3455 = vshrl.u32 %v3454, 7
      %v3456 = vsub.s32 0, %v3455
      %v3457 = vrot.slane %v3114, %v3456
      %v3458 = vlaneseq
      %v3459 = vshrl.u32 %v3458, 7
      %v3460 = vsub.s32 0, %v3459
      %v3461 = vrot.slane %v3115, %v3460
      %v3462 = vlaneseq
      %v3463 = vshrl.u32 %v3462, 7
      %v3464 = vsub.s32 0, %v3463
      %v3465 = vrot.slane %v3116, %v3464
      %v3466 = vlaneseq
      %v3467 = vshrl.u32 %v3466, 7
      %v3468 = vsub.s32 0, %v3467
      %v3469 = vrot.slane %v3117, %v3468
      %v3470 = vlaneseq
      %v3471 = vshrl.u32 %v3470, 7
      %v3472 = vsub.s32 0, %v3471
      %v3473 = vrot.slane %v3118, %v3472
      %v3474 = vlaneseq
      %v3475 = vshrl.u32 %v3474, 7
      %v3476 = vsub.s32 0, %v3475
      %v3477 = vrot.slane %v3119, %v3476
      %v3478 = vlaneseq
      %v3479 = vshrl.u32 %v3478, 7
      %v3480 = vsub.s32 0, %v3479
      %v3481 = vrot.slane %v3120, %v3480
      %v3482 = vlaneseq
      %v3483 = vshrl.u32 %v3482, 7
      %v3484 = vsub.s32 0, %v3483
      %v3485 = vrot.slane %v3121, %v3484
      %v3486 = vlaneseq
      %v3487 = vshrl.u32 %v3486, 7
      %v3488 = vsub.s32 0, %v3487
      %v3489 = vrot.slane %v3122, %v3488
      %v3490 = vlaneseq
      %v3491 = vshrl.u32 %v3490, 7
      %v3492 = vsub.s32 0, %v3491
      %v3493 = vrot.slane %v3123, %v3492
      %v3494 = vlaneseq
      %v3495 = vshrl.u32 %v3494, 7
      %v3496 = vsub.s32 0, %v3495
      %v3497 = vrot.slane %v3124, %v3496
      %v3498 = vlaneseq
      %v3499 = vshrl.u32 %v3498, 7
      %v3500 = vsub.s32 0, %v3499
      %v3501 = vrot.slane %v3125, %v3500
      %v3502 = vlaneseq
      %v3503 = vshrl.u32 %v3502, 7
      %v3504 = vsub.s32 0, %v3503
      %v3505 = vrot.slane %v3126, %v3504
      %v3506 = vlaneseq
      %v3507 = vshrl.u32 %v3506, 7
      %v3508 = vsub.s32 0, %v3507
      %v3509 = vrot.slane %v3127, %v3508
      %v3510 = vlaneseq
      %v3511 = vshrl.u32 %v3510, 7
      %v3512 = vsub.s32 0, %v3511
      %v3513 = vrot.slane %v3128, %v3512
      %v3514 = vlaneseq
      %v3515 = vshrl.u32 %v3514, 7
      %v3516 = vsub.s32 0, %v3515
      %v3517 = vrot.slane %v3129, %v3516
      %v3518 = vlaneseq
      %v3519 = vshrl.u32 %v3518, 7
      %v3520 = vsub.s32 0, %v3519
      %v3521 = vrot.slane %v3130, %v3520
      %v3522 = vlaneseq
      %v3523 = vshrl.u32 %v3522, 7
      %v3524 = vsub.s32 0, %v3523
      %v3525 = vrot.slane %v3131, %v3524
      %v3526 = vlaneseq
      %v3527 = vshrl.u32 %v3526, 7
      %v3528 = vsub.s32 0, %v3527
      %v3529 = vrot.slane %v3132, %v3528
      %v3530 = vlaneseq
      %v3531 = vshrl.u32 %v3530, 7
      %v3532 = vsub.s32 0, %v3531
      %v3533 = vrot.slane %v3133, %v3532
      %v3534 = vlaneseq
      %v3535 = vshrl.u32 %v3534, 7
      %v3536 = vsub.s32 0, %v3535
      %v3537 = vrot.slane %v3134, %v3536
      %v3538 = vlaneseq
      %v3539 = vshrl.u32 %v3538, 7
      %v3540 = vsub.s32 0, %v3539
      %v3541 = vrot.slane %v3135, %v3540
      %v3542 = vlaneseq
      %v3543 = vshrl.u32 %v3542, 7
      %v3544 = vsub.s32 0, %v3543
      %v3545 = vrot.slane %v3136, %v3544
      %v3546 = vlaneseq
      %v3547 = vshrl.u32 %v3546, 7
      %v3548 = vsub.s32 0, %v3547
      %v3549 = vrot.slane %v3137, %v3548
      %v3550 = vlaneseq
      %v3551 = vshrl.u32 %v3550, 7
      %v3552 = vsub.s32 0, %v3551
      %v3553 = vrot.slane %v3138, %v3552
      %v3554 = vlaneseq
      %v3555 = vshrl.u32 %v3554, 7
      %v3556 = vsub.s32 0, %v3555
      %v3557 = vrot.slane %v3139, %v3556
      %v3558 = vlaneseq
      %v3559 = vshrl.u32 %v3558, 7
      %v3560 = vsub.s32 0, %v3559
      %v3561 = vrot.slane %v3140, %v3560
      %v3562 = vlaneseq
      %v3563 = vshrl.u32 %v3562, 7
      %v3564 = vsub.s32 0, %v3563
      %v3565 = vrot.slane %v3141, %v3564
      %v3566 = vlaneseq
      %v3567 = vshrl.u32 %v3566, 7
      %v3568 = vsub.s32 0, %v3567
      %v3569 = vrot.slane %v3142, %v3568
      %v3570 = vlaneseq
      %v3571 = vshrl.u32 %v3570, 7
      %v3572 = vsub.s32 0, %v3571
      %v3573 = vrot.slane %v3143, %v3572
      %v3574 = vlaneseq
      %v3575 = vshrl.u32 %v3574, 7
      %v3576 = vsub.s32 0, %v3575
      %v3577 = vrot.slane %v3144, %v3576
      %v3578 = vlaneseq
      %v3579 = vshrl.u32 %v3578, 7
      %v3580 = vsub.s32 0, %v3579
      %v3581 = vrot.slane %v3145, %v3580
      %v3582 = vlaneseq
      %v3583 = vshrl.u32 %v3582, 7
      %v3584 = vsub.s32 0, %v3583
      %v3585 = vrot.slane %v3146, %v3584
      %v3586 = vlaneseq
      %v3587 = vshrl.u32 %v3586, 7
      %v3588 = vsub.s32 0, %v3587
      %v3589 = vrot.slane %v3147, %v3588
      %v3590 = vlaneseq
      %v3591 = vshrl.u32 %v3590, 7
      %v3592 = vsub.s32 0, %v3591
      %v3593 = vrot.slane %v3148, %v3592
      %v3594 = vlaneseq
      %v3595 = vshrl.u32 %v3594, 7
      %v3596 = vsub.s32 0, %v3595
      %v3597 = vrot.slane %v3149, %v3596
      %v3598 = vlaneseq
      %v3599 = vshrl.u32 %v3598, 7
      %v3600 = vsub.s32 0, %v3599
      %v3601 = vrot.slane %v3150, %v3600
      %v3602 = vlaneseq
      %v3603 = vshrl.u32 %v3602, 7
      %v3604 = vsub.s32 0, %v3603
      %v3605 = vrot.slane %v3151, %v3604
      %v3606 = vlaneseq
      %v3607 = vshrl.u32 %v3606, 7
      %v3608 = vsub.s32 0, %v3607
      %v3609 = vrot.slane %v3152, %v3608
      %v3610 = vlaneseq
      %v3611 = vshrl.u32 %v3610, 7
      %v3612 = vsub.s32 0, %v3611
      %v3613 = vrot.slane %v3153, %v3612
      %v3614 = vlaneseq
      %v3615 = vshrl.u32 %v3614, 7
      %v3616 = vsub.s32 0, %v3615
      %v3617 = vrot.slane %v3154, %v3616
      %v3618 = vlaneseq
      %v3619 = vshrl.u32 %v3618, 7
      %v3620 = vsub.s32 0, %v3619
      %v3621 = vrot.slane %v3155, %v3620
      %v3622 = vlaneseq
      %v3623 = vshrl.u32 %v3622, 7
      %v3624 = vsub.s32 0, %v3623
      %v3625 = vrot.slane %v3156, %v3624
      %v3626 = vlaneseq
      %v3627 = vshrl.u32 %v3626, 7
      %v3628 = vsub.s32 0, %v3627
      %v3629 = vrot.slane %v3157, %v3628
      %v3630 = vlaneseq
      %v3631 = vshrl.u32 %v3630, 7
      %v3632 = vsub.s32 0, %v3631
      %v3633 = vrot.slane %v3158, %v3632
      %v3634 = vlaneseq
      %v3635 = vshrl.u32 %v3634, 7
      %v3636 = vsub.s32 0, %v3635
      %v3637 = vrot.slane %v3159, %v3636
      %v3638 = vlaneseq
      %v3639 = vshrl.u32 %v3638, 7
      %v3640 = vsub.s32 0, %v3639
      %v3641 = vrot.slane %v3160, %v3640
      %v3642 = vlaneseq
      %v3643 = vshrl.u32 %v3642, 7
      %v3644 = vsub.s32 0, %v3643
      %v3645 = vrot.slane %v3161, %v3644
      %v3646 = vlaneseq
      %v3647 = vshrl.u32 %v3646, 7
      %v3648 = vsub.s32 0, %v3647
      %v3649 = vrot.slane %v3162, %v3648
      %v3650 = vlaneseq
      %v3651 = vshrl.u32 %v3650, 7
      %v3652 = vsub.s32 0, %v3651
      %v3653 = vrot.slane %v3163, %v3652
      %v3654 = vlaneseq
      %v3655 = vshrl.u32 %v3654, 7
      %v3656 = vsub.s32 0, %v3655
      %v3657 = vrot.slane %v3164, %v3656
      %v3658 = vlaneseq
      %v3659 = vshrl.u32 %v3658, 7
      %v3660 = vsub.s32 0, %v3659
      %v3661 = vrot.slane %v3165, %v3660
      %v3662 = vlaneseq
      %v3663 = vshrl.u32 %v3662, 7
      %v3664 = vsub.s32 0, %v3663
      %v3665 = vrot.slane %v3166, %v3664
      %v3666 = vlaneseq
      %v3667 = vshrl.u32 %v3666, 7
      %v3668 = vsub.s32 0, %v3667
      %v3669 = vrot.slane %v3167, %v3668
      %v3670 = vlaneseq
      %v3671 = vshrl.u32 %v3670, 7
      %v3672 = vsub.s32 0, %v3671
      %v3673 = vrot.slane %v3168, %v3672
      %v3674 = vlaneseq
      %v3675 = vshrl.u32 %v3674, 7
      %v3676 = vsub.s32 0, %v3675
      %v3677 = vrot.slane %v3169, %v3676
      %v3678 = vlaneseq
      %v3679 = vshrl.u32 %v3678, 7
      %v3680 = vsub.s32 0, %v3679
      %v3681 = vrot.slane %v3170, %v3680
      %v3682 = vlaneseq
      %v3683 = vshrl.u32 %v3682, 7
      %v3684 = vsub.s32 0, %v3683
      %v3685 = vrot.slane %v3171, %v3684
      %v3686 = vlaneseq
      %v3687 = vshrl.u32 %v3686, 7
      %v3688 = vsub.s32 0, %v3687
      %v3689 = vrot.slane %v3172, %v3688
      %v3690 = vlaneseq
      %v3691 = vshrl.u32 %v3690, 7
      %v3692 = vsub.s32 0, %v3691
      %v3693 = vrot.slane %v3173, %v3692
      %v3694 = vlaneseq
      %v3695 = vshrl.u32 %v3694, 7
      %v3696 = vsub.s32 0, %v3695
      %v3697 = vrot.slane %v3174, %v3696
      %v3698 = vlaneseq
      %v3699 = vshrl.u32 %v3698, 7
      %v3700 = vsub.s32 0, %v3699
      %v3701 = vrot.slane %v3175, %v3700
      %v3702 = vlaneseq
      %v3703 = vshrl.u32 %v3702, 7
      %v3704 = vsub.s32 0, %v3703
      %v3705 = vrot.slane %v3176, %v3704
      %v3706 = vlaneseq
      %v3707 = vshrl.u32 %v3706, 7
      %v3708 = vsub.s32 0, %v3707
      %v3709 = vrot.slane %v3177, %v3708
      %v3710 = vlaneseq
      %v3711 = vshrl.u32 %v3710, 7
      %v3712 = vsub.s32 0, %v3711
      %v3713 = vrot.slane %v3178, %v3712
      %v3714 = vlaneseq
      %v3715 = vshrl.u32 %v3714, 7
      %v3716 = vsub.s32 0, %v3715
      %v3717 = vrot.slane %v3179, %v3716
      %v3718 = vlaneseq
      %v3719 = vshrl.u32 %v3718, 7
      %v3720 = vsub.s32 0, %v3719
      %v3721 = vrot.slane %v3180, %v3720
      %v3722 = vlaneseq
      %v3723 = vshrl.u32 %v3722, 7
      %v3724 = vsub.s32 0, %v3723
      %v3725 = vrot.slane %v3181, %v3724
      %v3726 = vlaneseq
      %v3727 = vshrl.u32 %v3726, 7
      %v3728 = vsub.s32 0, %v3727
      %v3729 = vrot.slane %v3182, %v3728
      %v3730 = vlaneseq
      %v3731 = vshrl.u32 %v3730, 7
      %v3732 = vsub.s32 0, %v3731
      %v3733 = vrot.slane %v3183, %v3732
      %v3734 = vlaneseq
      %v3735 = vshrl.u32 %v3734, 7
      %v3736 = vsub.s32 0, %v3735
      %v3737 = vrot.slane %v3184, %v3736
      %v3738 = vlaneseq
      %v3739 = vshrl.u32 %v3738, 7
      %v3740 = vsub.s32 0, %v3739
      %v3741 = vrot.slane %v3185, %v3740
      %v3742 = vlaneseq
      %v3743 = vshrl.u32 %v3742, 7
      %v3744 = vsub.s32 0, %v3743
      %v3745 = vrot.slane %v3186, %v3744
      %v3746 = vlaneseq
      %v3747 = vshrl.u32 %v3746, 7
      %v3748 = vsub.s32 0, %v3747
      %v3749 = vrot.slane %v3187, %v3748
      %v3750 = vlaneseq
      %v3751 = vshrl.u32 %v3750, 7
      %v3752 = vsub.s32 0, %v3751
      %v3753 = vrot.slane %v3188, %v3752
      %v3754 = vlaneseq
      %v3755 = vshrl.u32 %v3754, 7
      %v3756 = vsub.s32 0, %v3755
      %v3757 = vrot.slane %v3189, %v3756
      %v3758 = vlaneseq
      %v3759 = vshrl.u32 %v3758, 7
      %v3760 = vsub.s32 0, %v3759
      %v3761 = vrot.slane %v3190, %v3760
      %v3762 = vlaneseq
      %v3763 = vshrl.u32 %v3762, 7
      %v3764 = vsub.s32 0, %v3763
      %v3765 = vrot.slane %v3191, %v3764
      %v3766 = vlaneseq
      %v3767 = vshrl.u32 %v3766, 7
      %v3768 = vsub.s32 0, %v3767
      %v3769 = vrot.slane %v3192, %v3768
      %v3770 = vlaneseq
      %v3771 = vshrl.u32 %v3770, 7
      %v3772 = vsub.s32 0, %v3771
      %v3773 = vrot.slane %v3193, %v3772
      %v3774 = vlaneseq
      %v3775 = vshrl.u32 %v3774, 7
      %v3776 = vsub.s32 0, %v3775
      %v3777 = vrot.slane %v3194, %v3776
      %v3778 = vlaneseq
      %v3779 = vshrl.u32 %v3778, 7
      %v3780 = vsub.s32 0, %v3779
      %v3781 = vrot.slane %v3195, %v3780
      %v3782 = vlaneseq
      %v3783 = vshrl.u32 %v3782, 7
      %v3784 = vsub.s32 0, %v3783
      %v3785 = vrot.slane %v3196, %v3784
      %v3786 = vlaneseq
      %v3787 = vshrl.u32 %v3786, 7
      %v3788 = vsub.s32 0, %v3787
      %v3789 = vrot.slane %v3197, %v3788
      %v3790 = vlaneseq
      %v3791 = vshrl.u32 %v3790, 7
      %v3792 = vsub.s32 0, %v3791
      %v3793 = vrot.slane %v3198, %v3792
      %v3794 = vlaneseq
      %v3795 = vshrl.u32 %v3794, 7
      %v3796 = vsub.s32 0, %v3795
      %v3797 = vrot.slane %v3199, %v3796
      %v3798 = vlaneseq
      %v3799 = vshrl.u32 %v3798, 7
      %v3800 = vsub.s32 0, %v3799
      %v3801 = vrot.slane %v3200, %v3800
      %v3802 = vlaneseq
      %v3803 = vshrl.u32 %v3802, 7
      %v3804 = vsub.s32 0, %v3803
      %v3805 = vrot.slane %v3201, %v3804
      %v3806 = vlaneseq
      %v3807 = vshrl.u32 %v3806, 7
      %v3808 = vsub.s32 0, %v3807
      %v3809 = vrot.slane %v3202, %v3808
      %v3810 = vlaneseq
      %v3811 = vshrl.u32 %v3810, 7
      %v3812 = vsub.s32 0, %v3811
      %v3813 = vrot.slane %v3203, %v3812
      %v3814 = vlaneseq
      %v3815 = vshrl.u32 %v3814, 7
      %v3816 = vsub.s32 0, %v3815
      %v3817 = vrot.slane %v3204, %v3816
      %v3818 = vlaneseq
      %v3819 = vshrl.u32 %v3818, 7
      %v3820 = vsub.s32 0, %v3819
      %v3821 = vrot.slane %v3205, %v3820
      %v3822 = vlaneseq
      %v3823 = vshrl.u32 %v3822, 7
      %v3824 = vsub.s32 0, %v3823
      %v3825 = vrot.slane %v3206, %v3824
      %v3826 = vlaneseq
      %v3827 = vshrl.u32 %v3826, 7
      %v3828 = vsub.s32 0, %v3827
      %v3829 = vrot.slane %v3207, %v3828
      %v3830 = vlaneseq
      %v3831 = vshrl.u32 %v3830, 7
      %v3832 = vsub.s32 0, %v3831
      %v3833 = vrot.slane %v3208, %v3832
      %v3834 = vlaneseq
      %v3835 = vshrl.u32 %v3834, 7
      %v3836 = vsub.s32 0, %v3835
      %v3837 = vrot.slane %v3209, %v3836
      %v3838 = vlaneseq
      %v3839 = vshrl.u32 %v3838, 7
      %v3840 = vsub.s32 0, %v3839
      %v3841 = vrot.slane %v3210, %v3840
      %v3842 = vlaneseq
      %v3843 = vshrl.u32 %v3842, 7
      %v3844 = vsub.s32 0, %v3843
      %v3845 = vrot.slane %v3211, %v3844
      %v3846 = vlaneseq
      %v3847 = vshrl.u32 %v3846, 7
      %v3848 = vsub.s32 0, %v3847
      %v3849 = vrot.slane %v3212, %v3848
      %v3850 = vlaneseq
      %v3851 = vshrl.u32 %v3850, 7
      %v3852 = vsub.s32 0, %v3851
      %v3853 = vrot.slane %v3213, %v3852
      %v3854 = vlaneseq
      %v3855 = vshrl.u32 %v3854, 7
      %v3856 = vsub.s32 0, %v3855
      %v3857 = vrot.slane %v3214, %v3856
      %v3858 = vlaneseq
      %v3859 = vshrl.u32 %v3858, 7
      %v3860 = vsub.s32 0, %v3859
      %v3861 = vrot.slane %v3215, %v3860
      %v3862 = vlaneseq
      %v3863 = vshrl.u32 %v3862, 7
      %v3864 = vsub.s32 0, %v3863
      %v3865 = vrot.slane %v3216, %v3864
      %v3866 = vlaneseq
      %v3867 = vshrl.u32 %v3866, 7
      %v3868 = vsub.s32 0, %v3867
      %v3869 = vrot.slane %v3217, %v3868
      %v3870 = vlaneseq
      %v3871 = vshrl.u32 %v3870, 7
      %v3872 = vsub.s32 0, %v3871
      %v3873 = vrot.slane %v3218, %v3872
      %v3874 = vlaneseq
      %v3875 = vshrl.u32 %v3874, 7
      %v3876 = vsub.s32 0, %v3875
      %v3877 = vrot.slane %v3219, %v3876
      %v3878 = vlaneseq
      %v3879 = vshrl.u32 %v3878, 7
      %v3880 = vsub.s32 0, %v3879
      %v3881 = vrot.slane %v3220, %v3880
      %v3882 = vlaneseq
      %v3883 = vshrl.u32 %v3882, 7
      %v3884 = vsub.s32 0, %v3883
      %v3885 = vrot.slane %v3221, %v3884
      %v3886 = vlaneseq
      %v3887 = vshrl.u32 %v3886, 7
      %v3888 = vsub.s32 0, %v3887
      %v3889 = vrot.slane %v3222, %v3888
      %v3890 = vlaneseq
      %v3891 = vshrl.u32 %v3890, 7
      %v3892 = vsub.s32 0, %v3891
      %v3893 = vrot.slane %v3223, %v3892
      %v3894 = vlaneseq
      %v3895 = vshrl.u32 %v3894, 7
      %v3896 = vsub.s32 0, %v3895
      %v3897 = vrot.slane %v3224, %v3896
      %v3898 = vlaneseq
      %v3899 = vshrl.u32 %v3898, 7
      %v3900 = vsub.s32 0, %v3899
      %v3901 = vrot.slane %v3225, %v3900
      %v3902 = vlaneseq
      %v3903 = vshrl.u32 %v3902, 7
      %v3904 = vsub.s32 0, %v3903
      %v3905 = vrot.slane %v3226, %v3904
      %v3906 = vlaneseq
      %v3907 = vshrl.u32 %v3906, 7
      %v3908 = vsub.s32 0, %v3907
      %v3909 = vrot.slane %v3227, %v3908
      %v3910 = vlaneseq
      %v3911 = vshrl.u32 %v3910, 7
      %v3912 = vsub.s32 0, %v3911
      %v3913 = vrot.slane %v3228, %v3912
      %v3914 = vlaneseq
      %v3915 = vshrl.u32 %v3914, 7
      %v3916 = vsub.s32 0, %v3915
      %v3917 = vrot.slane %v3229, %v3916
      %v3918 = vlaneseq
      %v3919 = vshrl.u32 %v3918, 7
      %v3920 = vsub.s32 0, %v3919
      %v3921 = vrot.slane %v3230, %v3920
      %v3922 = vlaneseq
      %v3923 = vshrl.u32 %v3922, 7
      %v3924 = vsub.s32 0, %v3923
      %v3925 = vrot.slane %v3231, %v3924
      %v3926 = vlaneseq
      %v3927 = vshrl.u32 %v3926, 7
      %v3928 = vsub.s32 0, %v3927
      %v3929 = vrot.slane %v3232, %v3928
      %v3930 = vlaneseq
      %v3931 = vshrl.u32 %v3930, 7
      %v3932 = vsub.s32 0, %v3931
      %v3933 = vrot.slane %v3233, %v3932
      %v3934 = vlaneseq
      %v3935 = vshrl.u32 %v3934, 7
      %v3936 = vsub.s32 0, %v3935
      %v3937 = vrot.slane %v3234, %v3936
      %v3938 = vlaneseq
      %v3939 = vshrl.u32 %v3938, 7
      %v3940 = vsub.s32 0, %v3939
      %v3941 = vrot.slane %v3235, %v3940
      %v3942 = vlaneseq
      %v3943 = vshrl.u32 %v3942, 7
      %v3944 = vsub.s32 0, %v3943
      %v3945 = vrot.slane %v3236, %v3944
      %v3946 = vlaneseq
      %v3947 = vshrl.u32 %v3946, 7
      %v3948 = vsub.s32 0, %v3947
      %v3949 = vrot.slane %v3237, %v3948
      %v3950 = vlaneseq
      %v3951 = vshrl.u32 %v3950, 7
      %v3952 = vsub.s32 0, %v3951
      %v3953 = vrot.slane %v3238, %v3952
      %v3954 = vlaneseq
      %v3955 = vshrl.u32 %v3954, 7
      %v3956 = vsub.s32 0, %v3955
      %v3957 = vrot.slane %v3239, %v3956
      %v3958 = vlaneseq
      %v3959 = vshrl.u32 %v3958, 7
      %v3960 = vsub.s32 0, %v3959
      %v3961 = vrot.slane %v3240, %v3960
      %v3962 = vlaneseq
      %v3963 = vshrl.u32 %v3962, 7
      %v3964 = vsub.s32 0, %v3963
      %v3965 = vrot.slane %v3241, %v3964
      %v3966 = vlaneseq
      %v3967 = vshrl.u32 %v3966, 7
      %v3968 = vsub.s32 0, %v3967
      %v3969 = vrot.slane %v3242, %v3968
      %v3970 = vlaneseq
      %v3971 = vshrl.u32 %v3970, 7
      %v3972 = vsub.s32 0, %v3971
      %v3973 = vrot.slane %v3243, %v3972
      %v3974 = vlaneseq
      %v3975 = vshrl.u32 %v3974, 7
      %v3976 = vsub.s32 0, %v3975
      %v3977 = vrot.slane %v3244, %v3976
      %v3978 = vlaneseq
      %v3979 = vshrl.u32 %v3978, 7
      %v3980 = vsub.s32 0, %v3979
      %v3981 = vrot.slane %v3245, %v3980
      %v3982 = vlaneseq
      %v3983 = vshrl.u32 %v3982, 7
      %v3984 = vsub.s32 0, %v3983
      %v3985 = vrot.slane %v3246, %v3984
      %v3986 = vlaneseq
      %v3987 = vshrl.u32 %v3986, 7
      %v3988 = vsub.s32 0, %v3987
      %v3989 = vrot.slane %v3247, %v3988
      %v3990 = vlaneseq
      %v3991 = vshrl.u32 %v3990, 7
      %v3992 = vsub.s32 0, %v3991
      %v3993 = vrot.slane %v3248, %v3992
      %v3994 = vlaneseq
      %v3995 = vshrl.u32 %v3994, 7
      %v3996 = vsub.s32 0, %v3995
      %v3997 = vrot.slane %v3249, %v3996
      %v3998 = vlaneseq
      %v3999 = vshrl.u32 %v3998, 7
      %v4000 = vsub.s32 0, %v3999
      %v4001 = vrot.slane %v3250, %v4000
      %v4002 = vlaneseq
      %v4003 = vshrl.u32 %v4002, 7
      %v4004 = vsub.s32 0, %v4003
      %v4005 = vrot.slane %v3251, %v4004
      %v4006 = vlaneseq
      %v4007 = vshrl.u32 %v4006, 7
      %v4008 = vsub.s32 0, %v4007
      %v4009 = vrot.slane %v3252, %v4008
      %v4010 = vlaneseq
      %v4011 = vshrl.u32 %v4010, 7
      %v4012 = vsub.s32 0, %v4011
      %v4013 = vrot.slane %v3253, %v4012
      %v4014 = vlaneseq
      %v4015 = vshrl.u32 %v4014, 7
      %v4016 = vsub.s32 0, %v4015
      %v4017 = vrot.slane %v3254, %v4016
      %v4018 = vlaneseq
      %v4019 = vshrl.u32 %v4018, 7
      %v4020 = vsub.s32 0, %v4019
      %v4021 = vrot.slane %v3255, %v4020
      %v4022 = vlaneseq
      %v4023 = vshrl.u32 %v4022, 7
      %v4024 = vsub.s32 0, %v4023
      %v4025 = vrot.slane %v3256, %v4024
      %v4026 = vlaneseq
      %v4027 = vshrl.u32 %v4026, 7
      %v4028 = vsub.s32 0, %v4027
      %v4029 = vrot.slane %v3257, %v4028
      %v4030 = vlaneseq
      %v4031 = vshrl.u32 %v4030, 7
      %v4032 = vsub.s32 0, %v4031
      %v4033 = vrot.slane %v3258, %v4032
      %v4034 = vlaneseq
      %v4035 = vshrl.u32 %v4034, 7
      %v4036 = vsub.s32 0, %v4035
      %v4037 = vrot.slane %v3259, %v4036
      %v4038 = vlaneseq
      %v4039 = vshrl.u32 %v4038, 7
      %v4040 = vsub.s32 0, %v4039
      %v4041 = vrot.slane %v3260, %v4040
      %v4042 = vlaneseq
      %v4043 = vshrl.u32 %v4042, 7
      %v4044 = vsub.s32 0, %v4043
      %v4045 = vrot.slane %v3261, %v4044
      %v4046 = vlaneseq
      %v4047 = vshrl.u32 %v4046, 7
      %v4048 = vsub.s32 0, %v4047
      %v4049 = vrot.slane %v3262, %v4048
      %v4050 = vlaneseq
      %v4051 = vshrl.u32 %v4050, 7
      %v4052 = vsub.s32 0, %v4051
      %v4053 = vrot.slane %v3263, %v4052
      %v4054 = vlaneseq
      %v4055 = vshrl.u32 %v4054, 7
      %v4056 = vsub.s32 0, %v4055
      %v4057 = vrot.slane %v3264, %v4056
      %v4058 = vlaneseq
      %v4059 = vshrl.u32 %v4058, 7
      %v4060 = vsub.s32 0, %v4059
      %v4061 = vrot.slane %v3265, %v4060
      %v4062 = vlaneseq
      %v4063 = vshrl.u32 %v4062, 7
      %v4064 = vsub.s32 0, %v4063
      %v4065 = vrot.slane %v3266, %v4064
      %v4066 = vlaneseq
      %v4067 = vshrl.u32 %v4066, 7
      %v4068 = vsub.s32 0, %v4067
      %v4069 = vrot.slane %v3267, %v4068
      %v4070 = vlaneseq
      %v4071 = vshrl.u32 %v4070, 7
      %v4072 = vsub.s32 0, %v4071
      %v4073 = vrot.slane %v3268, %v4072
      %v4074 = vlaneseq
      %v4075 = vshrl.u32 %v4074, 7
      %v4076 = vsub.s32 0, %v4075
      %v4077 = vrot.slane %v3269, %v4076
      %v4078 = vlaneseq
      %v4079 = vshrl.u32 %v4078, 7
      %v4080 = vsub.s32 0, %v4079
      %v4081 = vrot.slane %v3270, %v4080
      %v4082 = vlaneseq
      %v4083 = vshrl.u32 %v4082, 7
      %v4084 = vsub.s32 0, %v4083
      %v4085 = vrot.slane %v3271, %v4084
      %v4086 = vlaneseq
      %v4087 = vshrl.u32 %v4086, 7
      %v4088 = vsub.s32 0, %v4087
      %v4089 = vrot.slane %v3272, %v4088
      %v4090 = vlaneseq
      %v4091 = vshrl.u32 %v4090, 7
      %v4092 = vsub.s32 0, %v4091
      %v4093 = vrot.slane %v3273, %v4092
      %v4094 = vlaneseq
      %v4095 = vshrl.u32 %v4094, 7
      %v4096 = vsub.s32 0, %v4095
      %v4097 = vrot.slane %v3274, %v4096
      %v4098 = vlaneseq
      %v4099 = vshrl.u32 %v4098, 7
      %v4100 = vsub.s32 0, %v4099
      %v4101 = vrot.slane %v3275, %v4100
      %v4102 = vlaneseq
      %v4103 = vshrl.u32 %v4102, 7
      %v4104 = vsub.s32 0, %v4103
      %v4105 = vrot.slane %v3276, %v4104
      %v4106 = vlaneseq
      %v4107 = vshrl.u32 %v4106, 7
      %v4108 = vsub.s32 0, %v4107
      %v4109 = vrot.slane %v3277, %v4108
      %v4110 = vlaneseq
      %v4111 = vshrl.u32 %v4110, 7
      %v4112 = vsub.s32 0, %v4111
      %v4113 = vrot.slane %v3278, %v4112
      %v4114 = vlaneseq
      %v4115 = vshrl.u32 %v4114, 7
      %v4116 = vsub.s32 0, %v4115
      %v4117 = vrot.slane %v3279, %v4116
      %v4118 = vlaneseq
      %v4119 = vshrl.u32 %v4118, 7
      %v4120 = vsub.s32 0, %v4119
      %v4121 = vrot.slane %v3280, %v4120
      %v4122 = vlaneseq
      %v4123 = vshrl.u32 %v4122, 7
      %v4124 = vsub.s32 0, %v4123
      %v4125 = vrot.slane %v3281, %v4124
      %v4126 = vlaneseq
      %v4127 = vshrl.u32 %v4126, 7
      %v4128 = vsub.s32 0, %v4127
      %v4129 = vrot.slane %v3282, %v4128
      %v4130 = vlaneseq
      %v4131 = vshrl.u32 %v4130, 7
      %v4132 = vsub.s32 0, %v4131
      %v4133 = vrot.slane %v3283, %v4132
      %v4134 = vlaneseq
      %v4135 = vshrl.u32 %v4134, 7
      %v4136 = vsub.s32 0, %v4135
      %v4137 = vrot.slane %v3284, %v4136
      %v4138 = vlaneseq
      %v4139 = vshrl.u32 %v4138, 7
      %v4140 = vsub.s32 0, %v4139
      %v4141 = vrot.slane %v3285, %v4140
      %v4142 = vlaneseq
      %v4143 = vshrl.u32 %v4142, 7
      %v4144 = vsub.s32 0, %v4143
      %v4145 = vrot.slane %v3286, %v4144
      %v4146 = vlaneseq
      %v4147 = vshrl.u32 %v4146, 7
      %v4148 = vsub.s32 0, %v4147
      %v4149 = vrot.slane %v3287, %v4148
      %v4150 = vlaneseq
      %v4151 = vshrl.u32 %v4150, 7
      %v4152 = vsub.s32 0, %v4151
      %v4153 = vrot.slane %v3288, %v4152
      %v4154 = vlaneseq
      %v4155 = vshrl.u32 %v4154, 7
      %v4156 = vsub.s32 0, %v4155
      %v4157 = vrot.slane %v3289, %v4156
      %v4158 = vlaneseq
      %v4159 = vshrl.u32 %v4158, 7
      %v4160 = vsub.s32 0, %v4159
      %v4161 = vrot.slane %v3290, %v4160
      %v4162 = vlaneseq
      %v4163 = vshrl.u32 %v4162, 7
      %v4164 = vsub.s32 0, %v4163
      %v4165 = vrot.slane %v3291, %v4164
      %v4166 = vlaneseq
      %v4167 = vshrl.u32 %v4166, 7
      %v4168 = vsub.s32 0, %v4167
      %v4169 = vrot.slane %v3292, %v4168
      %v4170 = vlaneseq
      %v4171 = vshrl.u32 %v4170, 7
      %v4172 = vsub.s32 0, %v4171
      %v4173 = vrot.slane %v3293, %v4172
      %v4174 = vlaneseq
      %v4175 = vshrl.u32 %v4174, 7
      %v4176 = vsub.s32 0, %v4175
      %v4177 = vrot.slane %v3294, %v4176
      %v4178 = vlaneseq
      %v4179 = vshrl.u32 %v4178, 7
      %v4180 = vsub.s32 0, %v4179
      %v4181 = vrot.slane %v3295, %v4180
      %v4182 = vlaneseq
      %v4183 = vshrl.u32 %v4182, 7
      %v4184 = vsub.s32 0, %v4183
      %v4185 = vrot.slane %v3296, %v4184
      %v4186 = vlaneseq
      %v4187 = vshrl.u32 %v4186, 7
      %v4188 = vsub.s32 0, %v4187
      %v4189 = vrot.slane %v3297, %v4188
      %v4190 = vlaneseq
      %v4191 = vshrl.u32 %v4190, 7
      %v4192 = vsub.s32 0, %v4191
      %v4193 = vrot.slane %v3298, %v4192
      %v4194 = vlaneseq
      %v4195 = vshrl.u32 %v4194, 7
      %v4196 = vsub.s32 0, %v4195
      %v4197 = vrot.slane %v3299, %v4196
      %v4198 = vlaneseq
      %v4199 = vshrl.u32 %v4198, 7
      %v4200 = vsub.s32 0, %v4199
      %v4201 = vrot.slane %v3300, %v4200
      %v4202 = vlaneseq
      %v4203 = vshrl.u32 %v4202, 7
      %v4204 = vsub.s32 0, %v4203
      %v4205 = vrot.slane %v3301, %v4204
      %v4206 = vlaneseq
      %v4207 = vshrl.u32 %v4206, 7
      %v4208 = vsub.s32 0, %v4207
      %v4209 = vrot.slane %v3302, %v4208
      %v4210 = vlaneseq
      %v4211 = vshrl.u32 %v4210, 7
      %v4212 = vsub.s32 0, %v4211
      %v4213 = vrot.slane %v3303, %v4212
      %v4214 = vlaneseq
      %v4215 = vshrl.u32 %v4214, 7
      %v4216 = vsub.s32 0, %v4215
      %v4217 = vrot.slane %v3304, %v4216
      %v4218 = vlaneseq
      %v4219 = vshrl.u32 %v4218, 7
      %v4220 = vsub.s32 0, %v4219
      %v4221 = vrot.slane %v3305, %v4220
      %v4222 = vlaneseq
      %v4223 = vshrl.u32 %v4222, 7
      %v4224 = vsub.s32 0, %v4223
      %v4225 = vrot.slane %v3306, %v4224
      %v4226 = vlaneseq
      %v4227 = vshrl.u32 %v4226, 7
      %v4228 = vsub.s32 0, %v4227
      %v4229 = vrot.slane %v3307, %v4228
      %v4230 = vlaneseq
      %v4231 = vshrl.u32 %v4230, 7
      %v4232 = vsub.s32 0, %v4231
      %v4233 = vrot.slane %v3308, %v4232
      %v4234 = vlaneseq
      %v4235 = vshrl.u32 %v4234, 7
      %v4236 = vsub.s32 0, %v4235
      %v4237 = vrot.slane %v3309, %v4236
      %v4238 = vlaneseq
      %v4239 = vshrl.u32 %v4238, 7
      %v4240 = vsub.s32 0, %v4239
      %v4241 = vrot.slane %v3310, %v4240
      %v4242 = vlaneseq
      %v4243 = vshrl.u32 %v4242, 7
      %v4244 = vsub.s32 0, %v4243
      %v4245 = vrot.slane %v3311, %v4244
      %v4246 = vlaneseq
      %v4247 = vshrl.u32 %v4246, 7
      %v4248 = vsub.s32 0, %v4247
      %v4249 = vrot.slane %v3312, %v4248
      %v4250 = vlaneseq
      %v4251 = vshrl.u32 %v4250, 7
      %v4252 = vsub.s32 0, %v4251
      %v4253 = vrot.slane %v3313, %v4252
      %v4254 = vlaneseq
      %v4255 = vshrl.u32 %v4254, 7
      %v4256 = vsub.s32 0, %v4255
      %v4257 = vrot.slane %v3314, %v4256
      %v4258 = vlaneseq
      %v4259 = vshrl.u32 %v4258, 7
      %v4260 = vsub.s32 0, %v4259
      %v4261 = vrot.slane %v3315, %v4260
      %v4262 = vlaneseq
      %v4263 = vshrl.u32 %v4262, 7
      %v4264 = vsub.s32 0, %v4263
      %v4265 = vrot.slane %v3316, %v4264
      %v4266 = vlaneseq
      %v4267 = vshrl.u32 %v4266, 7
      %v4268 = vsub.s32 0, %v4267
      %v4269 = vrot.slane %v3317, %v4268
      %v4270 = vlaneseq
      %v4271 = vshrl.u32 %v4270, 7
      %v4272 = vsub.s32 0, %v4271
      %v4273 = vrot.slane %v3318, %v4272
      %v4274 = vlaneseq
      %v4275 = vshrl.u32 %v4274, 7
      %v4276 = vsub.s32 0, %v4275
      %v4277 = vrot.slane %v3319, %v4276
      %v4278 = vlaneseq
      %v4279 = vshrl.u32 %v4278, 7
      %v4280 = vsub.s32 0, %v4279
      %v4281 = vrot.slane %v3320, %v4280
      %v4282 = vlaneseq
      %v4283 = vshrl.u32 %v4282, 7
      %v4284 = vsub.s32 0, %v4283
      %v4285 = vrot.slane %v3321, %v4284
      %v4286 = vlaneseq
      %v4287 = vshrl.u32 %v4286, 7
      %v4288 = vsub.s32 0, %v4287
      %v4289 = vrot.slane %v3322, %v4288
      %v4290 = vlaneseq
      %v4291 = vshrl.u32 %v4290, 7
      %v4292 = vsub.s32 0, %v4291
      %v4293 = vrot.slane %v3323, %v4292
      %v4294 = vlaneseq
      %v4295 = vshrl.u32 %v4294, 7
      %v4296 = vsub.s32 0, %v4295
      %v4297 = vrot.slane %v3324, %v4296
      %v4298 = vlaneseq
      %v4299 = vshrl.u32 %v4298, 7
      %v4300 = vsub.s32 0, %v4299
      %v4301 = vrot.slane %v3325, %v4300
      %v4302 = vlaneseq
      %v4303 = vshrl.u32 %v4302, 7
      %v4304 = vsub.s32 0, %v4303
      %v4305 = vrot.slane %v3326, %v4304
      %v4306 = vlaneseq
      %v4307 = vshrl.u32 %v4306, 7
      %v4308 = vsub.s32 0, %v4307
      %v4309 = vrot.slane %v3327, %v4308
      %v4310 = vlaneseq
      %v4311 = vshrl.u32 %v4310, 7
      %v4312 = vsub.s32 0, %v4311
      %v4313 = vrot.slane %v3328, %v4312
      %v4314 = vlaneseq
      %v4315 = vshrl.u32 %v4314, 7
      %v4316 = vsub.s32 0, %v4315
      %v4317 = vrot.slane %v3329, %v4316
      %v4318 = vlaneseq
      %v4319 = vshrl.u32 %v4318, 7
      %v4320 = vsub.s32 0, %v4319
      %v4321 = vrot.slane %v3330, %v4320
      %v4322 = vlaneseq
      %v4323 = vshrl.u32 %v4322, 7
      %v4324 = vsub.s32 0, %v4323
      %v4325 = vrot.slane %v3331, %v4324
      %v4326 = vlaneseq
      %v4327 = vshrl.u32 %v4326, 7
      %v4328 = vsub.s32 0, %v4327
      %v4329 = vrot.slane %v3332, %v4328
      %v4330 = vlaneseq
      %v4331 = vshrl.u32 %v4330, 7
      %v4332 = vsub.s32 0, %v4331
      %v4333 = vrot.slane %v3333, %v4332
      %v4334 = vlaneseq
      %v4335 = vshrl.u32 %v4334, 7
      %v4336 = vsub.s32 0, %v4335
      %v4337 = vrot.slane %v3334, %v4336
      %v4338 = vlaneseq
      %v4339 = vshrl.u32 %v4338, 7
      %v4340 = vsub.s32 0, %v4339
      %v4341 = vrot.slane %v3335, %v4340
      %v4342 = vlaneseq
      %v4343 = vshrl.u32 %v4342, 7
      %v4344 = vsub.s32 0, %v4343
      %v4345 = vrot.slane %v3336, %v4344
      %v4346 = vlaneseq
      %v4347 = vshrl.u32 %v4346, 7
      %v4348 = vsub.s32 0, %v4347
      %v4349 = vrot.slane %v3337, %v4348
      %v4350 = vlaneseq
      %v4351 = vshrl.u32 %v4350, 7
      %v4352 = vsub.s32 0, %v4351
      %v4353 = vrot.slane %v3338, %v4352
      %v4354 = vlaneseq
      %v4355 = vshrl.u32 %v4354, 7
      %v4356 = vsub.s32 0, %v4355
      %v4357 = vrot.slane %v3339, %v4356
      %v4358 = vlaneseq
      %v4359 = vshrl.u32 %v4358, 7
      %v4360 = vsub.s32 0, %v4359
      %v4361 = vrot.slane %v3340, %v4360
      %v4362 = vlaneseq
      %v4363 = vshrl.u32 %v4362, 7
      %v4364 = vsub.s32 0, %v4363
      %v4365 = vrot.slane %v3341, %v4364
      %v4878 = vcombine.low %v3345, %v3349
      %v4879 = vcombine.low %v3353, %v3357
      %v4880 = vcombine.low %v3361, %v3365
      %v4881 = vcombine.low %v3369, %v3373
      %v4883 = vunpack.c.l.s4 1966171168
      %v4884 = vunpack.c.0.s8 %v4883
      %v4885 = vlaneseq
      %v4886 = vshrl.u32 %v4885, 7
      %v4887 = vsub.s32 %v4884, %v4886
      %v4888 = vrot.slane %v4878, %v4887
      %v4890 = vunpack.c.l.s4 1966171168
      %v4891 = vunpack.c.0.s8 %v4890
      %v4892 = vlaneseq
      %v4893 = vshrl.u32 %v4892, 7
      %v4894 = vsub.s32 %v4891, %v4893
      %v4895 = vrot.slane %v4879, %v4894
      %v4897 = vunpack.c.l.s4 1966171168
      %v4898 = vunpack.c.0.s8 %v4897
      %v4899 = vlaneseq
      %v4900 = vshrl.u32 %v4899, 7
      %v4901 = vsub.s32 %v4898, %v4900
      %v4902 = vrot.slane %v4880, %v4901
      %v4904 = vunpack.c.l.s4 1966171168
      %v4905 = vunpack.c.0.s8 %v4904
      %v4906 = vlaneseq
      %v4907 = vshrl.u32 %v4906, 7
      %v4908 = vsub.s32 %v4905, %v4907
      %v4909 = vrot.slane %v4881, %v4908
      %v4910 = vcombine.low %v4888, %v4895
      %v4911 = vcombine.low %v4902, %v4909
      %v4913 = vunpack.c.l.s4 1966171168
      %v4914 = vunpack.c.0.s8 %v4913
      %v4915 = vlaneseq
      %v4916 = vshrl.u32 %v4915, 7
      %v4917 = vsub.s32 %v4914, %v4916
      %v4918 = vrot.slane %v4910, %v4917
      %v4920 = vunpack.c.l.s4 1966171168
      %v4921 = vunpack.c.0.s8 %v4920
      %v4922 = vlaneseq
      %v4923 = vshrl.u32 %v4922, 7
      %v4924 = vsub.s32 %v4921, %v4923
      %v4925 = vrot.slane %v4911, %v4924
      %v4926 = vcombine.low %v4918, %v4925
      %v4927 = vcombine.low %v3377, %v3381
      %v4928 = vcombine.low %v3385, %v3389
      %v4929 = vcombine.low %v3393, %v3397
      %v4930 = vcombine.low %v3401, %v3405
      %v4932 = vunpack.c.l.s4 1966171168
      %v4933 = vunpack.c.0.s8 %v4932
      %v4934 = vlaneseq
      %v4935 = vshrl.u32 %v4934, 7
      %v4936 = vsub.s32 %v4933, %v4935
      %v4937 = vrot.slane %v4927, %v4936
      %v4939 = vunpack.c.l.s4 1966171168
      %v4940 = vunpack.c.0.s8 %v4939
      %v4941 = vlaneseq
      %v4942 = vshrl.u32 %v4941, 7
      %v4943 = vsub.s32 %v4940, %v4942
      %v4944 = vrot.slane %v4928, %v4943
      %v4946 = vunpack.c.l.s4 1966171168
      %v4947 = vunpack.c.0.s8 %v4946
      %v4948 = vlaneseq
      %v4949 = vshrl.u32 %v4948, 7
      %v4950 = vsub.s32 %v4947, %v4949
      %v4951 = vrot.slane %v4929, %v4950
      %v4953 = vunpack.c.l.s4 1966171168
      %v4954 = vunpack.c.0.s8 %v4953
      %v4955 = vlaneseq
      %v4956 = vshrl.u32 %v4955, 7
      %v4957 = vsub.s32 %v4954, %v4956
      %v4958 = vrot.slane %v4930, %v4957
      %v4959 = vcombine.low %v4937, %v4944
      %v4960 = vcombine.low %v4951, %v4958
      %v4962 = vunpack.c.l.s4 1966171168
      %v4963 = vunpack.c.0.s8 %v4962
      %v4964 = vlaneseq
      %v4965 = vshrl.u32 %v4964, 7
      %v4966 = vsub.s32 %v4963, %v4965
      %v4967 = vrot.slane %v4959, %v4966
      %v4969 = vunpack.c.l.s4 1966171168
      %v4970 = vunpack.c.0.s8 %v4969
      %v4971 = vlaneseq
      %v4972 = vshrl.u32 %v4971, 7
      %v4973 = vsub.s32 %v4970, %v4972
      %v4974 = vrot.slane %v4960, %v4973
      %v4975 = vcombine.low %v4967, %v4974
      %v4976 = vcombine.low %v3409, %v3413
      %v4977 = vcombine.low %v3417, %v3421
      %v4978 = vcombine.low %v3425, %v3429
      %v4979 = vcombine.low %v3433, %v3437
      %v4981 = vunpack.c.l.s4 1966171168
      %v4982 = vunpack.c.0.s8 %v4981
      %v4983 = vlaneseq
      %v4984 = vshrl.u32 %v4983, 7
      %v4985 = vsub.s32 %v4982, %v4984
      %v4986 = vrot.slane %v4976, %v4985
      %v4988 = vunpack.c.l.s4 1966171168
      %v4989 = vunpack.c.0.s8 %v4988
      %v4990 = vlaneseq
      %v4991 = vshrl.u32 %v4990, 7
      %v4992 = vsub.s32 %v4989, %v4991
      %v4993 = vrot.slane %v4977, %v4992
      %v4995 = vunpack.c.l.s4 1966171168
      %v4996 = vunpack.c.0.s8 %v4995
      %v4997 = vlaneseq
      %v4998 = vshrl.u32 %v4997, 7
      %v4999 = vsub.s32 %v4996, %v4998
      %v5000 = vrot.slane %v4978, %v4999
      %v5002 = vunpack.c.l.s4 1966171168
      %v5003 = vunpack.c.0.s8 %v5002
      %v5004 = vlaneseq
      %v5005 = vshrl.u32 %v5004, 7
      %v5006 = vsub.s32 %v5003, %v5005
      %v5007 = vrot.slane %v4979, %v5006
      %v5008 = vcombine.low %v4986, %v4993
      %v5009 = vcombine.low %v5000, %v5007
      %v5011 = vunpack.c.l.s4 1966171168
      %v5012 = vunpack.c.0.s8 %v5011
      %v5013 = vlaneseq
      %v5014 = vshrl.u32 %v5013, 7
      %v5015 = vsub.s32 %v5012, %v5014
      %v5016 = vrot.slane %v5008, %v5015
      %v5018 = vunpack.c.l.s4 1966171168
      %v5019 = vunpack.c.0.s8 %v5018
      %v5020 = vlaneseq
      %v5021 = vshrl.u32 %v5020, 7
      %v5022 = vsub.s32 %v5019, %v5021
      %v5023 = vrot.slane %v5009, %v5022
      %v5024 = vcombine.low %v5016, %v5023
      %v5025 = vcombine.low %v3441, %v3445
      %v5026 = vcombine.low %v3449, %v3453
      %v5027 = vcombine.low %v3457, %v3461
      %v5028 = vcombine.low %v3465, %v3469
      %v5030 = vunpack.c.l.s4 1966171168
      %v5031 = vunpack.c.0.s8 %v5030
      %v5032 = vlaneseq
      %v5033 = vshrl.u32 %v5032, 7
      %v5034 = vsub.s32 %v5031, %v5033
      %v5035 = vrot.slane %v5025, %v5034
      %v5037 = vunpack.c.l.s4 1966171168
      %v5038 = vunpack.c.0.s8 %v5037
      %v5039 = vlaneseq
      %v5040 = vshrl.u32 %v5039, 7
      %v5041 = vsub.s32 %v5038, %v5040
      %v5042 = vrot.slane %v5026, %v5041
      %v5044 = vunpack.c.l.s4 1966171168
      %v5045 = vunpack.c.0.s8 %v5044
      %v5046 = vlaneseq
      %v5047 = vshrl.u32 %v5046, 7
      %v5048 = vsub.s32 %v5045, %v5047
      %v5049 = vrot.slane %v5027, %v5048
      %v5051 = vunpack.c.l.s4 1966171168
      %v5052 = vunpack.c.0.s8 %v5051
      %v5053 = vlaneseq
      %v5054 = vshrl.u32 %v5053, 7
      %v5055 = vsub.s32 %v5052, %v5054
      %v5056 = vrot.slane %v5028, %v5055
      %v5057 = vcombine.low %v5035, %v5042
      %v5058 = vcombine.low %v5049, %v5056
      %v5060 = vunpack.c.l.s4 1966171168
      %v5061 = vunpack.c.0.s8 %v5060
      %v5062 = vlaneseq
      %v5063 = vshrl.u32 %v5062, 7
      %v5064 = vsub.s32 %v5061, %v5063
      %v5065 = vrot.slane %v5057, %v5064
      %v5067 = vunpack.c.l.s4 1966171168
      %v5068 = vunpack.c.0.s8 %v5067
      %v5069 = vlaneseq
      %v5070 = vshrl.u32 %v5069, 7
      %v5071 = vsub.s32 %v5068, %v5070
      %v5072 = vrot.slane %v5058, %v5071
      %v5073 = vcombine.low %v5065, %v5072
      %v5074 = vcombine.low %v3473, %v3477
      %v5075 = vcombine.low %v3481, %v3485
      %v5076 = vcombine.low %v3489, %v3493
      %v5077 = vcombine.low %v3497, %v3501
      %v5079 = vunpack.c.l.s4 1966171168
      %v5080 = vunpack.c.0.s8 %v5079
      %v5081 = vlaneseq
      %v5082 = vshrl.u32 %v5081, 7
      %v5083 = vsub.s32 %v5080, %v5082
      %v5084 = vrot.slane %v5074, %v5083
      %v5086 = vunpack.c.l.s4 1966171168
      %v5087 = vunpack.c.0.s8 %v5086
      %v5088 = vlaneseq
      %v5089 = vshrl.u32 %v5088, 7
      %v5090 = vsub.s32 %v5087, %v5089
      %v5091 = vrot.slane %v5075, %v5090
      %v5093 = vunpack.c.l.s4 1966171168
      %v5094 = vunpack.c.0.s8 %v5093
      %v5095 = vlaneseq
      %v5096 = vshrl.u32 %v5095, 7
      %v5097 = vsub.s32 %v5094, %v5096
      %v5098 = vrot.slane %v5076, %v5097
      %v5100 = vunpack.c.l.s4 1966171168
      %v5101 = vunpack.c.0.s8 %v5100
      %v5102 = vlaneseq
      %v5103 = vshrl.u32 %v5102, 7
      %v5104 = vsub.s32 %v5101, %v5103
      %v5105 = vrot.slane %v5077, %v5104
      %v5106 = vcombine.low %v5084, %v5091
      %v5107 = vcombine.low %v5098, %v5105
      %v5109 = vunpack.c.l.s4 1966171168
      %v5110 = vunpack.c.0.s8 %v5109
      %v5111 = vlaneseq
      %v5112 = vshrl.u32 %v5111, 7
      %v5113 = vsub.s32 %v5110, %v5112
      %v5114 = vrot.slane %v5106, %v5113
      %v5116 = vunpack.c.l.s4 1966171168
      %v5117 = vunpack.c.0.s8 %v5116
      %v5118 = vlaneseq
      %v5119 = vshrl.u32 %v5118, 7
      %v5120 = vsub.s32 %v5117, %v5119
      %v5121 = vrot.slane %v5107, %v5120
      %v5122 = vcombine.low %v5114, %v5121
      %v5123 = vcombine.low %v3505, %v3509
      %v5124 = vcombine.low %v3513, %v3517
      %v5125 = vcombine.low %v3521, %v3525
      %v5126 = vcombine.low %v3529, %v3533
      %v5128 = vunpack.c.l.s4 1966171168
      %v5129 = vunpack.c.0.s8 %v5128
      %v5130 = vlaneseq
      %v5131 = vshrl.u32 %v5130, 7
      %v5132 = vsub.s32 %v5129, %v5131
      %v5133 = vrot.slane %v5123, %v5132
      %v5135 = vunpack.c.l.s4 1966171168
      %v5136 = vunpack.c.0.s8 %v5135
      %v5137 = vlaneseq
      %v5138 = vshrl.u32 %v5137, 7
      %v5139 = vsub.s32 %v5136, %v5138
      %v5140 = vrot.slane %v5124, %v5139
      %v5142 = vunpack.c.l.s4 1966171168
      %v5143 = vunpack.c.0.s8 %v5142
      %v5144 = vlaneseq
      %v5145 = vshrl.u32 %v5144, 7
      %v5146 = vsub.s32 %v5143, %v5145
      %v5147 = vrot.slane %v5125, %v5146
      %v5149 = vunpack.c.l.s4 1966171168
      %v5150 = vunpack.c.0.s8 %v5149
      %v5151 = vlaneseq
      %v5152 = vshrl.u32 %v5151, 7
      %v5153 = vsub.s32 %v5150, %v5152
      %v5154 = vrot.slane %v5126, %v5153
      %v5155 = vcombine.low %v5133, %v5140
      %v5156 = vcombine.low %v5147, %v5154
      %v5158 = vunpack.c.l.s4 1966171168
      %v5159 = vunpack.c.0.s8 %v5158
      %v5160 = vlaneseq
      %v5161 = vshrl.u32 %v5160, 7
      %v5162 = vsub.s32 %v5159, %v5161
      %v5163 = vrot.slane %v5155, %v5162
      %v5165 = vunpack.c.l.s4 1966171168
      %v5166 = vunpack.c.0.s8 %v5165
      %v5167 = vlaneseq
      %v5168 = vshrl.u32 %v5167, 7
      %v5169 = vsub.s32 %v5166, %v5168
      %v5170 = vrot.slane %v5156, %v5169
      %v5171 = vcombine.low %v5163, %v5170
      %v5172 = vcombine.low %v3537, %v3541
      %v5173 = vcombine.low %v3545, %v3549
      %v5174 = vcombine.low %v3553, %v3557
      %v5175 = vcombine.low %v3561, %v3565
      %v5177 = vunpack.c.l.s4 1966171168
      %v5178 = vunpack.c.0.s8 %v5177
      %v5179 = vlaneseq
      %v5180 = vshrl.u32 %v5179, 7
      %v5181 = vsub.s32 %v5178, %v5180
      %v5182 = vrot.slane %v5172, %v5181
      %v5184 = vunpack.c.l.s4 1966171168
      %v5185 = vunpack.c.0.s8 %v5184
      %v5186 = vlaneseq
      %v5187 = vshrl.u32 %v5186, 7
      %v5188 = vsub.s32 %v5185, %v5187
      %v5189 = vrot.slane %v5173, %v5188
      %v5191 = vunpack.c.l.s4 1966171168
      %v5192 = vunpack.c.0.s8 %v5191
      %v5193 = vlaneseq
      %v5194 = vshrl.u32 %v5193, 7
      %v5195 = vsub.s32 %v5192, %v5194
      %v5196 = vrot.slane %v5174, %v5195
      %v5198 = vunpack.c.l.s4 1966171168
      %v5199 = vunpack.c.0.s8 %v5198
      %v5200 = vlaneseq
      %v5201 = vshrl.u32 %v5200, 7
      %v5202 = vsub.s32 %v5199, %v5201
      %v5203 = vrot.slane %v5175, %v5202
      %v5204 = vcombine.low %v5182, %v5189
      %v5205 = vcombine.low %v5196, %v5203
      %v5207 = vunpack.c.l.s4 1966171168
      %v5208 = vunpack.c.0.s8 %v5207
      %v5209 = vlaneseq
      %v5210 = vshrl.u32 %v5209, 7
      %v5211 = vsub.s32 %v5208, %v5210
      %v5212 = vrot.slane %v5204, %v5211
      %v5214 = vunpack.c.l.s4 1966171168
      %v5215 = vunpack.c.0.s8 %v5214
      %v5216 = vlaneseq
      %v5217 = vshrl.u32 %v5216, 7
      %v5218 = vsub.s32 %v5215, %v5217
      %v5219 = vrot.slane %v5205, %v5218
      %v5220 = vcombine.low %v5212, %v5219
      %v5221 = vcombine.low %v3569, %v3573
      %v5222 = vcombine.low %v3577, %v3581
      %v5223 = vcombine.low %v3585, %v3589
      %v5224 = vcombine.low %v3593, %v3597
      %v5226 = vunpack.c.l.s4 1966171168
      %v5227 = vunpack.c.0.s8 %v5226
      %v5228 = vlaneseq
      %v5229 = vshrl.u32 %v5228, 7
      %v5230 = vsub.s32 %v5227, %v5229
      %v5231 = vrot.slane %v5221, %v5230
      %v5233 = vunpack.c.l.s4 1966171168
      %v5234 = vunpack.c.0.s8 %v5233
      %v5235 = vlaneseq
      %v5236 = vshrl.u32 %v5235, 7
      %v5237 = vsub.s32 %v5234, %v5236
      %v5238 = vrot.slane %v5222, %v5237
      %v5240 = vunpack.c.l.s4 1966171168
      %v5241 = vunpack.c.0.s8 %v5240
      %v5242 = vlaneseq
      %v5243 = vshrl.u32 %v5242, 7
      %v5244 = vsub.s32 %v5241, %v5243
      %v5245 = vrot.slane %v5223, %v5244
      %v5247 = vunpack.c.l.s4 1966171168
      %v5248 = vunpack.c.0.s8 %v5247
      %v5249 = vlaneseq
      %v5250 = vshrl.u32 %v5249, 7
      %v5251 = vsub.s32 %v5248, %v5250
      %v5252 = vrot.slane %v5224, %v5251
      %v5253 = vcombine.low %v5231, %v5238
      %v5254 = vcombine.low %v5245, %v5252
      %v5256 = vunpack.c.l.s4 1966171168
      %v5257 = vunpack.c.0.s8 %v5256
      %v5258 = vlaneseq
      %v5259 = vshrl.u32 %v5258, 7
      %v5260 = vsub.s32 %v5257, %v5259
      %v5261 = vrot.slane %v5253, %v5260
      %v5263 = vunpack.c.l.s4 1966171168
      %v5264 = vunpack.c.0.s8 %v5263
      %v5265 = vlaneseq
      %v5266 = vshrl.u32 %v5265, 7
      %v5267 = vsub.s32 %v5264, %v5266
      %v5268 = vrot.slane %v5254, %v5267
      %v5269 = vcombine.low %v5261, %v5268
      %v5270 = vcombine.low %v3601, %v3605
      %v5271 = vcombine.low %v3609, %v3613
      %v5272 = vcombine.low %v3617, %v3621
      %v5273 = vcombine.low %v3625, %v3629
      %v5275 = vunpack.c.l.s4 1966171168
      %v5276 = vunpack.c.0.s8 %v5275
      %v5277 = vlaneseq
      %v5278 = vshrl.u32 %v5277, 7
      %v5279 = vsub.s32 %v5276, %v5278
      %v5280 = vrot.slane %v5270, %v5279
      %v5282 = vunpack.c.l.s4 1966171168
      %v5283 = vunpack.c.0.s8 %v5282
      %v5284 = vlaneseq
      %v5285 = vshrl.u32 %v5284, 7
      %v5286 = vsub.s32 %v5283, %v5285
      %v5287 = vrot.slane %v5271, %v5286
      %v5289 = vunpack.c.l.s4 1966171168
      %v5290 = vunpack.c.0.s8 %v5289
      %v5291 = vlaneseq
      %v5292 = vshrl.u32 %v5291, 7
      %v5293 = vsub.s32 %v5290, %v5292
      %v5294 = vrot.slane %v5272, %v5293
      %v5296 = vunpack.c.l.s4 1966171168
      %v5297 = vunpack.c.0.s8 %v5296
      %v5298 = vlaneseq
      %v5299 = vshrl.u32 %v5298, 7
      %v5300 = vsub.s32 %v5297, %v5299
      %v5301 = vrot.slane %v5273, %v5300
      %v5302 = vcombine.low %v5280, %v5287
      %v5303 = vcombine.low %v5294, %v5301
      %v5305 = vunpack.c.l.s4 1966171168
      %v5306 = vunpack.c.0.s8 %v5305
      %v5307 = vlaneseq
      %v5308 = vshrl.u32 %v5307, 7
      %v5309 = vsub.s32 %v5306, %v5308
      %v5310 = vrot.slane %v5302, %v5309
      %v5312 = vunpack.c.l.s4 1966171168
      %v5313 = vunpack.c.0.s8 %v5312
      %v5314 = vlaneseq
      %v5315 = vshrl.u32 %v5314, 7
      %v5316 = vsub.s32 %v5313, %v5315
      %v5317 = vrot.slane %v5303, %v5316
      %v5318 = vcombine.low %v5310, %v5317
      %v5319 = vcombine.low %v3633, %v3637
      %v5320 = vcombine.low %v3641, %v3645
      %v5321 = vcombine.low %v3649, %v3653
      %v5322 = vcombine.low %v3657, %v3661
      %v5324 = vunpack.c.l.s4 1966171168
      %v5325 = vunpack.c.0.s8 %v5324
      %v5326 = vlaneseq
      %v5327 = vshrl.u32 %v5326, 7
      %v5328 = vsub.s32 %v5325, %v5327
      %v5329 = vrot.slane %v5319, %v5328
      %v5331 = vunpack.c.l.s4 1966171168
      %v5332 = vunpack.c.0.s8 %v5331
      %v5333 = vlaneseq
      %v5334 = vshrl.u32 %v5333, 7
      %v5335 = vsub.s32 %v5332, %v5334
      %v5336 = vrot.slane %v5320, %v5335
      %v5338 = vunpack.c.l.s4 1966171168
      %v5339 = vunpack.c.0.s8 %v5338
      %v5340 = vlaneseq
      %v5341 = vshrl.u32 %v5340, 7
      %v5342 = vsub.s32 %v5339, %v5341
      %v5343 = vrot.slane %v5321, %v5342
      %v5345 = vunpack.c.l.s4 1966171168
      %v5346 = vunpack.c.0.s8 %v5345
      %v5347 = vlaneseq
      %v5348 = vshrl.u32 %v5347, 7
      %v5349 = vsub.s32 %v5346, %v5348
      %v5350 = vrot.slane %v5322, %v5349
      %v5351 = vcombine.low %v5329, %v5336
      %v5352 = vcombine.low %v5343, %v5350
      %v5354 = vunpack.c.l.s4 1966171168
      %v5355 = vunpack.c.0.s8 %v5354
      %v5356 = vlaneseq
      %v5357 = vshrl.u32 %v5356, 7
      %v5358 = vsub.s32 %v5355, %v5357
      %v5359 = vrot.slane %v5351, %v5358
      %v5361 = vunpack.c.l.s4 1966171168
      %v5362 = vunpack.c.0.s8 %v5361
      %v5363 = vlaneseq
      %v5364 = vshrl.u32 %v5363, 7
      %v5365 = vsub.s32 %v5362, %v5364
      %v5366 = vrot.slane %v5352, %v5365
      %v5367 = vcombine.low %v5359, %v5366
      %v5368 = vcombine.low %v3665, %v3669
      %v5369 = vcombine.low %v3673, %v3677
      %v5370 = vcombine.low %v3681, %v3685
      %v5371 = vcombine.low %v3689, %v3693
      %v5373 = vunpack.c.l.s4 1966171168
      %v5374 = vunpack.c.0.s8 %v5373
      %v5375 = vlaneseq
      %v5376 = vshrl.u32 %v5375, 7
      %v5377 = vsub.s32 %v5374, %v5376
      %v5378 = vrot.slane %v5368, %v5377
      %v5380 = vunpack.c.l.s4 1966171168
      %v5381 = vunpack.c.0.s8 %v5380
      %v5382 = vlaneseq
      %v5383 = vshrl.u32 %v5382, 7
      %v5384 = vsub.s32 %v5381, %v5383
      %v5385 = vrot.slane %v5369, %v5384
      %v5387 = vunpack.c.l.s4 1966171168
      %v5388 = vunpack.c.0.s8 %v5387
      %v5389 = vlaneseq
      %v5390 = vshrl.u32 %v5389, 7
      %v5391 = vsub.s32 %v5388, %v5390
      %v5392 = vrot.slane %v5370, %v5391
      %v5394 = vunpack.c.l.s4 1966171168
      %v5395 = vunpack.c.0.s8 %v5394
      %v5396 = vlaneseq
      %v5397 = vshrl.u32 %v5396, 7
      %v5398 = vsub.s32 %v5395, %v5397
      %v5399 = vrot.slane %v5371, %v5398
      %v5400 = vcombine.low %v5378, %v5385
      %v5401 = vcombine.low %v5392, %v5399
      %v5403 = vunpack.c.l.s4 1966171168
      %v5404 = vunpack.c.0.s8 %v5403
      %v5405 = vlaneseq
      %v5406 = vshrl.u32 %v5405, 7
      %v5407 = vsub.s32 %v5404, %v5406
      %v5408 = vrot.slane %v5400, %v5407
      %v5410 = vunpack.c.l.s4 1966171168
      %v5411 = vunpack.c.0.s8 %v5410
      %v5412 = vlaneseq
      %v5413 = vshrl.u32 %v5412, 7
      %v5414 = vsub.s32 %v5411, %v5413
      %v5415 = vrot.slane %v5401, %v5414
      %v5416 = vcombine.low %v5408, %v5415
      %v5417 = vcombine.low %v3697, %v3701
      %v5418 = vcombine.low %v3705, %v3709
      %v5419 = vcombine.low %v3713, %v3717
      %v5420 = vcombine.low %v3721, %v3725
      %v5422 = vunpack.c.l.s4 1966171168
      %v5423 = vunpack.c.0.s8 %v5422
      %v5424 = vlaneseq
      %v5425 = vshrl.u32 %v5424, 7
      %v5426 = vsub.s32 %v5423, %v5425
      %v5427 = vrot.slane %v5417, %v5426
      %v5429 = vunpack.c.l.s4 1966171168
      %v5430 = vunpack.c.0.s8 %v5429
      %v5431 = vlaneseq
      %v5432 = vshrl.u32 %v5431, 7
      %v5433 = vsub.s32 %v5430, %v5432
      %v5434 = vrot.slane %v5418, %v5433
      %v5436 = vunpack.c.l.s4 1966171168
      %v5437 = vunpack.c.0.s8 %v5436
      %v5438 = vlaneseq
      %v5439 = vshrl.u32 %v5438, 7
      %v5440 = vsub.s32 %v5437, %v5439
      %v5441 = vrot.slane %v5419, %v5440
      %v5443 = vunpack.c.l.s4 1966171168
      %v5444 = vunpack.c.0.s8 %v5443
      %v5445 = vlaneseq
      %v5446 = vshrl.u32 %v5445, 7
      %v5447 = vsub.s32 %v5444, %v5446
      %v5448 = vrot.slane %v5420, %v5447
      %v5449 = vcombine.low %v5427, %v5434
      %v5450 = vcombine.low %v5441, %v5448
      %v5452 = vunpack.c.l.s4 1966171168
      %v5453 = vunpack.c.0.s8 %v5452
      %v5454 = vlaneseq
      %v5455 = vshrl.u32 %v5454, 7
      %v5456 = vsub.s32 %v5453, %v5455
      %v5457 = vrot.slane %v5449, %v5456
      %v5459 = vunpack.c.l.s4 1966171168
      %v5460 = vunpack.c.0.s8 %v5459
      %v5461 = vlaneseq
      %v5462 = vshrl.u32 %v5461, 7
      %v5463 = vsub.s32 %v5460, %v5462
      %v5464 = vrot.slane %v5450, %v5463
      %v5465 = vcombine.low %v5457, %v5464
      %v5466 = vcombine.low %v3729, %v3733
      %v5467 = vcombine.low %v3737, %v3741
      %v5468 = vcombine.low %v3745, %v3749
      %v5469 = vcombine.low %v3753, %v3757
      %v5471 = vunpack.c.l.s4 1966171168
      %v5472 = vunpack.c.0.s8 %v5471
      %v5473 = vlaneseq
      %v5474 = vshrl.u32 %v5473, 7
      %v5475 = vsub.s32 %v5472, %v5474
      %v5476 = vrot.slane %v5466, %v5475
      %v5478 = vunpack.c.l.s4 1966171168
      %v5479 = vunpack.c.0.s8 %v5478
      %v5480 = vlaneseq
      %v5481 = vshrl.u32 %v5480, 7
      %v5482 = vsub.s32 %v5479, %v5481
      %v5483 = vrot.slane %v5467, %v5482
      %v5485 = vunpack.c.l.s4 1966171168
      %v5486 = vunpack.c.0.s8 %v5485
      %v5487 = vlaneseq
      %v5488 = vshrl.u32 %v5487, 7
      %v5489 = vsub.s32 %v5486, %v5488
      %v5490 = vrot.slane %v5468, %v5489
      %v5492 = vunpack.c.l.s4 1966171168
      %v5493 = vunpack.c.0.s8 %v5492
      %v5494 = vlaneseq
      %v5495 = vshrl.u32 %v5494, 7
      %v5496 = vsub.s32 %v5493, %v5495
      %v5497 = vrot.slane %v5469, %v5496
      %v5498 = vcombine.low %v5476, %v5483
      %v5499 = vcombine.low %v5490, %v5497
      %v5501 = vunpack.c.l.s4 1966171168
      %v5502 = vunpack.c.0.s8 %v5501
      %v5503 = vlaneseq
      %v5504 = vshrl.u32 %v5503, 7
      %v5505 = vsub.s32 %v5502, %v5504
      %v5506 = vrot.slane %v5498, %v5505
      %v5508 = vunpack.c.l.s4 1966171168
      %v5509 = vunpack.c.0.s8 %v5508
      %v5510 = vlaneseq
      %v5511 = vshrl.u32 %v5510, 7
      %v5512 = vsub.s32 %v5509, %v5511
      %v5513 = vrot.slane %v5499, %v5512
      %v5514 = vcombine.low %v5506, %v5513
      %v5515 = vcombine.low %v3761, %v3765
      %v5516 = vcombine.low %v3769, %v3773
      %v5517 = vcombine.low %v3777, %v3781
      %v5518 = vcombine.low %v3785, %v3789
      %v5520 = vunpack.c.l.s4 1966171168
      %v5521 = vunpack.c.0.s8 %v5520
      %v5522 = vlaneseq
      %v5523 = vshrl.u32 %v5522, 7
      %v5524 = vsub.s32 %v5521, %v5523
      %v5525 = vrot.slane %v5515, %v5524
      %v5527 = vunpack.c.l.s4 1966171168
      %v5528 = vunpack.c.0.s8 %v5527
      %v5529 = vlaneseq
      %v5530 = vshrl.u32 %v5529, 7
      %v5531 = vsub.s32 %v5528, %v5530
      %v5532 = vrot.slane %v5516, %v5531
      %v5534 = vunpack.c.l.s4 1966171168
      %v5535 = vunpack.c.0.s8 %v5534
      %v5536 = vlaneseq
      %v5537 = vshrl.u32 %v5536, 7
      %v5538 = vsub.s32 %v5535, %v5537
      %v5539 = vrot.slane %v5517, %v5538
      %v5541 = vunpack.c.l.s4 1966171168
      %v5542 = vunpack.c.0.s8 %v5541
      %v5543 = vlaneseq
      %v5544 = vshrl.u32 %v5543, 7
      %v5545 = vsub.s32 %v5542, %v5544
      %v5546 = vrot.slane %v5518, %v5545
      %v5547 = vcombine.low %v5525, %v5532
      %v5548 = vcombine.low %v5539, %v5546
      %v5550 = vunpack.c.l.s4 1966171168
      %v5551 = vunpack.c.0.s8 %v5550
      %v5552 = vlaneseq
      %v5553 = vshrl.u32 %v5552, 7
      %v5554 = vsub.s32 %v5551, %v5553
      %v5555 = vrot.slane %v5547, %v5554
      %v5557 = vunpack.c.l.s4 1966171168
      %v5558 = vunpack.c.0.s8 %v5557
      %v5559 = vlaneseq
      %v5560 = vshrl.u32 %v5559, 7
      %v5561 = vsub.s32 %v5558, %v5560
      %v5562 = vrot.slane %v5548, %v5561
      %v5563 = vcombine.low %v5555, %v5562
      %v5564 = vcombine.low %v3793, %v3797
      %v5565 = vcombine.low %v3801, %v3805
      %v5566 = vcombine.low %v3809, %v3813
      %v5567 = vcombine.low %v3817, %v3821
      %v5569 = vunpack.c.l.s4 1966171168
      %v5570 = vunpack.c.0.s8 %v5569
      %v5571 = vlaneseq
      %v5572 = vshrl.u32 %v5571, 7
      %v5573 = vsub.s32 %v5570, %v5572
      %v5574 = vrot.slane %v5564, %v5573
      %v5576 = vunpack.c.l.s4 1966171168
      %v5577 = vunpack.c.0.s8 %v5576
      %v5578 = vlaneseq
      %v5579 = vshrl.u32 %v5578, 7
      %v5580 = vsub.s32 %v5577, %v5579
      %v5581 = vrot.slane %v5565, %v5580
      %v5583 = vunpack.c.l.s4 1966171168
      %v5584 = vunpack.c.0.s8 %v5583
      %v5585 = vlaneseq
      %v5586 = vshrl.u32 %v5585, 7
      %v5587 = vsub.s32 %v5584, %v5586
      %v5588 = vrot.slane %v5566, %v5587
      %v5590 = vunpack.c.l.s4 1966171168
      %v5591 = vunpack.c.0.s8 %v5590
      %v5592 = vlaneseq
      %v5593 = vshrl.u32 %v5592, 7
      %v5594 = vsub.s32 %v5591, %v5593
      %v5595 = vrot.slane %v5567, %v5594
      %v5596 = vcombine.low %v5574, %v5581
      %v5597 = vcombine.low %v5588, %v5595
      %v5599 = vunpack.c.l.s4 1966171168
      %v5600 = vunpack.c.0.s8 %v5599
      %v5601 = vlaneseq
      %v5602 = vshrl.u32 %v5601, 7
      %v5603 = vsub.s32 %v5600, %v5602
      %v5604 = vrot.slane %v5596, %v5603
      %v5606 = vunpack.c.l.s4 1966171168
      %v5607 = vunpack.c.0.s8 %v5606
      %v5608 = vlaneseq
      %v5609 = vshrl.u32 %v5608, 7
      %v5610 = vsub.s32 %v5607, %v5609
      %v5611 = vrot.slane %v5597, %v5610
      %v5612 = vcombine.low %v5604, %v5611
      %v5613 = vcombine.low %v3825, %v3829
      %v5614 = vcombine.low %v3833, %v3837
      %v5615 = vcombine.low %v3841, %v3845
      %v5616 = vcombine.low %v3849, %v3853
      %v5618 = vunpack.c.l.s4 1966171168
      %v5619 = vunpack.c.0.s8 %v5618
      %v5620 = vlaneseq
      %v5621 = vshrl.u32 %v5620, 7
      %v5622 = vsub.s32 %v5619, %v5621
      %v5623 = vrot.slane %v5613, %v5622
      %v5625 = vunpack.c.l.s4 1966171168
      %v5626 = vunpack.c.0.s8 %v5625
      %v5627 = vlaneseq
      %v5628 = vshrl.u32 %v5627, 7
      %v5629 = vsub.s32 %v5626, %v5628
      %v5630 = vrot.slane %v5614, %v5629
      %v5632 = vunpack.c.l.s4 1966171168
      %v5633 = vunpack.c.0.s8 %v5632
      %v5634 = vlaneseq
      %v5635 = vshrl.u32 %v5634, 7
      %v5636 = vsub.s32 %v5633, %v5635
      %v5637 = vrot.slane %v5615, %v5636
      %v5639 = vunpack.c.l.s4 1966171168
      %v5640 = vunpack.c.0.s8 %v5639
      %v5641 = vlaneseq
      %v5642 = vshrl.u32 %v5641, 7
      %v5643 = vsub.s32 %v5640, %v5642
      %v5644 = vrot.slane %v5616, %v5643
      %v5645 = vcombine.low %v5623, %v5630
      %v5646 = vcombine.low %v5637, %v5644
      %v5648 = vunpack.c.l.s4 1966171168
      %v5649 = vunpack.c.0.s8 %v5648
      %v5650 = vlaneseq
      %v5651 = vshrl.u32 %v5650, 7
      %v5652 = vsub.s32 %v5649, %v5651
      %v5653 = vrot.slane %v5645, %v5652
      %v5655 = vunpack.c.l.s4 1966171168
      %v5656 = vunpack.c.0.s8 %v5655
      %v5657 = vlaneseq
      %v5658 = vshrl.u32 %v5657, 7
      %v5659 = vsub.s32 %v5656, %v5658
      %v5660 = vrot.slane %v5646, %v5659
      %v5661 = vcombine.low %v5653, %v5660
      %v5662 = vcombine.low %v3857, %v3861
      %v5663 = vcombine.low %v3865, %v3869
      %v5664 = vcombine.low %v3873, %v3877
      %v5665 = vcombine.low %v3881, %v3885
      %v5667 = vunpack.c.l.s4 1966171168
      %v5668 = vunpack.c.0.s8 %v5667
      %v5669 = vlaneseq
      %v5670 = vshrl.u32 %v5669, 7
      %v5671 = vsub.s32 %v5668, %v5670
      %v5672 = vrot.slane %v5662, %v5671
      %v5674 = vunpack.c.l.s4 1966171168
      %v5675 = vunpack.c.0.s8 %v5674
      %v5676 = vlaneseq
      %v5677 = vshrl.u32 %v5676, 7
      %v5678 = vsub.s32 %v5675, %v5677
      %v5679 = vrot.slane %v5663, %v5678
      %v5681 = vunpack.c.l.s4 1966171168
      %v5682 = vunpack.c.0.s8 %v5681
      %v5683 = vlaneseq
      %v5684 = vshrl.u32 %v5683, 7
      %v5685 = vsub.s32 %v5682, %v5684
      %v5686 = vrot.slane %v5664, %v5685
      %v5688 = vunpack.c.l.s4 1966171168
      %v5689 = vunpack.c.0.s8 %v5688
      %v5690 = vlaneseq
      %v5691 = vshrl.u32 %v5690, 7
      %v5692 = vsub.s32 %v5689, %v5691
      %v5693 = vrot.slane %v5665, %v5692
      %v5694 = vcombine.low %v5672, %v5679
      %v5695 = vcombine.low %v5686, %v5693
      %v5697 = vunpack.c.l.s4 1966171168
      %v5698 = vunpack.c.0.s8 %v5697
      %v5699 = vlaneseq
      %v5700 = vshrl.u32 %v5699, 7
      %v5701 = vsub.s32 %v5698, %v5700
      %v5702 = vrot.slane %v5694, %v5701
      %v5704 = vunpack.c.l.s4 1966171168
      %v5705 = vunpack.c.0.s8 %v5704
      %v5706 = vlaneseq
      %v5707 = vshrl.u32 %v5706, 7
      %v5708 = vsub.s32 %v5705, %v5707
      %v5709 = vrot.slane %v5695, %v5708
      %v5710 = vcombine.low %v5702, %v5709
      %v5711 = vcombine.low %v3889, %v3893
      %v5712 = vcombine.low %v3897, %v3901
      %v5713 = vcombine.low %v3905, %v3909
      %v5714 = vcombine.low %v3913, %v3917
      %v5716 = vunpack.c.l.s4 1966171168
      %v5717 = vunpack.c.0.s8 %v5716
      %v5718 = vlaneseq
      %v5719 = vshrl.u32 %v5718, 7
      %v5720 = vsub.s32 %v5717, %v5719
      %v5721 = vrot.slane %v5711, %v5720
      %v5723 = vunpack.c.l.s4 1966171168
      %v5724 = vunpack.c.0.s8 %v5723
      %v5725 = vlaneseq
      %v5726 = vshrl.u32 %v5725, 7
      %v5727 = vsub.s32 %v5724, %v5726
      %v5728 = vrot.slane %v5712, %v5727
      %v5730 = vunpack.c.l.s4 1966171168
      %v5731 = vunpack.c.0.s8 %v5730
      %v5732 = vlaneseq
      %v5733 = vshrl.u32 %v5732, 7
      %v5734 = vsub.s32 %v5731, %v5733
      %v5735 = vrot.slane %v5713, %v5734
      %v5737 = vunpack.c.l.s4 1966171168
      %v5738 = vunpack.c.0.s8 %v5737
      %v5739 = vlaneseq
      %v5740 = vshrl.u32 %v5739, 7
      %v5741 = vsub.s32 %v5738, %v5740
      %v5742 = vrot.slane %v5714, %v5741
      %v5743 = vcombine.low %v5721, %v5728
      %v5744 = vcombine.low %v5735, %v5742
      %v5746 = vunpack.c.l.s4 1966171168
      %v5747 = vunpack.c.0.s8 %v5746
      %v5748 = vlaneseq
      %v5749 = vshrl.u32 %v5748, 7
      %v5750 = vsub.s32 %v5747, %v5749
      %v5751 = vrot.slane %v5743, %v5750
      %v5753 = vunpack.c.l.s4 1966171168
      %v5754 = vunpack.c.0.s8 %v5753
      %v5755 = vlaneseq
      %v5756 = vshrl.u32 %v5755, 7
      %v5757 = vsub.s32 %v5754, %v5756
      %v5758 = vrot.slane %v5744, %v5757
      %v5759 = vcombine.low %v5751, %v5758
      %v5760 = vcombine.low %v3921, %v3925
      %v5761 = vcombine.low %v3929, %v3933
      %v5762 = vcombine.low %v3937, %v3941
      %v5763 = vcombine.low %v3945, %v3949
      %v5765 = vunpack.c.l.s4 1966171168
      %v5766 = vunpack.c.0.s8 %v5765
      %v5767 = vlaneseq
      %v5768 = vshrl.u32 %v5767, 7
      %v5769 = vsub.s32 %v5766, %v5768
      %v5770 = vrot.slane %v5760, %v5769
      %v5772 = vunpack.c.l.s4 1966171168
      %v5773 = vunpack.c.0.s8 %v5772
      %v5774 = vlaneseq
      %v5775 = vshrl.u32 %v5774, 7
      %v5776 = vsub.s32 %v5773, %v5775
      %v5777 = vrot.slane %v5761, %v5776
      %v5779 = vunpack.c.l.s4 1966171168
      %v5780 = vunpack.c.0.s8 %v5779
      %v5781 = vlaneseq
      %v5782 = vshrl.u32 %v5781, 7
      %v5783 = vsub.s32 %v5780, %v5782
      %v5784 = vrot.slane %v5762, %v5783
      %v5786 = vunpack.c.l.s4 1966171168
      %v5787 = vunpack.c.0.s8 %v5786
      %v5788 = vlaneseq
      %v5789 = vshrl.u32 %v5788, 7
      %v5790 = vsub.s32 %v5787, %v5789
      %v5791 = vrot.slane %v5763, %v5790
      %v5792 = vcombine.low %v5770, %v5777
      %v5793 = vcombine.low %v5784, %v5791
      %v5795 = vunpack.c.l.s4 1966171168
      %v5796 = vunpack.c.0.s8 %v5795
      %v5797 = vlaneseq
      %v5798 = vshrl.u32 %v5797, 7
      %v5799 = vsub.s32 %v5796, %v5798
      %v5800 = vrot.slane %v5792, %v5799
      %v5802 = vunpack.c.l.s4 1966171168
      %v5803 = vunpack.c.0.s8 %v5802
      %v5804 = vlaneseq
      %v5805 = vshrl.u32 %v5804, 7
      %v5806 = vsub.s32 %v5803, %v5805
      %v5807 = vrot.slane %v5793, %v5806
      %v5808 = vcombine.low %v5800, %v5807
      %v5809 = vcombine.low %v3953, %v3957
      %v5810 = vcombine.low %v3961, %v3965
      %v5811 = vcombine.low %v3969, %v3973
      %v5812 = vcombine.low %v3977, %v3981
      %v5814 = vunpack.c.l.s4 1966171168
      %v5815 = vunpack.c.0.s8 %v5814
      %v5816 = vlaneseq
      %v5817 = vshrl.u32 %v5816, 7
      %v5818 = vsub.s32 %v5815, %v5817
      %v5819 = vrot.slane %v5809, %v5818
      %v5821 = vunpack.c.l.s4 1966171168
      %v5822 = vunpack.c.0.s8 %v5821
      %v5823 = vlaneseq
      %v5824 = vshrl.u32 %v5823, 7
      %v5825 = vsub.s32 %v5822, %v5824
      %v5826 = vrot.slane %v5810, %v5825
      %v5828 = vunpack.c.l.s4 1966171168
      %v5829 = vunpack.c.0.s8 %v5828
      %v5830 = vlaneseq
      %v5831 = vshrl.u32 %v5830, 7
      %v5832 = vsub.s32 %v5829, %v5831
      %v5833 = vrot.slane %v5811, %v5832
      %v5835 = vunpack.c.l.s4 1966171168
      %v5836 = vunpack.c.0.s8 %v5835
      %v5837 = vlaneseq
      %v5838 = vshrl.u32 %v5837, 7
      %v5839 = vsub.s32 %v5836, %v5838
      %v5840 = vrot.slane %v5812, %v5839
      %v5841 = vcombine.low %v5819, %v5826
      %v5842 = vcombine.low %v5833, %v5840
      %v5844 = vunpack.c.l.s4 1966171168
      %v5845 = vunpack.c.0.s8 %v5844
      %v5846 = vlaneseq
      %v5847 = vshrl.u32 %v5846, 7
      %v5848 = vsub.s32 %v5845, %v5847
      %v5849 = vrot.slane %v5841, %v5848
      %v5851 = vunpack.c.l.s4 1966171168
      %v5852 = vunpack.c.0.s8 %v5851
      %v5853 = vlaneseq
      %v5854 = vshrl.u32 %v5853, 7
      %v5855 = vsub.s32 %v5852, %v5854
      %v5856 = vrot.slane %v5842, %v5855
      %v5857 = vcombine.low %v5849, %v5856
      %v5858 = vcombine.low %v3985, %v3989
      %v5859 = vcombine.low %v3993, %v3997
      %v5860 = vcombine.low %v4001, %v4005
      %v5861 = vcombine.low %v4009, %v4013
      %v5863 = vunpack.c.l.s4 1966171168
      %v5864 = vunpack.c.0.s8 %v5863
      %v5865 = vlaneseq
      %v5866 = vshrl.u32 %v5865, 7
      %v5867 = vsub.s32 %v5864, %v5866
      %v5868 = vrot.slane %v5858, %v5867
      %v5870 = vunpack.c.l.s4 1966171168
      %v5871 = vunpack.c.0.s8 %v5870
      %v5872 = vlaneseq
      %v5873 = vshrl.u32 %v5872, 7
      %v5874 = vsub.s32 %v5871, %v5873
      %v5875 = vrot.slane %v5859, %v5874
      %v5877 = vunpack.c.l.s4 1966171168
      %v5878 = vunpack.c.0.s8 %v5877
      %v5879 = vlaneseq
      %v5880 = vshrl.u32 %v5879, 7
      %v5881 = vsub.s32 %v5878, %v5880
      %v5882 = vrot.slane %v5860, %v5881
      %v5884 = vunpack.c.l.s4 1966171168
      %v5885 = vunpack.c.0.s8 %v5884
      %v5886 = vlaneseq
      %v5887 = vshrl.u32 %v5886, 7
      %v5888 = vsub.s32 %v5885, %v5887
      %v5889 = vrot.slane %v5861, %v5888
      %v5890 = vcombine.low %v5868, %v5875
      %v5891 = vcombine.low %v5882, %v5889
      %v5893 = vunpack.c.l.s4 1966171168
      %v5894 = vunpack.c.0.s8 %v5893
      %v5895 = vlaneseq
      %v5896 = vshrl.u32 %v5895, 7
      %v5897 = vsub.s32 %v5894, %v5896
      %v5898 = vrot.slane %v5890, %v5897
      %v5900 = vunpack.c.l.s4 1966171168
      %v5901 = vunpack.c.0.s8 %v5900
      %v5902 = vlaneseq
      %v5903 = vshrl.u32 %v5902, 7
      %v5904 = vsub.s32 %v5901, %v5903
      %v5905 = vrot.slane %v5891, %v5904
      %v5906 = vcombine.low %v5898, %v5905
      %v5907 = vcombine.low %v4017, %v4021
      %v5908 = vcombine.low %v4025, %v4029
      %v5909 = vcombine.low %v4033, %v4037
      %v5910 = vcombine.low %v4041, %v4045
      %v5912 = vunpack.c.l.s4 1966171168
      %v5913 = vunpack.c.0.s8 %v5912
      %v5914 = vlaneseq
      %v5915 = vshrl.u32 %v5914, 7
      %v5916 = vsub.s32 %v5913, %v5915
      %v5917 = vrot.slane %v5907, %v5916
      %v5919 = vunpack.c.l.s4 1966171168
      %v5920 = vunpack.c.0.s8 %v5919
      %v5921 = vlaneseq
      %v5922 = vshrl.u32 %v5921, 7
      %v5923 = vsub.s32 %v5920, %v5922
      %v5924 = vrot.slane %v5908, %v5923
      %v5926 = vunpack.c.l.s4 1966171168
      %v5927 = vunpack.c.0.s8 %v5926
      %v5928 = vlaneseq
      %v5929 = vshrl.u32 %v5928, 7
      %v5930 = vsub.s32 %v5927, %v5929
      %v5931 = vrot.slane %v5909, %v5930
      %v5933 = vunpack.c.l.s4 1966171168
      %v5934 = vunpack.c.0.s8 %v5933
      %v5935 = vlaneseq
      %v5936 = vshrl.u32 %v5935, 7
      %v5937 = vsub.s32 %v5934, %v5936
      %v5938 = vrot.slane %v5910, %v5937
      %v5939 = vcombine.low %v5917, %v5924
      %v5940 = vcombine.low %v5931, %v5938
      %v5942 = vunpack.c.l.s4 1966171168
      %v5943 = vunpack.c.0.s8 %v5942
      %v5944 = vlaneseq
      %v5945 = vshrl.u32 %v5944, 7
      %v5946 = vsub.s32 %v5943, %v5945
      %v5947 = vrot.slane %v5939, %v5946
      %v5949 = vunpack.c.l.s4 1966171168
      %v5950 = vunpack.c.0.s8 %v5949
      %v5951 = vlaneseq
      %v5952 = vshrl.u32 %v5951, 7
      %v5953 = vsub.s32 %v5950, %v5952
      %v5954 = vrot.slane %v5940, %v5953
      %v5955 = vcombine.low %v5947, %v5954
      %v5956 = vcombine.low %v4049, %v4053
      %v5957 = vcombine.low %v4057, %v4061
      %v5958 = vcombine.low %v4065, %v4069
      %v5959 = vcombine.low %v4073, %v4077
      %v5961 = vunpack.c.l.s4 1966171168
      %v5962 = vunpack.c.0.s8 %v5961
      %v5963 = vlaneseq
      %v5964 = vshrl.u32 %v5963, 7
      %v5965 = vsub.s32 %v5962, %v5964
      %v5966 = vrot.slane %v5956, %v5965
      %v5968 = vunpack.c.l.s4 1966171168
      %v5969 = vunpack.c.0.s8 %v5968
      %v5970 = vlaneseq
      %v5971 = vshrl.u32 %v5970, 7
      %v5972 = vsub.s32 %v5969, %v5971
      %v5973 = vrot.slane %v5957, %v5972
      %v5975 = vunpack.c.l.s4 1966171168
      %v5976 = vunpack.c.0.s8 %v5975
      %v5977 = vlaneseq
      %v5978 = vshrl.u32 %v5977, 7
      %v5979 = vsub.s32 %v5976, %v5978
      %v5980 = vrot.slane %v5958, %v5979
      %v5982 = vunpack.c.l.s4 1966171168
      %v5983 = vunpack.c.0.s8 %v5982
      %v5984 = vlaneseq
      %v5985 = vshrl.u32 %v5984, 7
      %v5986 = vsub.s32 %v5983, %v5985
      %v5987 = vrot.slane %v5959, %v5986
      %v5988 = vcombine.low %v5966, %v5973
      %v5989 = vcombine.low %v5980, %v5987
      %v5991 = vunpack.c.l.s4 1966171168
      %v5992 = vunpack.c.0.s8 %v5991
      %v5993 = vlaneseq
      %v5994 = vshrl.u32 %v5993, 7
      %v5995 = vsub.s32 %v5992, %v5994
      %v5996 = vrot.slane %v5988, %v5995
      %v5998 = vunpack.c.l.s4 1966171168
      %v5999 = vunpack.c.0.s8 %v5998
      %v6000 = vlaneseq
      %v6001 = vshrl.u32 %v6000, 7
      %v6002 = vsub.s32 %v5999, %v6001
      %v6003 = vrot.slane %v5989, %v6002
      %v6004 = vcombine.low %v5996, %v6003
      %v6005 = vcombine.low %v4081, %v4085
      %v6006 = vcombine.low %v4089, %v4093
      %v6007 = vcombine.low %v4097, %v4101
      %v6008 = vcombine.low %v4105, %v4109
      %v6010 = vunpack.c.l.s4 1966171168
      %v6011 = vunpack.c.0.s8 %v6010
      %v6012 = vlaneseq
      %v6013 = vshrl.u32 %v6012, 7
      %v6014 = vsub.s32 %v6011, %v6013
      %v6015 = vrot.slane %v6005, %v6014
      %v6017 = vunpack.c.l.s4 1966171168
      %v6018 = vunpack.c.0.s8 %v6017
      %v6019 = vlaneseq
      %v6020 = vshrl.u32 %v6019, 7
      %v6021 = vsub.s32 %v6018, %v6020
      %v6022 = vrot.slane %v6006, %v6021
      %v6024 = vunpack.c.l.s4 1966171168
      %v6025 = vunpack.c.0.s8 %v6024
      %v6026 = vlaneseq
      %v6027 = vshrl.u32 %v6026, 7
      %v6028 = vsub.s32 %v6025, %v6027
      %v6029 = vrot.slane %v6007, %v6028
      %v6031 = vunpack.c.l.s4 1966171168
      %v6032 = vunpack.c.0.s8 %v6031
      %v6033 = vlaneseq
      %v6034 = vshrl.u32 %v6033, 7
      %v6035 = vsub.s32 %v6032, %v6034
      %v6036 = vrot.slane %v6008, %v6035
      %v6037 = vcombine.low %v6015, %v6022
      %v6038 = vcombine.low %v6029, %v6036
      %v6040 = vunpack.c.l.s4 1966171168
      %v6041 = vunpack.c.0.s8 %v6040
      %v6042 = vlaneseq
      %v6043 = vshrl.u32 %v6042, 7
      %v6044 = vsub.s32 %v6041, %v6043
      %v6045 = vrot.slane %v6037, %v6044
      %v6047 = vunpack.c.l.s4 1966171168
      %v6048 = vunpack.c.0.s8 %v6047
      %v6049 = vlaneseq
      %v6050 = vshrl.u32 %v6049, 7
      %v6051 = vsub.s32 %v6048, %v6050
      %v6052 = vrot.slane %v6038, %v6051
      %v6053 = vcombine.low %v6045, %v6052
      %v6054 = vcombine.low %v4113, %v4117
      %v6055 = vcombine.low %v4121, %v4125
      %v6056 = vcombine.low %v4129, %v4133
      %v6057 = vcombine.low %v4137, %v4141
      %v6059 = vunpack.c.l.s4 1966171168
      %v6060 = vunpack.c.0.s8 %v6059
      %v6061 = vlaneseq
      %v6062 = vshrl.u32 %v6061, 7
      %v6063 = vsub.s32 %v6060, %v6062
      %v6064 = vrot.slane %v6054, %v6063
      %v6066 = vunpack.c.l.s4 1966171168
      %v6067 = vunpack.c.0.s8 %v6066
      %v6068 = vlaneseq
      %v6069 = vshrl.u32 %v6068, 7
      %v6070 = vsub.s32 %v6067, %v6069
      %v6071 = vrot.slane %v6055, %v6070
      %v6073 = vunpack.c.l.s4 1966171168
      %v6074 = vunpack.c.0.s8 %v6073
      %v6075 = vlaneseq
      %v6076 = vshrl.u32 %v6075, 7
      %v6077 = vsub.s32 %v6074, %v6076
      %v6078 = vrot.slane %v6056, %v6077
      %v6080 = vunpack.c.l.s4 1966171168
      %v6081 = vunpack.c.0.s8 %v6080
      %v6082 = vlaneseq
      %v6083 = vshrl.u32 %v6082, 7
      %v6084 = vsub.s32 %v6081, %v6083
      %v6085 = vrot.slane %v6057, %v6084
      %v6086 = vcombine.low %v6064, %v6071
      %v6087 = vcombine.low %v6078, %v6085
      %v6089 = vunpack.c.l.s4 1966171168
      %v6090 = vunpack.c.0.s8 %v6089
      %v6091 = vlaneseq
      %v6092 = vshrl.u32 %v6091, 7
      %v6093 = vsub.s32 %v6090, %v6092
      %v6094 = vrot.slane %v6086, %v6093
      %v6096 = vunpack.c.l.s4 1966171168
      %v6097 = vunpack.c.0.s8 %v6096
      %v6098 = vlaneseq
      %v6099 = vshrl.u32 %v6098, 7
      %v6100 = vsub.s32 %v6097, %v6099
      %v6101 = vrot.slane %v6087, %v6100
      %v6102 = vcombine.low %v6094, %v6101
      %v6103 = vcombine.low %v4145, %v4149
      %v6104 = vcombine.low %v4153, %v4157
      %v6105 = vcombine.low %v4161, %v4165
      %v6106 = vcombine.low %v4169, %v4173
      %v6108 = vunpack.c.l.s4 1966171168
      %v6109 = vunpack.c.0.s8 %v6108
      %v6110 = vlaneseq
      %v6111 = vshrl.u32 %v6110, 7
      %v6112 = vsub.s32 %v6109, %v6111
      %v6113 = vrot.slane %v6103, %v6112
      %v6115 = vunpack.c.l.s4 1966171168
      %v6116 = vunpack.c.0.s8 %v6115
      %v6117 = vlaneseq
      %v6118 = vshrl.u32 %v6117, 7
      %v6119 = vsub.s32 %v6116, %v6118
      %v6120 = vrot.slane %v6104, %v6119
      %v6122 = vunpack.c.l.s4 1966171168
      %v6123 = vunpack.c.0.s8 %v6122
      %v6124 = vlaneseq
      %v6125 = vshrl.u32 %v6124, 7
      %v6126 = vsub.s32 %v6123, %v6125
      %v6127 = vrot.slane %v6105, %v6126
      %v6129 = vunpack.c.l.s4 1966171168
      %v6130 = vunpack.c.0.s8 %v6129
      %v6131 = vlaneseq
      %v6132 = vshrl.u32 %v6131, 7
      %v6133 = vsub.s32 %v6130, %v6132
      %v6134 = vrot.slane %v6106, %v6133
      %v6135 = vcombine.low %v6113, %v6120
      %v6136 = vcombine.low %v6127, %v6134
      %v6138 = vunpack.c.l.s4 1966171168
      %v6139 = vunpack.c.0.s8 %v6138
      %v6140 = vlaneseq
      %v6141 = vshrl.u32 %v6140, 7
      %v6142 = vsub.s32 %v6139, %v6141
      %v6143 = vrot.slane %v6135, %v6142
      %v6145 = vunpack.c.l.s4 1966171168
      %v6146 = vunpack.c.0.s8 %v6145
      %v6147 = vlaneseq
      %v6148 = vshrl.u32 %v6147, 7
      %v6149 = vsub.s32 %v6146, %v6148
      %v6150 = vrot.slane %v6136, %v6149
      %v6151 = vcombine.low %v6143, %v6150
      %v6152 = vcombine.low %v4177, %v4181
      %v6153 = vcombine.low %v4185, %v4189
      %v6154 = vcombine.low %v4193, %v4197
      %v6155 = vcombine.low %v4201, %v4205
      %v6157 = vunpack.c.l.s4 1966171168
      %v6158 = vunpack.c.0.s8 %v6157
      %v6159 = vlaneseq
      %v6160 = vshrl.u32 %v6159, 7
      %v6161 = vsub.s32 %v6158, %v6160
      %v6162 = vrot.slane %v6152, %v6161
      %v6164 = vunpack.c.l.s4 1966171168
      %v6165 = vunpack.c.0.s8 %v6164
      %v6166 = vlaneseq
      %v6167 = vshrl.u32 %v6166, 7
      %v6168 = vsub.s32 %v6165, %v6167
      %v6169 = vrot.slane %v6153, %v6168
      %v6171 = vunpack.c.l.s4 1966171168
      %v6172 = vunpack.c.0.s8 %v6171
      %v6173 = vlaneseq
      %v6174 = vshrl.u32 %v6173, 7
      %v6175 = vsub.s32 %v6172, %v6174
      %v6176 = vrot.slane %v6154, %v6175
      %v6178 = vunpack.c.l.s4 1966171168
      %v6179 = vunpack.c.0.s8 %v6178
      %v6180 = vlaneseq
      %v6181 = vshrl.u32 %v6180, 7
      %v6182 = vsub.s32 %v6179, %v6181
      %v6183 = vrot.slane %v6155, %v6182
      %v6184 = vcombine.low %v6162, %v6169
      %v6185 = vcombine.low %v6176, %v6183
      %v6187 = vunpack.c.l.s4 1966171168
      %v6188 = vunpack.c.0.s8 %v6187
      %v6189 = vlaneseq
      %v6190 = vshrl.u32 %v6189, 7
      %v6191 = vsub.s32 %v6188, %v6190
      %v6192 = vrot.slane %v6184, %v6191
      %v6194 = vunpack.c.l.s4 1966171168
      %v6195 = vunpack.c.0.s8 %v6194
      %v6196 = vlaneseq
      %v6197 = vshrl.u32 %v6196, 7
      %v6198 = vsub.s32 %v6195, %v6197
      %v6199 = vrot.slane %v6185, %v6198
      %v6200 = vcombine.low %v6192, %v6199
      %v6201 = vcombine.low %v4209, %v4213
      %v6202 = vcombine.low %v4217, %v4221
      %v6203 = vcombine.low %v4225, %v4229
      %v6204 = vcombine.low %v4233, %v4237
      %v6206 = vunpack.c.l.s4 1966171168
      %v6207 = vunpack.c.0.s8 %v6206
      %v6208 = vlaneseq
      %v6209 = vshrl.u32 %v6208, 7
      %v6210 = vsub.s32 %v6207, %v6209
      %v6211 = vrot.slane %v6201, %v6210
      %v6213 = vunpack.c.l.s4 1966171168
      %v6214 = vunpack.c.0.s8 %v6213
      %v6215 = vlaneseq
      %v6216 = vshrl.u32 %v6215, 7
      %v6217 = vsub.s32 %v6214, %v6216
      %v6218 = vrot.slane %v6202, %v6217
      %v6220 = vunpack.c.l.s4 1966171168
      %v6221 = vunpack.c.0.s8 %v6220
      %v6222 = vlaneseq
      %v6223 = vshrl.u32 %v6222, 7
      %v6224 = vsub.s32 %v6221, %v6223
      %v6225 = vrot.slane %v6203, %v6224
      %v6227 = vunpack.c.l.s4 1966171168
      %v6228 = vunpack.c.0.s8 %v6227
      %v6229 = vlaneseq
      %v6230 = vshrl.u32 %v6229, 7
      %v6231 = vsub.s32 %v6228, %v6230
      %v6232 = vrot.slane %v6204, %v6231
      %v6233 = vcombine.low %v6211, %v6218
      %v6234 = vcombine.low %v6225, %v6232
      %v6236 = vunpack.c.l.s4 1966171168
      %v6237 = vunpack.c.0.s8 %v6236
      %v6238 = vlaneseq
      %v6239 = vshrl.u32 %v6238, 7
      %v6240 = vsub.s32 %v6237, %v6239
      %v6241 = vrot.slane %v6233, %v6240
      %v6243 = vunpack.c.l.s4 1966171168
      %v6244 = vunpack.c.0.s8 %v6243
      %v6245 = vlaneseq
      %v6246 = vshrl.u32 %v6245, 7
      %v6247 = vsub.s32 %v6244, %v6246
      %v6248 = vrot.slane %v6234, %v6247
      %v6249 = vcombine.low %v6241, %v6248
      %v6250 = vcombine.low %v4241, %v4245
      %v6251 = vcombine.low %v4249, %v4253
      %v6252 = vcombine.low %v4257, %v4261
      %v6253 = vcombine.low %v4265, %v4269
      %v6255 = vunpack.c.l.s4 1966171168
      %v6256 = vunpack.c.0.s8 %v6255
      %v6257 = vlaneseq
      %v6258 = vshrl.u32 %v6257, 7
      %v6259 = vsub.s32 %v6256, %v6258
      %v6260 = vrot.slane %v6250, %v6259
      %v6262 = vunpack.c.l.s4 1966171168
      %v6263 = vunpack.c.0.s8 %v6262
      %v6264 = vlaneseq
      %v6265 = vshrl.u32 %v6264, 7
      %v6266 = vsub.s32 %v6263, %v6265
      %v6267 = vrot.slane %v6251, %v6266
      %v6269 = vunpack.c.l.s4 1966171168
      %v6270 = vunpack.c.0.s8 %v6269
      %v6271 = vlaneseq
      %v6272 = vshrl.u32 %v6271, 7
      %v6273 = vsub.s32 %v6270, %v6272
      %v6274 = vrot.slane %v6252, %v6273
      %v6276 = vunpack.c.l.s4 1966171168
      %v6277 = vunpack.c.0.s8 %v6276
      %v6278 = vlaneseq
      %v6279 = vshrl.u32 %v6278, 7
      %v6280 = vsub.s32 %v6277, %v6279
      %v6281 = vrot.slane %v6253, %v6280
      %v6282 = vcombine.low %v6260, %v6267
      %v6283 = vcombine.low %v6274, %v6281
      %v6285 = vunpack.c.l.s4 1966171168
      %v6286 = vunpack.c.0.s8 %v6285
      %v6287 = vlaneseq
      %v6288 = vshrl.u32 %v6287, 7
      %v6289 = vsub.s32 %v6286, %v6288
      %v6290 = vrot.slane %v6282, %v6289
      %v6292 = vunpack.c.l.s4 1966171168
      %v6293 = vunpack.c.0.s8 %v6292
      %v6294 = vlaneseq
      %v6295 = vshrl.u32 %v6294, 7
      %v6296 = vsub.s32 %v6293, %v6295
      %v6297 = vrot.slane %v6283, %v6296
      %v6298 = vcombine.low %v6290, %v6297
      %v6299 = vcombine.low %v4273, %v4277
      %v6300 = vcombine.low %v4281, %v4285
      %v6301 = vcombine.low %v4289, %v4293
      %v6302 = vcombine.low %v4297, %v4301
      %v6304 = vunpack.c.l.s4 1966171168
      %v6305 = vunpack.c.0.s8 %v6304
      %v6306 = vlaneseq
      %v6307 = vshrl.u32 %v6306, 7
      %v6308 = vsub.s32 %v6305, %v6307
      %v6309 = vrot.slane %v6299, %v6308
      %v6311 = vunpack.c.l.s4 1966171168
      %v6312 = vunpack.c.0.s8 %v6311
      %v6313 = vlaneseq
      %v6314 = vshrl.u32 %v6313, 7
      %v6315 = vsub.s32 %v6312, %v6314
      %v6316 = vrot.slane %v6300, %v6315
      %v6318 = vunpack.c.l.s4 1966171168
      %v6319 = vunpack.c.0.s8 %v6318
      %v6320 = vlaneseq
      %v6321 = vshrl.u32 %v6320, 7
      %v6322 = vsub.s32 %v6319, %v6321
      %v6323 = vrot.slane %v6301, %v6322
      %v6325 = vunpack.c.l.s4 1966171168
      %v6326 = vunpack.c.0.s8 %v6325
      %v6327 = vlaneseq
      %v6328 = vshrl.u32 %v6327, 7
      %v6329 = vsub.s32 %v6326, %v6328
      %v6330 = vrot.slane %v6302, %v6329
      %v6331 = vcombine.low %v6309, %v6316
      %v6332 = vcombine.low %v6323, %v6330
      %v6334 = vunpack.c.l.s4 1966171168
      %v6335 = vunpack.c.0.s8 %v6334
      %v6336 = vlaneseq
      %v6337 = vshrl.u32 %v6336, 7
      %v6338 = vsub.s32 %v6335, %v6337
      %v6339 = vrot.slane %v6331, %v6338
      %v6341 = vunpack.c.l.s4 1966171168
      %v6342 = vunpack.c.0.s8 %v6341
      %v6343 = vlaneseq
      %v6344 = vshrl.u32 %v6343, 7
      %v6345 = vsub.s32 %v6342, %v6344
      %v6346 = vrot.slane %v6332, %v6345
      %v6347 = vcombine.low %v6339, %v6346
      %v6348 = vcombine.low %v4305, %v4309
      %v6349 = vcombine.low %v4313, %v4317
      %v6350 = vcombine.low %v4321, %v4325
      %v6351 = vcombine.low %v4329, %v4333
      %v6353 = vunpack.c.l.s4 1966171168
      %v6354 = vunpack.c.0.s8 %v6353
      %v6355 = vlaneseq
      %v6356 = vshrl.u32 %v6355, 7
      %v6357 = vsub.s32 %v6354, %v6356
      %v6358 = vrot.slane %v6348, %v6357
      %v6360 = vunpack.c.l.s4 1966171168
      %v6361 = vunpack.c.0.s8 %v6360
      %v6362 = vlaneseq
      %v6363 = vshrl.u32 %v6362, 7
      %v6364 = vsub.s32 %v6361, %v6363
      %v6365 = vrot.slane %v6349, %v6364
      %v6367 = vunpack.c.l.s4 1966171168
      %v6368 = vunpack.c.0.s8 %v6367
      %v6369 = vlaneseq
      %v6370 = vshrl.u32 %v6369, 7
      %v6371 = vsub.s32 %v6368, %v6370
      %v6372 = vrot.slane %v6350, %v6371
      %v6374 = vunpack.c.l.s4 1966171168
      %v6375 = vunpack.c.0.s8 %v6374
      %v6376 = vlaneseq
      %v6377 = vshrl.u32 %v6376, 7
      %v6378 = vsub.s32 %v6375, %v6377
      %v6379 = vrot.slane %v6351, %v6378
      %v6380 = vcombine.low %v6358, %v6365
      %v6381 = vcombine.low %v6372, %v6379
      %v6383 = vunpack.c.l.s4 1966171168
      %v6384 = vunpack.c.0.s8 %v6383
      %v6385 = vlaneseq
      %v6386 = vshrl.u32 %v6385, 7
      %v6387 = vsub.s32 %v6384, %v6386
      %v6388 = vrot.slane %v6380, %v6387
      %v6390 = vunpack.c.l.s4 1966171168
      %v6391 = vunpack.c.0.s8 %v6390
      %v6392 = vlaneseq
      %v6393 = vshrl.u32 %v6392, 7
      %v6394 = vsub.s32 %v6391, %v6393
      %v6395 = vrot.slane %v6381, %v6394
      %v6396 = vcombine.low %v6388, %v6395
      %v6397 = vcombine.low %v4337, %v4341
      %v6398 = vcombine.low %v4345, %v4349
      %v6399 = vcombine.low %v4353, %v4357
      %v6400 = vcombine.low %v4361, %v4365
      %v6402 = vunpack.c.l.s4 1966171168
      %v6403 = vunpack.c.0.s8 %v6402
      %v6404 = vlaneseq
      %v6405 = vshrl.u32 %v6404, 7
      %v6406 = vsub.s32 %v6403, %v6405
      %v6407 = vrot.slane %v6397, %v6406
      %v6409 = vunpack.c.l.s4 1966171168
      %v6410 = vunpack.c.0.s8 %v6409
      %v6411 = vlaneseq
      %v6412 = vshrl.u32 %v6411, 7
      %v6413 = vsub.s32 %v6410, %v6412
      %v6414 = vrot.slane %v6398, %v6413
      %v6416 = vunpack.c.l.s4 1966171168
      %v6417 = vunpack.c.0.s8 %v6416
      %v6418 = vlaneseq
      %v6419 = vshrl.u32 %v6418, 7
      %v6420 = vsub.s32 %v6417, %v6419
      %v6421 = vrot.slane %v6399, %v6420
      %v6423 = vunpack.c.l.s4 1966171168
      %v6424 = vunpack.c.0.s8 %v6423
      %v6425 = vlaneseq
      %v6426 = vshrl.u32 %v6425, 7
      %v6427 = vsub.s32 %v6424, %v6426
      %v6428 = vrot.slane %v6400, %v6427
      %v6429 = vcombine.low %v6407, %v6414
      %v6430 = vcombine.low %v6421, %v6428
      %v6432 = vunpack.c.l.s4 1966171168
      %v6433 = vunpack.c.0.s8 %v6432
      %v6434 = vlaneseq
      %v6435 = vshrl.u32 %v6434, 7
      %v6436 = vsub.s32 %v6433, %v6435
      %v6437 = vrot.slane %v6429, %v6436
      %v6439 = vunpack.c.l.s4 1966171168
      %v6440 = vunpack.c.0.s8 %v6439
      %v6441 = vlaneseq
      %v6442 = vshrl.u32 %v6441, 7
      %v6443 = vsub.s32 %v6440, %v6442
      %v6444 = vrot.slane %v6430, %v6443
      %v6445 = vcombine.low %v6437, %v6444
      %v6446 = vsel %vm891, %v1352, %v1355
      %v6448 = vshrl.u32 %v4926, 16
      %v6450 = vrot.slane %v6448, 7
      %v6451 = vshll.u32 %v4926, 16
      %v6453 = vor.u32 %v6450, %v6451
      %v6455 = vshrl.u32 %v4975, 16
      %v6457 = vrot.slane %v6455, 7
      %v6458 = vshll.u32 %v4975, 16
      %v6460 = vor.u32 %v6457, %v6458
      %v6461 = vsel %vm891, %v6450, %v6460
      %v6463 = vshrl.u32 %v5024, 16
      %v6465 = vrot.slane %v6463, 7
      %v6466 = vshll.u32 %v5024, 16
      %v6468 = vor.u32 %v6465, %v6466
      %v6470 = vshrl.u32 %v5073, 16
      %v6472 = vrot.slane %v6470, 7
      %v6473 = vshll.u32 %v5073, 16
      %v6475 = vor.u32 %v6472, %v6473
      %v6476 = vsel %vm891, %v6465, %v6475
      %v6478 = vshrl.u32 %v5122, 16
      %v6480 = vrot.slane %v6478, 7
      %v6481 = vshll.u32 %v5122, 16
      %v6483 = vor.u32 %v6480, %v6481
      %v6485 = vshrl.u32 %v5171, 16
      %v6487 = vrot.slane %v6485, 7
      %v6488 = vshll.u32 %v5171, 16
      %v6490 = vor.u32 %v6487, %v6488
      %v6491 = vsel %vm891, %v6480, %v6490
      %v6493 = vshrl.u32 %v5220, 16
      %v6495 = vrot.slane %v6493, 7
      %v6496 = vshll.u32 %v5220, 16
      %v6498 = vor.u32 %v6495, %v6496
      %v6500 = vshrl.u32 %v5269, 16
      %v6502 = vrot.slane %v6500, 7
      %v6503 = vshll.u32 %v5269, 16
      %v6505 = vor.u32 %v6502, %v6503
      %v6506 = vsel %vm891, %v6495, %v6505
      %v6508 = vshrl.u32 %v5318, 16
      %v6510 = vrot.slane %v6508, 7
      %v6511 = vshll.u32 %v5318, 16
      %v6513 = vor.u32 %v6510, %v6511
      %v6515 = vshrl.u32 %v5367, 16
      %v6517 = vrot.slane %v6515, 7
      %v6518 = vshll.u32 %v5367, 16
      %v6520 = vor.u32 %v6517, %v6518
      %v6521 = vsel %vm891, %v6510, %v6520
      %v6523 = vshrl.u32 %v5416, 16
      %v6525 = vrot.slane %v6523, 7
      %v6526 = vshll.u32 %v5416, 16
      %v6528 = vor.u32 %v6525, %v6526
      %v6530 = vshrl.u32 %v5465, 16
      %v6532 = vrot.slane %v6530, 7
      %v6533 = vshll.u32 %v5465, 16
      %v6535 = vor.u32 %v6532, %v6533
      %v6536 = vsel %vm891, %v6525, %v6535
      %v6538 = vshrl.u32 %v5514, 16
      %v6540 = vrot.slane %v6538, 7
      %v6541 = vshll.u32 %v5514, 16
      %v6543 = vor.u32 %v6540, %v6541
      %v6545 = vshrl.u32 %v5563, 16
      %v6547 = vrot.slane %v6545, 7
      %v6548 = vshll.u32 %v5563, 16
      %v6550 = vor.u32 %v6547, %v6548
      %v6551 = vsel %vm891, %v6540, %v6550
      %v6553 = vshrl.u32 %v5612, 16
      %v6555 = vrot.slane %v6553, 7
      %v6556 = vshll.u32 %v5612, 16
      %v6558 = vor.u32 %v6555, %v6556
      %v6560 = vshrl.u32 %v5661, 16
      %v6562 = vrot.slane %v6560, 7
      %v6563 = vshll.u32 %v5661, 16
      %v6565 = vor.u32 %v6562, %v6563
      %v6566 = vsel %vm891, %v6555, %v6565
      %v6568 = vshrl.u32 %v5710, 16
      %v6570 = vrot.slane %v6568, 7
      %v6571 = vshll.u32 %v5710, 16
      %v6573 = vor.u32 %v6570, %v6571
      %v6575 = vshrl.u32 %v5759, 16
      %v6577 = vrot.slane %v6575, 7
      %v6578 = vshll.u32 %v5759, 16
      %v6580 = vor.u32 %v6577, %v6578
      %v6581 = vsel %vm891, %v6570, %v6580
      %v6583 = vshrl.u32 %v5808, 16
      %v6585 = vrot.slane %v6583, 7
      %v6586 = vshll.u32 %v5808, 16
      %v6588 = vor.u32 %v6585, %v6586
      %v6590 = vshrl.u32 %v5857, 16
      %v6592 = vrot.slane %v6590, 7
      %v6593 = vshll.u32 %v5857, 16
      %v6595 = vor.u32 %v6592, %v6593
      %v6596 = vsel %vm891, %v6585, %v6595
      %v6598 = vshrl.u32 %v5906, 16
      %v6600 = vrot.slane %v6598, 7
      %v6601 = vshll.u32 %v5906, 16
      %v6603 = vor.u32 %v6600, %v6601
      %v6605 = vshrl.u32 %v5955, 16
      %v6607 = vrot.slane %v6605, 7
      %v6608 = vshll.u32 %v5955, 16
      %v6610 = vor.u32 %v6607, %v6608
      %v6611 = vsel %vm891, %v6600, %v6610
      %v6613 = vshrl.u32 %v6004, 16
      %v6615 = vrot.slane %v6613, 7
      %v6616 = vshll.u32 %v6004, 16
      %v6618 = vor.u32 %v6615, %v6616
      %v6620 = vshrl.u32 %v6053, 16
      %v6622 = vrot.slane %v6620, 7
      %v6623 = vshll.u32 %v6053, 16
      %v6625 = vor.u32 %v6622, %v6623
      %v6626 = vsel %vm891, %v6615, %v6625
      %v6628 = vshrl.u32 %v6102, 16
      %v6630 = vrot.slane %v6628, 7
      %v6631 = vshll.u32 %v6102, 16
      %v6633 = vor.u32 %v6630, %v6631
      %v6635 = vshrl.u32 %v6151, 16
      %v6637 = vrot.slane %v6635, 7
      %v6638 = vshll.u32 %v6151, 16
      %v6640 = vor.u32 %v6637, %v6638
      %v6641 = vsel %vm891, %v6630, %v6640
      %v6643 = vshrl.u32 %v6200, 16
      %v6645 = vrot.slane %v6643, 7
      %v6646 = vshll.u32 %v6200, 16
      %v6648 = vor.u32 %v6645, %v6646
      %v6650 = vshrl.u32 %v6249, 16
      %v6652 = vrot.slane %v6650, 7
      %v6653 = vshll.u32 %v6249, 16
      %v6655 = vor.u32 %v6652, %v6653
      %v6656 = vsel %vm891, %v6645, %v6655
      %v6658 = vshrl.u32 %v6298, 16
      %v6660 = vrot.slane %v6658, 7
      %v6661 = vshll.u32 %v6298, 16
      %v6663 = vor.u32 %v6660, %v6661
      %v6665 = vshrl.u32 %v6347, 16
      %v6667 = vrot.slane %v6665, 7
      %v6668 = vshll.u32 %v6347, 16
      %v6670 = vor.u32 %v6667, %v6668
      %v6671 = vsel %vm891, %v6660, %v6670
      %v6673 = vshrl.u32 %v6396, 16
      %v6675 = vrot.slane %v6673, 7
      %v6676 = vshll.u32 %v6396, 16
      %v6678 = vor.u32 %v6675, %v6676
      %v6680 = vshrl.u32 %v6445, 16
      %v6682 = vrot.slane %v6680, 7
      %v6683 = vshll.u32 %v6445, 16
      %v6685 = vor.u32 %v6682, %v6683
      %v6686 = vsel %vm891, %v6675, %v6685
      %v6719 = vsel %vm892, 0, %v6453
      %v6720 = vsel %vm892, 0, %v6468
      %v6721 = vsel %vm892, 0, %v6483
      %v6722 = vsel %vm892, 0, %v6498
      %v6723 = vsel %vm892, 0, %v6513
      %v6724 = vsel %vm892, 0, %v6528
      %v6725 = vsel %vm892, 0, %v6543
      %v6726 = vsel %vm892, 0, %v6558
      %v6727 = vsel %vm892, 0, %v6573
      %v6728 = vsel %vm892, 0, %v6588
      %v6729 = vsel %vm892, 0, %v6603
      %v6730 = vsel %vm892, 0, %v6618
      %v6731 = vsel %vm892, 0, %v6633
      %v6732 = vsel %vm892, 0, %v6648
      %v6733 = vsel %vm892, 0, %v6663
      %v6734 = vsel %vm892, 0, %v6678
      %v6735 = vsel %vm892, %v6457, 0
      %v6736 = vsel %vm892, %v6472, 0
      %v6737 = vsel %vm892, %v6487, 0
      %v6738 = vsel %vm892, %v6502, 0
      %v6739 = vsel %vm892, %v6517, 0
      %v6740 = vsel %vm892, %v6532, 0
      %v6741 = vsel %vm892, %v6547, 0
      %v6742 = vsel %vm892, %v6562, 0
      %v6743 = vsel %vm892, %v6577, 0
      %v6744 = vsel %vm892, %v6592, 0
      %v6745 = vsel %vm892, %v6607, 0
      %v6746 = vsel %vm892, %v6622, 0
      %v6747 = vsel %vm892, %v6637, 0
      %v6748 = vsel %vm892, %v6652, 0
      %v6749 = vsel %vm892, %v6667, 0
      %v6750 = vsel %vm892, %v6682, 0
      %v6752 = vshll.u32 %v6446, 16
      %v6754 = vrot.slane %v6752, 1
      %v6755 = vsel %vm1448, %v1455, %v6754
      %v6756 = vshrl.u32 %v6446, 16
      %v6758 = vor.u32 %v6756, %v6754
      %v6759 = vsel %vm1448, %v6758, %v1459
      %v6761 = vshrl.u32 %v6719, 16
      %v6763 = vshll.u32 %v6719, 16
      %v6765 = vrot.slane %v6763, 1
      %v6766 = vor.u32 %v6761, %v6765
      %v6768 = vshll.u32 %v6461, 16
      %v6770 = vrot.slane %v6768, 1
      %v6771 = vsel %vm1448, %v6766, %v6770
      %v6772 = vshrl.u32 %v6461, 16
      %v6774 = vor.u32 %v6772, %v6770
      %v6776 = vshll.u32 %v6735, 16
      %v6778 = vrot.slane %v6776, 1
      %v6779 = vsel %vm1448, %v6774, %v6778
      %v6781 = vshrl.u32 %v6720, 16
      %v6783 = vshll.u32 %v6720, 16
      %v6785 = vrot.slane %v6783, 1
      %v6786 = vor.u32 %v6781, %v6785
      %v6788 = vshll.u32 %v6476, 16
      %v6790 = vrot.slane %v6788, 1
      %v6791 = vsel %vm1448, %v6786, %v6790
      %v6792 = vshrl.u32 %v6476, 16
      %v6794 = vor.u32 %v6792, %v6790
      %v6796 = vshll.u32 %v6736, 16
      %v6798 = vrot.slane %v6796, 1
      %v6799 = vsel %vm1448, %v6794, %v6798
      %v6801 = vshrl.u32 %v6721, 16
      %v6803 = vshll.u32 %v6721, 16
      %v6805 = vrot.slane %v6803, 1
      %v6806 = vor.u32 %v6801, %v6805
      %v6808 = vshll.u32 %v6491, 16
      %v6810 = vrot.slane %v6808, 1
      %v6811 = vsel %vm1448, %v6806, %v6810
      %v6812 = vshrl.u32 %v6491, 16
      %v6814 = vor.u32 %v6812, %v6810
      %v6816 = vshll.u32 %v6737, 16
      %v6818 = vrot.slane %v6816, 1
      %v6819 = vsel %vm1448, %v6814, %v6818
      %v6821 = vshrl.u32 %v6722, 16
      %v6823 = vshll.u32 %v6722, 16
      %v6825 = vrot.slane %v6823, 1
      %v6826 = vor.u32 %v6821, %v6825
      %v6828 = vshll.u32 %v6506, 16
      %v6830 = vrot.slane %v6828, 1
      %v6831 = vsel %vm1448, %v6826, %v6830
      %v6832 = vshrl.u32 %v6506, 16
      %v6834 = vor.u32 %v6832, %v6830
      %v6836 = vshll.u32 %v6738, 16
      %v6838 = vrot.slane %v6836, 1
      %v6839 = vsel %vm1448, %v6834, %v6838
      %v6841 = vshrl.u32 %v6723, 16
      %v6843 = vshll.u32 %v6723, 16
      %v6845 = vrot.slane %v6843, 1
      %v6846 = vor.u32 %v6841, %v6845
      %v6848 = vshll.u32 %v6521, 16
      %v6850 = vrot.slane %v6848, 1
      %v6851 = vsel %vm1448, %v6846, %v6850
      %v6852 = vshrl.u32 %v6521, 16
      %v6854 = vor.u32 %v6852, %v6850
      %v6856 = vshll.u32 %v6739, 16
      %v6858 = vrot.slane %v6856, 1
      %v6859 = vsel %vm1448, %v6854, %v6858
      %v6861 = vshrl.u32 %v6724, 16
      %v6863 = vshll.u32 %v6724, 16
      %v6865 = vrot.slane %v6863, 1
      %v6866 = vor.u32 %v6861, %v6865
      %v6868 = vshll.u32 %v6536, 16
      %v6870 = vrot.slane %v6868, 1
      %v6871 = vsel %vm1448, %v6866, %v6870
      %v6872 = vshrl.u32 %v6536, 16
      %v6874 = vor.u32 %v6872, %v6870
      %v6876 = vshll.u32 %v6740, 16
      %v6878 = vrot.slane %v6876, 1
      %v6879 = vsel %vm1448, %v6874, %v6878
      %v6881 = vshrl.u32 %v6725, 16
      %v6883 = vshll.u32 %v6725, 16
      %v6885 = vrot.slane %v6883, 1
      %v6886 = vor.u32 %v6881, %v6885
      %v6888 = vshll.u32 %v6551, 16
      %v6890 = vrot.slane %v6888, 1
      %v6891 = vsel %vm1448, %v6886, %v6890
      %v6892 = vshrl.u32 %v6551, 16
      %v6894 = vor.u32 %v6892, %v6890
      %v6896 = vshll.u32 %v6741, 16
      %v6898 = vrot.slane %v6896, 1
      %v6899 = vsel %vm1448, %v6894, %v6898
      %v6901 = vshrl.u32 %v6726, 16
      %v6903 = vshll.u32 %v6726, 16
      %v6905 = vrot.slane %v6903, 1
      %v6906 = vor.u32 %v6901, %v6905
      %v6908 = vshll.u32 %v6566, 16
      %v6910 = vrot.slane %v6908, 1
      %v6911 = vsel %vm1448, %v6906, %v6910
      %v6912 = vshrl.u32 %v6566, 16
      %v6914 = vor.u32 %v6912, %v6910
      %v6916 = vshll.u32 %v6742, 16
      %v6918 = vrot.slane %v6916, 1
      %v6919 = vsel %vm1448, %v6914, %v6918
      %v6921 = vshrl.u32 %v6727, 16
      %v6923 = vshll.u32 %v6727, 16
      %v6925 = vrot.slane %v6923, 1
      %v6926 = vor.u32 %v6921, %v6925
      %v6928 = vshll.u32 %v6581, 16
      %v6930 = vrot.slane %v6928, 1
      %v6931 = vsel %vm1448, %v6926, %v6930
      %v6932 = vshrl.u32 %v6581, 16
      %v6934 = vor.u32 %v6932, %v6930
      %v6936 = vshll.u32 %v6743, 16
      %v6938 = vrot.slane %v6936, 1
      %v6939 = vsel %vm1448, %v6934, %v6938
      %v6941 = vshrl.u32 %v6728, 16
      %v6943 = vshll.u32 %v6728, 16
      %v6945 = vrot.slane %v6943, 1
      %v6946 = vor.u32 %v6941, %v6945
      %v6948 = vshll.u32 %v6596, 16
      %v6950 = vrot.slane %v6948, 1
      %v6951 = vsel %vm1448, %v6946, %v6950
      %v6952 = vshrl.u32 %v6596, 16
      %v6954 = vor.u32 %v6952, %v6950
      %v6956 = vshll.u32 %v6744, 16
      %v6958 = vrot.slane %v6956, 1
      %v6959 = vsel %vm1448, %v6954, %v6958
      %v6961 = vshrl.u32 %v6729, 16
      %v6963 = vshll.u32 %v6729, 16
      %v6965 = vrot.slane %v6963, 1
      %v6966 = vor.u32 %v6961, %v6965
      %v6968 = vshll.u32 %v6611, 16
      %v6970 = vrot.slane %v6968, 1
      %v6971 = vsel %vm1448, %v6966, %v6970
      %v6972 = vshrl.u32 %v6611, 16
      %v6974 = vor.u32 %v6972, %v6970
      %v6976 = vshll.u32 %v6745, 16
      %v6978 = vrot.slane %v6976, 1
      %v6979 = vsel %vm1448, %v6974, %v6978
      %v6981 = vshrl.u32 %v6730, 16
      %v6983 = vshll.u32 %v6730, 16
      %v6985 = vrot.slane %v6983, 1
      %v6986 = vor.u32 %v6981, %v6985
      %v6988 = vshll.u32 %v6626, 16
      %v6990 = vrot.slane %v6988, 1
      %v6991 = vsel %vm1448, %v6986, %v6990
      %v6992 = vshrl.u32 %v6626, 16
      %v6994 = vor.u32 %v6992, %v6990
      %v6996 = vshll.u32 %v6746, 16
      %v6998 = vrot.slane %v6996, 1
      %v6999 = vsel %vm1448, %v6994, %v6998
      %v7001 = vshrl.u32 %v6731, 16
      %v7003 = vshll.u32 %v6731, 16
      %v7005 = vrot.slane %v7003, 1
      %v7006 = vor.u32 %v7001, %v7005
      %v7008 = vshll.u32 %v6641, 16
      %v7010 = vrot.slane %v7008, 1
      %v7011 = vsel %vm1448, %v7006, %v7010
      %v7012 = vshrl.u32 %v6641, 16
      %v7014 = vor.u32 %v7012, %v7010
      %v7016 = vshll.u32 %v6747, 16
      %v7018 = vrot.slane %v7016, 1
      %v7019 = vsel %vm1448, %v7014, %v7018
      %v7021 = vshrl.u32 %v6732, 16
      %v7023 = vshll.u32 %v6732, 16
      %v7025 = vrot.slane %v7023, 1
      %v7026 = vor.u32 %v7021, %v7025
      %v7028 = vshll.u32 %v6656, 16
      %v7030 = vrot.slane %v7028, 1
      %v7031 = vsel %vm1448, %v7026, %v7030
      %v7032 = vshrl.u32 %v6656, 16
      %v7034 = vor.u32 %v7032, %v7030
      %v7036 = vshll.u32 %v6748, 16
      %v7038 = vrot.slane %v7036, 1
      %v7039 = vsel %vm1448, %v7034, %v7038
      %v7041 = vshrl.u32 %v6733, 16
      %v7043 = vshll.u32 %v6733, 16
      %v7045 = vrot.slane %v7043, 1
      %v7046 = vor.u32 %v7041, %v7045
      %v7048 = vshll.u32 %v6671, 16
      %v7050 = vrot.slane %v7048, 1
      %v7051 = vsel %vm1448, %v7046, %v7050
      %v7052 = vshrl.u32 %v6671, 16
      %v7054 = vor.u32 %v7052, %v7050
      %v7056 = vshll.u32 %v6749, 16
      %v7058 = vrot.slane %v7056, 1
      %v7059 = vsel %vm1448, %v7054, %v7058
      %v7061 = vshrl.u32 %v6734, 16
      %v7063 = vshll.u32 %v6734, 16
      %v7065 = vrot.slane %v7063, 1
      %v7066 = vor.u32 %v7061, %v7065
      %v7068 = vshll.u32 %v6686, 16
      %v7070 = vrot.slane %v7068, 1
      %v7071 = vsel %vm1448, %v7066, %v7070
      %v7072 = vshrl.u32 %v6686, 16
      %v7074 = vor.u32 %v7072, %v7070
      %v7076 = vshll.u32 %v6750, 16
      %v7078 = vrot.slane %v7076, 1
      %v7079 = vsel %vm1448, %v7074, %v7078
      %7080 = vrot.lane.b32.xlu0 %v6755, 16
      %v7081 = vpop.permute.xlu0 %7080
      %7082 = vrot.lane.b32.xlu0 %v6759, 16
      %v7083 = vpop.permute.xlu0 %7082
      %7084 = vrot.lane.b32.xlu0 %v6771, 16
      %v7085 = vpop.permute.xlu0 %7084
      %7086 = vrot.lane.b32.xlu0 %v6779, 16
      %v7087 = vpop.permute.xlu0 %7086
      %7088 = vrot.lane.b32.xlu0 %v6791, 16
      %v7089 = vpop.permute.xlu0 %7088
      %7090 = vrot.lane.b32.xlu0 %v6799, 16
      %v7091 = vpop.permute.xlu0 %7090
      %7092 = vrot.lane.b32.xlu0 %v6811, 16
      %v7093 = vpop.permute.xlu0 %7092
      %7094 = vrot.lane.b32.xlu0 %v6819, 16
      %v7095 = vpop.permute.xlu0 %7094
      %7096 = vrot.lane.b32.xlu0 %v6831, 16
      %v7097 = vpop.permute.xlu0 %7096
      %7098 = vrot.lane.b32.xlu0 %v6839, 16
      %v7099 = vpop.permute.xlu0 %7098
      %7100 = vrot.lane.b32.xlu0 %v6851, 16
      %v7101 = vpop.permute.xlu0 %7100
      %7102 = vrot.lane.b32.xlu0 %v6859, 16
      %v7103 = vpop.permute.xlu0 %7102
      %7104 = vrot.lane.b32.xlu0 %v6871, 16
      %v7105 = vpop.permute.xlu0 %7104
      %7106 = vrot.lane.b32.xlu0 %v6879, 16
      %v7107 = vpop.permute.xlu0 %7106
      %7108 = vrot.lane.b32.xlu0 %v6891, 16
      %v7109 = vpop.permute.xlu0 %7108
      %7110 = vrot.lane.b32.xlu0 %v6899, 16
      %v7111 = vpop.permute.xlu0 %7110
      %7112 = vrot.lane.b32.xlu0 %v6911, 16
      %v7113 = vpop.permute.xlu0 %7112
      %7114 = vrot.lane.b32.xlu0 %v6919, 16
      %v7115 = vpop.permute.xlu0 %7114
      %7116 = vrot.lane.b32.xlu0 %v6931, 16
      %v7117 = vpop.permute.xlu0 %7116
      %7118 = vrot.lane.b32.xlu0 %v6939, 16
      %v7119 = vpop.permute.xlu0 %7118
      %7120 = vrot.lane.b32.xlu0 %v6951, 16
      %v7121 = vpop.permute.xlu0 %7120
      %7122 = vrot.lane.b32.xlu0 %v6959, 16
      %v7123 = vpop.permute.xlu0 %7122
      %7124 = vrot.lane.b32.xlu0 %v6971, 16
      %v7125 = vpop.permute.xlu0 %7124
      %7126 = vrot.lane.b32.xlu0 %v6979, 16
      %v7127 = vpop.permute.xlu0 %7126
      %7128 = vrot.lane.b32.xlu0 %v6991, 16
      %v7129 = vpop.permute.xlu0 %7128
      %7130 = vrot.lane.b32.xlu0 %v6999, 16
      %v7131 = vpop.permute.xlu0 %7130
      %7132 = vrot.lane.b32.xlu0 %v7011, 16
      %v7133 = vpop.permute.xlu0 %7132
      %7134 = vrot.lane.b32.xlu0 %v7019, 16
      %v7135 = vpop.permute.xlu0 %7134
      %7136 = vrot.lane.b32.xlu0 %v7031, 16
      %v7137 = vpop.permute.xlu0 %7136
      %7138 = vrot.lane.b32.xlu0 %v7039, 16
      %v7139 = vpop.permute.xlu0 %7138
      %7140 = vrot.lane.b32.xlu0 %v7051, 16
      %v7141 = vpop.permute.xlu0 %7140
      %7142 = vrot.lane.b32.xlu0 %v7059, 16
      %v7143 = vpop.permute.xlu0 %7142
      %7144 = vrot.lane.b32.xlu0 %v7071, 16
      %v7145 = vpop.permute.xlu0 %7144
      %7146 = vrot.lane.b32.xlu0 %v7079, 16
      %v7147 = vpop.permute.xlu0 %7146
      %v7180 = vrot.slane %v6446, 1
      %v7181 = vsel %vm1593, %v1594, %v7180
      %v7182 = vsel %vm1593, %v7180, %v1595
      %v7183 = vrot.slane %v6719, 1
      %v7184 = vrot.slane %v6461, 1
      %v7185 = vsel %vm1593, %v7183, %v7184
      %v7186 = vrot.slane %v6735, 1
      %v7187 = vsel %vm1593, %v7184, %v7186
      %v7188 = vrot.slane %v6720, 1
      %v7189 = vrot.slane %v6476, 1
      %v7190 = vsel %vm1593, %v7188, %v7189
      %v7191 = vrot.slane %v6736, 1
      %v7192 = vsel %vm1593, %v7189, %v7191
      %v7193 = vrot.slane %v6721, 1
      %v7194 = vrot.slane %v6491, 1
      %v7195 = vsel %vm1593, %v7193, %v7194
      %v7196 = vrot.slane %v6737, 1
      %v7197 = vsel %vm1593, %v7194, %v7196
      %v7198 = vrot.slane %v6722, 1
      %v7199 = vrot.slane %v6506, 1
      %v7200 = vsel %vm1593, %v7198, %v7199
      %v7201 = vrot.slane %v6738, 1
      %v7202 = vsel %vm1593, %v7199, %v7201
      %v7203 = vrot.slane %v6723, 1
      %v7204 = vrot.slane %v6521, 1
      %v7205 = vsel %vm1593, %v7203, %v7204
      %v7206 = vrot.slane %v6739, 1
      %v7207 = vsel %vm1593, %v7204, %v7206
      %v7208 = vrot.slane %v6724, 1
      %v7209 = vrot.slane %v6536, 1
      %v7210 = vsel %vm1593, %v7208, %v7209
      %v7211 = vrot.slane %v6740, 1
      %v7212 = vsel %vm1593, %v7209, %v7211
      %v7213 = vrot.slane %v6725, 1
      %v7214 = vrot.slane %v6551, 1
      %v7215 = vsel %vm1593, %v7213, %v7214
      %v7216 = vrot.slane %v6741, 1
      %v7217 = vsel %vm1593, %v7214, %v7216
      %v7218 = vrot.slane %v6726, 1
      %v7219 = vrot.slane %v6566, 1
      %v7220 = vsel %vm1593, %v7218, %v7219
      %v7221 = vrot.slane %v6742, 1
      %v7222 = vsel %vm1593, %v7219, %v7221
      %v7223 = vrot.slane %v6727, 1
      %v7224 = vrot.slane %v6581, 1
      %v7225 = vsel %vm1593, %v7223, %v7224
      %v7226 = vrot.slane %v6743, 1
      %v7227 = vsel %vm1593, %v7224, %v7226
      %v7228 = vrot.slane %v6728, 1
      %v7229 = vrot.slane %v6596, 1
      %v7230 = vsel %vm1593, %v7228, %v7229
      %v7231 = vrot.slane %v6744, 1
      %v7232 = vsel %vm1593, %v7229, %v7231
      %v7233 = vrot.slane %v6729, 1
      %v7234 = vrot.slane %v6611, 1
      %v7235 = vsel %vm1593, %v7233, %v7234
      %v7236 = vrot.slane %v6745, 1
      %v7237 = vsel %vm1593, %v7234, %v7236
      %v7238 = vrot.slane %v6730, 1
      %v7239 = vrot.slane %v6626, 1
      %v7240 = vsel %vm1593, %v7238, %v7239
      %v7241 = vrot.slane %v6746, 1
      %v7242 = vsel %vm1593, %v7239, %v7241
      %v7243 = vrot.slane %v6731, 1
      %v7244 = vrot.slane %v6641, 1
      %v7245 = vsel %vm1593, %v7243, %v7244
      %v7246 = vrot.slane %v6747, 1
      %v7247 = vsel %vm1593, %v7244, %v7246
      %v7248 = vrot.slane %v6732, 1
      %v7249 = vrot.slane %v6656, 1
      %v7250 = vsel %vm1593, %v7248, %v7249
      %v7251 = vrot.slane %v6748, 1
      %v7252 = vsel %vm1593, %v7249, %v7251
      %v7253 = vrot.slane %v6733, 1
      %v7254 = vrot.slane %v6671, 1
      %v7255 = vsel %vm1593, %v7253, %v7254
      %v7256 = vrot.slane %v6749, 1
      %v7257 = vsel %vm1593, %v7254, %v7256
      %v7258 = vrot.slane %v6734, 1
      %v7259 = vrot.slane %v6686, 1
      %v7260 = vsel %vm1593, %v7258, %v7259
      %v7261 = vrot.slane %v6750, 1
      %v7262 = vsel %vm1593, %v7259, %v7261
      %7263 = vrot.lane.b32.xlu0 %v7181, 32
      %v7264 = vpop.permute.xlu0 %7263
      %7265 = vrot.lane.b32.xlu0 %v7182, 32
      %v7266 = vpop.permute.xlu0 %7265
      %7267 = vrot.lane.b32.xlu0 %v7185, 32
      %v7268 = vpop.permute.xlu0 %7267
      %7269 = vrot.lane.b32.xlu0 %v7187, 32
      %v7270 = vpop.permute.xlu0 %7269
      %7271 = vrot.lane.b32.xlu0 %v7190, 32
      %v7272 = vpop.permute.xlu0 %7271
      %7273 = vrot.lane.b32.xlu0 %v7192, 32
      %v7274 = vpop.permute.xlu0 %7273
      %7275 = vrot.lane.b32.xlu0 %v7195, 32
      %v7276 = vpop.permute.xlu0 %7275
      %7277 = vrot.lane.b32.xlu0 %v7197, 32
      %v7278 = vpop.permute.xlu0 %7277
      %7279 = vrot.lane.b32.xlu0 %v7200, 32
      %v7280 = vpop.permute.xlu0 %7279
      %7281 = vrot.lane.b32.xlu0 %v7202, 32
      %v7282 = vpop.permute.xlu0 %7281
      %7283 = vrot.lane.b32.xlu0 %v7205, 32
      %v7284 = vpop.permute.xlu0 %7283
      %7285 = vrot.lane.b32.xlu0 %v7207, 32
      %v7286 = vpop.permute.xlu0 %7285
      %7287 = vrot.lane.b32.xlu0 %v7210, 32
      %v7288 = vpop.permute.xlu0 %7287
      %7289 = vrot.lane.b32.xlu0 %v7212, 32
      %v7290 = vpop.permute.xlu0 %7289
      %7291 = vrot.lane.b32.xlu0 %v7215, 32
      %v7292 = vpop.permute.xlu0 %7291
      %7293 = vrot.lane.b32.xlu0 %v7217, 32
      %v7294 = vpop.permute.xlu0 %7293
      %7295 = vrot.lane.b32.xlu0 %v7220, 32
      %v7296 = vpop.permute.xlu0 %7295
      %7297 = vrot.lane.b32.xlu0 %v7222, 32
      %v7298 = vpop.permute.xlu0 %7297
      %7299 = vrot.lane.b32.xlu0 %v7225, 32
      %v7300 = vpop.permute.xlu0 %7299
      %7301 = vrot.lane.b32.xlu0 %v7227, 32
      %v7302 = vpop.permute.xlu0 %7301
      %7303 = vrot.lane.b32.xlu0 %v7230, 32
      %v7304 = vpop.permute.xlu0 %7303
      %7305 = vrot.lane.b32.xlu0 %v7232, 32
      %v7306 = vpop.permute.xlu0 %7305
      %7307 = vrot.lane.b32.xlu0 %v7235, 32
      %v7308 = vpop.permute.xlu0 %7307
      %7309 = vrot.lane.b32.xlu0 %v7237, 32
      %v7310 = vpop.permute.xlu0 %7309
      %7311 = vrot.lane.b32.xlu0 %v7240, 32
      %v7312 = vpop.permute.xlu0 %7311
      %7313 = vrot.lane.b32.xlu0 %v7242, 32
      %v7314 = vpop.permute.xlu0 %7313
      %7315 = vrot.lane.b32.xlu0 %v7245, 32
      %v7316 = vpop.permute.xlu0 %7315
      %7317 = vrot.lane.b32.xlu0 %v7247, 32
      %v7318 = vpop.permute.xlu0 %7317
      %7319 = vrot.lane.b32.xlu0 %v7250, 32
      %v7320 = vpop.permute.xlu0 %7319
      %7321 = vrot.lane.b32.xlu0 %v7252, 32
      %v7322 = vpop.permute.xlu0 %7321
      %7323 = vrot.lane.b32.xlu0 %v7255, 32
      %v7324 = vpop.permute.xlu0 %7323
      %7325 = vrot.lane.b32.xlu0 %v7257, 32
      %v7326 = vpop.permute.xlu0 %7325
      %7327 = vrot.lane.b32.xlu0 %v7260, 32
      %v7328 = vpop.permute.xlu0 %7327
      %7329 = vrot.lane.b32.xlu0 %v7262, 32
      %v7330 = vpop.permute.xlu0 %7329
      %v7332 = vsel %vm1658, %v1430, %v7081
      %v7334 = vsel %vm1658, %v6446, %v7083
      %v7336 = vsel %vm1658, %v6719, %v7085
      %v7338 = vsel %vm1658, %v6461, %v7087
      %v7340 = vsel %vm1658, %v6720, %v7089
      %v7342 = vsel %vm1658, %v6476, %v7091
      %v7344 = vsel %vm1658, %v6721, %v7093
      %v7346 = vsel %vm1658, %v6491, %v7095
      %v7348 = vsel %vm1658, %v6722, %v7097
      %v7350 = vsel %vm1658, %v6506, %v7099
      %v7352 = vsel %vm1658, %v6723, %v7101
      %v7354 = vsel %vm1658, %v6521, %v7103
      %v7356 = vsel %vm1658, %v6724, %v7105
      %v7358 = vsel %vm1658, %v6536, %v7107
      %v7360 = vsel %vm1658, %v6725, %v7109
      %v7362 = vsel %vm1658, %v6551, %v7111
      %v7364 = vsel %vm1658, %v6726, %v7113
      %v7366 = vsel %vm1658, %v6566, %v7115
      %v7368 = vsel %vm1658, %v6727, %v7117
      %v7370 = vsel %vm1658, %v6581, %v7119
      %v7372 = vsel %vm1658, %v6728, %v7121
      %v7374 = vsel %vm1658, %v6596, %v7123
      %v7376 = vsel %vm1658, %v6729, %v7125
      %v7378 = vsel %vm1658, %v6611, %v7127
      %v7380 = vsel %vm1658, %v6730, %v7129
      %v7382 = vsel %vm1658, %v6626, %v7131
      %v7384 = vsel %vm1658, %v6731, %v7133
      %v7386 = vsel %vm1658, %v6641, %v7135
      %v7388 = vsel %vm1658, %v6732, %v7137
      %v7390 = vsel %vm1658, %v6656, %v7139
      %v7392 = vsel %vm1658, %v6733, %v7141
      %v7394 = vsel %vm1658, %v6671, %v7143
      %v7396 = vsel %vm1658, %v6734, %v7145
      %v7398 = vsel %vm1658, %v6686, %v7147
      %vm7399 = vcmask 261120
      %v7401 = vsel %vm7399, %v7332, %v7264
      %v7403 = vsel %vm7399, %v7334, %v7266
      %v7405 = vsel %vm7399, %v7336, %v7268
      %v7407 = vsel %vm7399, %v7338, %v7270
      %v7409 = vsel %vm7399, %v7340, %v7272
      %v7411 = vsel %vm7399, %v7342, %v7274
      %v7413 = vsel %vm7399, %v7344, %v7276
      %v7415 = vsel %vm7399, %v7346, %v7278
      %v7417 = vsel %vm7399, %v7348, %v7280
      %v7419 = vsel %vm7399, %v7350, %v7282
      %v7421 = vsel %vm7399, %v7352, %v7284
      %v7423 = vsel %vm7399, %v7354, %v7286
      %v7425 = vsel %vm7399, %v7356, %v7288
      %v7427 = vsel %vm7399, %v7358, %v7290
      %v7429 = vsel %vm7399, %v7360, %v7292
      %v7431 = vsel %vm7399, %v7362, %v7294
      %v7433 = vsel %vm7399, %v7364, %v7296
      %v7435 = vsel %vm7399, %v7366, %v7298
      %v7437 = vsel %vm7399, %v7368, %v7300
      %v7439 = vsel %vm7399, %v7370, %v7302
      %v7441 = vsel %vm7399, %v7372, %v7304
      %v7443 = vsel %vm7399, %v7374, %v7306
      %v7445 = vsel %vm7399, %v7376, %v7308
      %v7447 = vsel %vm7399, %v7378, %v7310
      %v7449 = vsel %vm7399, %v7380, %v7312
      %v7451 = vsel %vm7399, %v7382, %v7314
      %v7453 = vsel %vm7399, %v7384, %v7316
      %v7455 = vsel %vm7399, %v7386, %v7318
      %v7457 = vsel %vm7399, %v7388, %v7320
      %v7459 = vsel %vm7399, %v7390, %v7322
      %v7461 = vsel %vm7399, %v7392, %v7324
      %v7463 = vsel %vm7399, %v7394, %v7326
      %v7465 = vsel %vm7399, %v7396, %v7328
      %v7467 = vsel %vm7399, %v7398, %v7330
      %7500 = vrot.lane.b32.xlu0 %v7405, 48
      %v7501 = vpop.permute.xlu0 %7500
      %7502 = vrot.lane.b32.xlu0 %v7407, 48
      %v7503 = vpop.permute.xlu0 %7502
      %7504 = vrot.lane.b32.xlu0 %v7409, 48
      %v7505 = vpop.permute.xlu0 %7504
      %7506 = vrot.lane.b32.xlu0 %v7411, 48
      %v7507 = vpop.permute.xlu0 %7506
      %7508 = vrot.lane.b32.xlu0 %v7413, 48
      %v7509 = vpop.permute.xlu0 %7508
      %7510 = vrot.lane.b32.xlu0 %v7415, 48
      %v7511 = vpop.permute.xlu0 %7510
      %7512 = vrot.lane.b32.xlu0 %v7417, 48
      %v7513 = vpop.permute.xlu0 %7512
      %7514 = vrot.lane.b32.xlu0 %v7419, 48
      %v7515 = vpop.permute.xlu0 %7514
      %7516 = vrot.lane.b32.xlu0 %v7421, 48
      %v7517 = vpop.permute.xlu0 %7516
      %7518 = vrot.lane.b32.xlu0 %v7423, 48
      %v7519 = vpop.permute.xlu0 %7518
      %7520 = vrot.lane.b32.xlu0 %v7425, 48
      %v7521 = vpop.permute.xlu0 %7520
      %7522 = vrot.lane.b32.xlu0 %v7427, 48
      %v7523 = vpop.permute.xlu0 %7522
      %7524 = vrot.lane.b32.xlu0 %v7429, 48
      %v7525 = vpop.permute.xlu0 %7524
      %7526 = vrot.lane.b32.xlu0 %v7431, 48
      %v7527 = vpop.permute.xlu0 %7526
      %7528 = vrot.lane.b32.xlu0 %v7433, 48
      %v7529 = vpop.permute.xlu0 %7528
      %7530 = vrot.lane.b32.xlu0 %v7435, 48
      %v7531 = vpop.permute.xlu0 %7530
      %7532 = vrot.lane.b32.xlu0 %v7437, 48
      %v7533 = vpop.permute.xlu0 %7532
      %7534 = vrot.lane.b32.xlu0 %v7439, 48
      %v7535 = vpop.permute.xlu0 %7534
      %7536 = vrot.lane.b32.xlu0 %v7441, 48
      %v7537 = vpop.permute.xlu0 %7536
      %7538 = vrot.lane.b32.xlu0 %v7443, 48
      %v7539 = vpop.permute.xlu0 %7538
      %7540 = vrot.lane.b32.xlu0 %v7445, 48
      %v7541 = vpop.permute.xlu0 %7540
      %7542 = vrot.lane.b32.xlu0 %v7447, 48
      %v7543 = vpop.permute.xlu0 %7542
      %7544 = vrot.lane.b32.xlu0 %v7449, 48
      %v7545 = vpop.permute.xlu0 %7544
      %7546 = vrot.lane.b32.xlu0 %v7451, 48
      %v7547 = vpop.permute.xlu0 %7546
      %7548 = vrot.lane.b32.xlu0 %v7453, 48
      %v7549 = vpop.permute.xlu0 %7548
      %7550 = vrot.lane.b32.xlu0 %v7455, 48
      %v7551 = vpop.permute.xlu0 %7550
      %7552 = vrot.lane.b32.xlu0 %v7457, 48
      %v7553 = vpop.permute.xlu0 %7552
      %7554 = vrot.lane.b32.xlu0 %v7459, 48
      %v7555 = vpop.permute.xlu0 %7554
      %7556 = vrot.lane.b32.xlu0 %v7461, 48
      %v7557 = vpop.permute.xlu0 %7556
      %7558 = vrot.lane.b32.xlu0 %v7463, 48
      %v7559 = vpop.permute.xlu0 %7558
      %7560 = vrot.lane.b32.xlu0 %v7465, 48
      %v7561 = vpop.permute.xlu0 %7560
      %7562 = vrot.lane.b32.xlu0 %v7467, 48
      %v7563 = vpop.permute.xlu0 %7562
      %7566 = vrot.lane.b32.xlu0 %v7405, 96
      %v7567 = vpop.permute.xlu0 %7566
      %7568 = vrot.lane.b32.xlu0 %v7407, 96
      %v7569 = vpop.permute.xlu0 %7568
      %7570 = vrot.lane.b32.xlu0 %v7409, 96
      %v7571 = vpop.permute.xlu0 %7570
      %7572 = vrot.lane.b32.xlu0 %v7411, 96
      %v7573 = vpop.permute.xlu0 %7572
      %7574 = vrot.lane.b32.xlu0 %v7413, 96
      %v7575 = vpop.permute.xlu0 %7574
      %7576 = vrot.lane.b32.xlu0 %v7415, 96
      %v7577 = vpop.permute.xlu0 %7576
      %7578 = vrot.lane.b32.xlu0 %v7417, 96
      %v7579 = vpop.permute.xlu0 %7578
      %7580 = vrot.lane.b32.xlu0 %v7419, 96
      %v7581 = vpop.permute.xlu0 %7580
      %7582 = vrot.lane.b32.xlu0 %v7421, 96
      %v7583 = vpop.permute.xlu0 %7582
      %7584 = vrot.lane.b32.xlu0 %v7423, 96
      %v7585 = vpop.permute.xlu0 %7584
      %7586 = vrot.lane.b32.xlu0 %v7425, 96
      %v7587 = vpop.permute.xlu0 %7586
      %7588 = vrot.lane.b32.xlu0 %v7427, 96
      %v7589 = vpop.permute.xlu0 %7588
      %7590 = vrot.lane.b32.xlu0 %v7429, 96
      %v7591 = vpop.permute.xlu0 %7590
      %7592 = vrot.lane.b32.xlu0 %v7431, 96
      %v7593 = vpop.permute.xlu0 %7592
      %7594 = vrot.lane.b32.xlu0 %v7433, 96
      %v7595 = vpop.permute.xlu0 %7594
      %7596 = vrot.lane.b32.xlu0 %v7435, 96
      %v7597 = vpop.permute.xlu0 %7596
      %7598 = vrot.lane.b32.xlu0 %v7437, 96
      %v7599 = vpop.permute.xlu0 %7598
      %7600 = vrot.lane.b32.xlu0 %v7439, 96
      %v7601 = vpop.permute.xlu0 %7600
      %7602 = vrot.lane.b32.xlu0 %v7441, 96
      %v7603 = vpop.permute.xlu0 %7602
      %7604 = vrot.lane.b32.xlu0 %v7443, 96
      %v7605 = vpop.permute.xlu0 %7604
      %7606 = vrot.lane.b32.xlu0 %v7445, 96
      %v7607 = vpop.permute.xlu0 %7606
      %7608 = vrot.lane.b32.xlu0 %v7447, 96
      %v7609 = vpop.permute.xlu0 %7608
      %7610 = vrot.lane.b32.xlu0 %v7449, 96
      %v7611 = vpop.permute.xlu0 %7610
      %7612 = vrot.lane.b32.xlu0 %v7451, 96
      %v7613 = vpop.permute.xlu0 %7612
      %7614 = vrot.lane.b32.xlu0 %v7453, 96
      %v7615 = vpop.permute.xlu0 %7614
      %7616 = vrot.lane.b32.xlu0 %v7455, 96
      %v7617 = vpop.permute.xlu0 %7616
      %7618 = vrot.lane.b32.xlu0 %v7457, 96
      %v7619 = vpop.permute.xlu0 %7618
      %7620 = vrot.lane.b32.xlu0 %v7459, 96
      %v7621 = vpop.permute.xlu0 %7620
      %7622 = vrot.lane.b32.xlu0 %v7461, 96
      %v7623 = vpop.permute.xlu0 %7622
      %7624 = vrot.lane.b32.xlu0 %v7463, 96
      %v7625 = vpop.permute.xlu0 %7624
      %7626 = vrot.lane.b32.xlu0 %v7465, 96
      %v7627 = vpop.permute.xlu0 %7626
      %7628 = vrot.lane.b32.xlu0 %v7467, 96
      %v7629 = vpop.permute.xlu0 %7628
      %7630 = vrot.lane.b32.xlu0 %v7401, 96
      %v7631 = vpop.permute.xlu0 %7630
      %7632 = vrot.lane.b32.xlu0 %v7403, 96
      %v7633 = vpop.permute.xlu0 %7632
      %v7635 = vsel %vm1745, %v7401, %v7501
      %v7637 = vsel %vm1745, %v7403, %v7503
      %v7638 = vsel %vm1745, %v7405, %v7501
      %v7639 = vsel %vm1745, %v7407, %v7503
      %v7641 = vsel %vm1745, %v7405, %v7505
      %v7643 = vsel %vm1745, %v7407, %v7507
      %v7644 = vsel %vm1745, %v7409, %v7505
      %v7645 = vsel %vm1745, %v7411, %v7507
      %v7647 = vsel %vm1745, %v7409, %v7509
      %v7649 = vsel %vm1745, %v7411, %v7511
      %v7650 = vsel %vm1745, %v7413, %v7509
      %v7651 = vsel %vm1745, %v7415, %v7511
      %v7653 = vsel %vm1745, %v7413, %v7513
      %v7655 = vsel %vm1745, %v7415, %v7515
      %v7656 = vsel %vm1745, %v7417, %v7513
      %v7657 = vsel %vm1745, %v7419, %v7515
      %v7659 = vsel %vm1745, %v7417, %v7517
      %v7661 = vsel %vm1745, %v7419, %v7519
      %v7662 = vsel %vm1745, %v7421, %v7517
      %v7663 = vsel %vm1745, %v7423, %v7519
      %v7665 = vsel %vm1745, %v7421, %v7521
      %v7667 = vsel %vm1745, %v7423, %v7523
      %v7668 = vsel %vm1745, %v7425, %v7521
      %v7669 = vsel %vm1745, %v7427, %v7523
      %v7671 = vsel %vm1745, %v7425, %v7525
      %v7673 = vsel %vm1745, %v7427, %v7527
      %v7674 = vsel %vm1745, %v7429, %v7525
      %v7675 = vsel %vm1745, %v7431, %v7527
      %v7677 = vsel %vm1745, %v7429, %v7529
      %v7679 = vsel %vm1745, %v7431, %v7531
      %v7680 = vsel %vm1745, %v7433, %v7529
      %v7681 = vsel %vm1745, %v7435, %v7531
      %v7683 = vsel %vm1745, %v7433, %v7533
      %v7685 = vsel %vm1745, %v7435, %v7535
      %v7686 = vsel %vm1745, %v7437, %v7533
      %v7687 = vsel %vm1745, %v7439, %v7535
      %v7689 = vsel %vm1745, %v7437, %v7537
      %v7691 = vsel %vm1745, %v7439, %v7539
      %v7692 = vsel %vm1745, %v7441, %v7537
      %v7693 = vsel %vm1745, %v7443, %v7539
      %v7695 = vsel %vm1745, %v7441, %v7541
      %v7697 = vsel %vm1745, %v7443, %v7543
      %v7698 = vsel %vm1745, %v7445, %v7541
      %v7699 = vsel %vm1745, %v7447, %v7543
      %v7701 = vsel %vm1745, %v7445, %v7545
      %v7703 = vsel %vm1745, %v7447, %v7547
      %v7704 = vsel %vm1745, %v7449, %v7545
      %v7705 = vsel %vm1745, %v7451, %v7547
      %v7707 = vsel %vm1745, %v7449, %v7549
      %v7709 = vsel %vm1745, %v7451, %v7551
      %v7710 = vsel %vm1745, %v7453, %v7549
      %v7711 = vsel %vm1745, %v7455, %v7551
      %v7713 = vsel %vm1745, %v7453, %v7553
      %v7715 = vsel %vm1745, %v7455, %v7555
      %v7716 = vsel %vm1745, %v7457, %v7553
      %v7717 = vsel %vm1745, %v7459, %v7555
      %v7719 = vsel %vm1745, %v7457, %v7557
      %v7721 = vsel %vm1745, %v7459, %v7559
      %v7722 = vsel %vm1745, %v7461, %v7557
      %v7723 = vsel %vm1745, %v7463, %v7559
      %v7725 = vsel %vm1745, %v7461, %v7561
      %v7727 = vsel %vm1745, %v7463, %v7563
      %v7728 = vsel %vm1745, %v7465, %v7561
      %v7729 = vsel %vm1745, %v7467, %v7563
      %vm7730 = vcmask 785408
      %v7732 = vsel %vm7730, %v7635, %v7567
      %v7735 = vsel %vm7730, %v7637, %v7569
      %v7738 = vsel %vm7730, %v7638, %v7571
      %v7741 = vsel %vm7730, %v7639, %v7573
      %v7743 = vsel %vm7730, %v7641, %v7571
      %v7745 = vsel %vm7730, %v7643, %v7573
      %v7748 = vsel %vm7730, %v7644, %v7575
      %v7751 = vsel %vm7730, %v7645, %v7577
      %v7753 = vsel %vm7730, %v7647, %v7575
      %v7755 = vsel %vm7730, %v7649, %v7577
      %v7758 = vsel %vm7730, %v7650, %v7579
      %v7761 = vsel %vm7730, %v7651, %v7581
      %v7763 = vsel %vm7730, %v7653, %v7579
      %v7765 = vsel %vm7730, %v7655, %v7581
      %v7768 = vsel %vm7730, %v7656, %v7583
      %v7771 = vsel %vm7730, %v7657, %v7585
      %v7773 = vsel %vm7730, %v7659, %v7583
      %v7775 = vsel %vm7730, %v7661, %v7585
      %v7778 = vsel %vm7730, %v7662, %v7587
      %v7781 = vsel %vm7730, %v7663, %v7589
      %v7783 = vsel %vm7730, %v7665, %v7587
      %v7785 = vsel %vm7730, %v7667, %v7589
      %v7788 = vsel %vm7730, %v7668, %v7591
      %v7791 = vsel %vm7730, %v7669, %v7593
      %v7793 = vsel %vm7730, %v7671, %v7591
      %v7795 = vsel %vm7730, %v7673, %v7593
      %v7798 = vsel %vm7730, %v7674, %v7595
      %v7801 = vsel %vm7730, %v7675, %v7597
      %v7803 = vsel %vm7730, %v7677, %v7595
      %v7805 = vsel %vm7730, %v7679, %v7597
      %v7808 = vsel %vm7730, %v7680, %v7599
      %v7811 = vsel %vm7730, %v7681, %v7601
      %v7813 = vsel %vm7730, %v7683, %v7599
      %v7815 = vsel %vm7730, %v7685, %v7601
      %v7818 = vsel %vm7730, %v7686, %v7603
      %v7821 = vsel %vm7730, %v7687, %v7605
      %v7823 = vsel %vm7730, %v7689, %v7603
      %v7825 = vsel %vm7730, %v7691, %v7605
      %v7828 = vsel %vm7730, %v7692, %v7607
      %v7831 = vsel %vm7730, %v7693, %v7609
      %v7833 = vsel %vm7730, %v7695, %v7607
      %v7835 = vsel %vm7730, %v7697, %v7609
      %v7838 = vsel %vm7730, %v7698, %v7611
      %v7841 = vsel %vm7730, %v7699, %v7613
      %v7843 = vsel %vm7730, %v7701, %v7611
      %v7845 = vsel %vm7730, %v7703, %v7613
      %v7848 = vsel %vm7730, %v7704, %v7615
      %v7851 = vsel %vm7730, %v7705, %v7617
      %v7853 = vsel %vm7730, %v7707, %v7615
      %v7855 = vsel %vm7730, %v7709, %v7617
      %v7858 = vsel %vm7730, %v7710, %v7619
      %v7861 = vsel %vm7730, %v7711, %v7621
      %v7863 = vsel %vm7730, %v7713, %v7619
      %v7865 = vsel %vm7730, %v7715, %v7621
      %v7868 = vsel %vm7730, %v7716, %v7623
      %v7871 = vsel %vm7730, %v7717, %v7625
      %v7873 = vsel %vm7730, %v7719, %v7623
      %v7875 = vsel %vm7730, %v7721, %v7625
      %v7878 = vsel %vm7730, %v7722, %v7627
      %v7881 = vsel %vm7730, %v7723, %v7629
      %v7883 = vsel %vm7730, %v7725, %v7627
      %v7885 = vsel %vm7730, %v7727, %v7629
      %v7888 = vsel %vm7730, %v7728, %v7631
      %v7891 = vsel %vm7730, %v7729, %v7633
      %v7893 = vld [vmem:[%s3] sm:$0xf]
      %v7894 = vld [vmem:[%s4] sm:$0x7]
      %7896 = vset.pattern.permute.xlu0 0
      %7897 = vperm.xlu0 %7896, %v7894
      %v7898 = vpop.permute.xlu0 %7897
      %v7902 = vunpack.c.l.s4 1983009808
      %v7903 = vunpack.c.0.s8 %v7902
      %v7904 = vlaneseq
      %v7905 = vshrl.u32 %v7904, 7
      %v7906 = vsub.s32 %v7903, %v7905
      %v7907 = vrot.slane %v7893, %v7906
      %v7908 = vcombine.high %v7907, %v7907
      %v7911 = vsel %vm1658, %v7908, 0
      %v7913 = vsel %vm1658, %v7567, 0
      %v7915 = vsel %vm1658, %v7569, 0
      %v7917 = vsel %vm1658, %v7571, 0
      %v7919 = vsel %vm1658, %v7573, 0
      %v7921 = vsel %vm1658, %v7575, 0
      %v7923 = vsel %vm1658, %v7577, 0
      %v7925 = vsel %vm1658, %v7579, 0
      %v7927 = vsel %vm1658, %v7581, 0
      %v7929 = vsel %vm1658, %v7583, 0
      %v7931 = vsel %vm1658, %v7585, 0
      %v7933 = vsel %vm1658, %v7587, 0
      %v7935 = vsel %vm1658, %v7589, 0
      %v7937 = vsel %vm1658, %v7591, 0
      %v7939 = vsel %vm1658, %v7593, 0
      %v7941 = vsel %vm1658, %v7595, 0
      %v7943 = vsel %vm1658, %v7597, 0
      %v7945 = vsel %vm1658, %v7599, 0
      %v7947 = vsel %vm1658, %v7601, 0
      %v7949 = vsel %vm1658, %v7603, 0
      %v7951 = vsel %vm1658, %v7605, 0
      %v7953 = vsel %vm1658, %v7607, 0
      %v7955 = vsel %vm1658, %v7609, 0
      %v7957 = vsel %vm1658, %v7611, 0
      %v7959 = vsel %vm1658, %v7613, 0
      %v7961 = vsel %vm1658, %v7615, 0
      %v7963 = vsel %vm1658, %v7617, 0
      %v7965 = vsel %vm1658, %v7619, 0
      %v7967 = vsel %vm1658, %v7621, 0
      %v7969 = vsel %vm1658, %v7623, 0
      %v7971 = vsel %vm1658, %v7625, 0
      %v7973 = vsel %vm1658, %v7627, 0
      %v7975 = vsel %vm1658, %v7629, 0
      %v7977 = vsel %vm1658, %v7631, 0
      %v7979 = vsel %vm1658, %v7633, 0
      %7981 = vmatprep.subr.bf16.mxu0 %v7913
      %7982 = vmatpush1.bf16.xpose.msra.mxu0 %v7732
      %7983 = vmatprep.subr.bf16.mxu0 %v7915
      %7984 = vmatpush1.bf16.xpose.msra.mxu0 %v7735
      %7985 = vmatprep.subr.bf16.mxu0 %v7917
      %7986 = vmatpush1.bf16.xpose.msra.mxu0 %v7738
      %7987 = vmatprep.subr.bf16.mxu0 %v7919
      %7988 = vmatpush1.bf16.xpose.msra.mxu0 %v7741
      %7989 = vmatprep.subr.bf16.mxu0 %v7917
      %7990 = vmatpush1.bf16.xpose.msra.mxu0 %v7743
      %7991 = vmatprep.subr.bf16.mxu0 %v7919
      %7992 = vmatpush1.bf16.xpose.msra.mxu0 %v7745
      %7993 = vmatprep.subr.bf16.mxu0 %v7921
      %7994 = vmatpush1.bf16.xpose.msra.mxu0 %v7748
      %7995 = vmatprep.subr.bf16.mxu0 %v7923
      %7996 = vmatpush1.bf16.xpose.msra.mxu0 %v7751
      %7997 = vmatprep.subr.bf16.mxu0 %v7921
      %7998 = vmatpush1.bf16.xpose.msra.mxu0 %v7753
      %7999 = vmatprep.subr.bf16.mxu0 %v7923
      %8000 = vmatpush1.bf16.xpose.msra.mxu0 %v7755
      %8001 = vmatprep.subr.bf16.mxu0 %v7925
      %8002 = vmatpush1.bf16.xpose.msra.mxu0 %v7758
      %8003 = vmatprep.subr.bf16.mxu0 %v7927
      %8004 = vmatpush1.bf16.xpose.msra.mxu0 %v7761
      %8005 = vmatprep.subr.bf16.mxu0 %v7925
      %8006 = vmatpush1.bf16.xpose.msra.mxu0 %v7763
      %8007 = vmatprep.subr.bf16.mxu0 %v7927
      %8008 = vmatpush1.bf16.xpose.msra.mxu0 %v7765
      %8009 = vmatprep.subr.bf16.mxu0 %v7929
      %8010 = vmatpush1.bf16.xpose.msra.mxu0 %v7768
      %8011 = vmatprep.subr.bf16.mxu0 %v7931
      %8012 = vmatpush1.bf16.xpose.msra.mxu0 %v7771
      %8013 = vmatprep.mubr.bf16.mxu0 %v7911
      %8014 = vmatmul.mubr.bf16.gmra.mrb[0].mxu0 %v7907
      %v8015 = vpop.f32.mrb[0].mxu0
      %v8016 = vadd.f32 %v7898, %v8015
      %v8017 = vpop.f32.mrb[0].mxu0
      %v8018 = vadd.f32 %v7898, %v8017
      %v8019 = vpop.f32.mrb[0].mxu0
      %v8020 = vpop.f32.mrb[0].mxu0
      %8021 = vdwg.mxu0
      %8022 = vmatprep.subr.bf16.mxu0 %v7929
      %8023 = vmatpush1.bf16.xpose.msra.mxu0 %v7773
      %8024 = vmatprep.subr.bf16.mxu0 %v7931
      %8025 = vmatpush1.bf16.xpose.msra.mxu0 %v7775
      %8026 = vmatprep.subr.bf16.mxu0 %v7933
      %8027 = vmatpush1.bf16.xpose.msra.mxu0 %v7778
      %8028 = vmatprep.subr.bf16.mxu0 %v7935
      %8029 = vmatpush1.bf16.xpose.msra.mxu0 %v7781
      %8030 = vmatprep.subr.bf16.mxu0 %v7933
      %8031 = vmatpush1.bf16.xpose.msra.mxu0 %v7783
      %8032 = vmatprep.subr.bf16.mxu0 %v7935
      %8033 = vmatpush1.bf16.xpose.msra.mxu0 %v7785
      %8034 = vmatprep.subr.bf16.mxu0 %v7937
      %8035 = vmatpush1.bf16.xpose.msra.mxu0 %v7788
      %8036 = vmatprep.subr.bf16.mxu0 %v7939
      %8037 = vmatpush1.bf16.xpose.msra.mxu0 %v7791
      %8038 = vmatprep.subr.bf16.mxu0 %v7937
      %8039 = vmatpush1.bf16.xpose.msra.mxu0 %v7793
      %8040 = vmatprep.subr.bf16.mxu0 %v7939
      %8041 = vmatpush1.bf16.xpose.msra.mxu0 %v7795
      %8042 = vmatprep.subr.bf16.mxu0 %v7941
      %8043 = vmatpush1.bf16.xpose.msra.mxu0 %v7798
      %8044 = vmatprep.subr.bf16.mxu0 %v7943
      %8045 = vmatpush1.bf16.xpose.msra.mxu0 %v7801
      %8046 = vmatprep.subr.bf16.mxu0 %v7941
      %8047 = vmatpush1.bf16.xpose.msra.mxu0 %v7803
      %8048 = vmatprep.subr.bf16.mxu0 %v7943
      %8049 = vmatpush1.bf16.xpose.msra.mxu0 %v7805
      %8050 = vmatprep.subr.bf16.mxu0 %v7945
      %8051 = vmatpush1.bf16.xpose.msra.mxu0 %v7808
      %8052 = vmatprep.subr.bf16.mxu0 %v7947
      %8053 = vmatpush1.bf16.xpose.msra.mxu0 %v7811
      %8054 = vmatprep.mubr.bf16.mxu0 %v7911
      %8055 = vmatmul.mubr.bf16.gmra.mrb[0].mxu0 %v7907
      %v8056 = vpop.f32.mrb[0].mxu0
      %v8057 = vadd.f32 %v7898, %v8056
      %v8058 = vpop.f32.mrb[0].mxu0
      %v8059 = vadd.f32 %v7898, %v8058
      %v8060 = vpop.f32.mrb[0].mxu0
      %v8061 = vpop.f32.mrb[0].mxu0
      %8062 = vdwg.mxu0
      %8063 = vmatprep.subr.bf16.mxu0 %v7945
      %8064 = vmatpush1.bf16.xpose.msra.mxu0 %v7813
      %8065 = vmatprep.subr.bf16.mxu0 %v7947
      %8066 = vmatpush1.bf16.xpose.msra.mxu0 %v7815
      %8067 = vmatprep.subr.bf16.mxu0 %v7949
      %8068 = vmatpush1.bf16.xpose.msra.mxu0 %v7818
      %8069 = vmatprep.subr.bf16.mxu0 %v7951
      %8070 = vmatpush1.bf16.xpose.msra.mxu0 %v7821
      %8071 = vmatprep.subr.bf16.mxu0 %v7949
      %8072 = vmatpush1.bf16.xpose.msra.mxu0 %v7823
      %8073 = vmatprep.subr.bf16.mxu0 %v7951
      %8074 = vmatpush1.bf16.xpose.msra.mxu0 %v7825
      %8075 = vmatprep.subr.bf16.mxu0 %v7953
      %8076 = vmatpush1.bf16.xpose.msra.mxu0 %v7828
      %8077 = vmatprep.subr.bf16.mxu0 %v7955
      %8078 = vmatpush1.bf16.xpose.msra.mxu0 %v7831
      %8079 = vmatprep.subr.bf16.mxu0 %v7953
      %8080 = vmatpush1.bf16.xpose.msra.mxu0 %v7833
      %8081 = vmatprep.subr.bf16.mxu0 %v7955
      %8082 = vmatpush1.bf16.xpose.msra.mxu0 %v7835
      %8083 = vmatprep.subr.bf16.mxu0 %v7957
      %8084 = vmatpush1.bf16.xpose.msra.mxu0 %v7838
      %8085 = vmatprep.subr.bf16.mxu0 %v7959
      %8086 = vmatpush1.bf16.xpose.msra.mxu0 %v7841
      %8087 = vmatprep.subr.bf16.mxu0 %v7957
      %8088 = vmatpush1.bf16.xpose.msra.mxu0 %v7843
      %8089 = vmatprep.subr.bf16.mxu0 %v7959
      %8090 = vmatpush1.bf16.xpose.msra.mxu0 %v7845
      %8091 = vmatprep.subr.bf16.mxu0 %v7961
      %8092 = vmatpush1.bf16.xpose.msra.mxu0 %v7848
      %8093 = vmatprep.subr.bf16.mxu0 %v7963
      %8094 = vmatpush1.bf16.xpose.msra.mxu0 %v7851
      %8095 = vmatprep.mubr.bf16.mxu0 %v7911
      %8096 = vmatmul.mubr.bf16.gmra.mrb[0].mxu0 %v7907
      %v8097 = vpop.f32.mrb[0].mxu0
      %v8098 = vadd.f32 %v7898, %v8097
      %v8099 = vpop.f32.mrb[0].mxu0
      %v8100 = vadd.f32 %v7898, %v8099
      %v8101 = vpop.f32.mrb[0].mxu0
      %v8102 = vpop.f32.mrb[0].mxu0
      %8103 = vdwg.mxu0
      %8104 = vmatprep.subr.bf16.mxu0 %v7961
      %8105 = vmatpush1.bf16.xpose.msra.mxu0 %v7853
      %8106 = vmatprep.subr.bf16.mxu0 %v7963
      %8107 = vmatpush1.bf16.xpose.msra.mxu0 %v7855
      %8108 = vmatprep.subr.bf16.mxu0 %v7965
      %8109 = vmatpush1.bf16.xpose.msra.mxu0 %v7858
      %8110 = vmatprep.subr.bf16.mxu0 %v7967
      %8111 = vmatpush1.bf16.xpose.msra.mxu0 %v7861
      %8112 = vmatprep.subr.bf16.mxu0 %v7965
      %8113 = vmatpush1.bf16.xpose.msra.mxu0 %v7863
      %8114 = vmatprep.subr.bf16.mxu0 %v7967
      %8115 = vmatpush1.bf16.xpose.msra.mxu0 %v7865
      %8116 = vmatprep.subr.bf16.mxu0 %v7969
      %8117 = vmatpush1.bf16.xpose.msra.mxu0 %v7868
      %8118 = vmatprep.subr.bf16.mxu0 %v7971
      %8119 = vmatpush1.bf16.xpose.msra.mxu0 %v7871
      %8120 = vmatprep.subr.bf16.mxu0 %v7969
      %8121 = vmatpush1.bf16.xpose.msra.mxu0 %v7873
      %8122 = vmatprep.subr.bf16.mxu0 %v7971
      %8123 = vmatpush1.bf16.xpose.msra.mxu0 %v7875
      %8124 = vmatprep.subr.bf16.mxu0 %v7973
      %8125 = vmatpush1.bf16.xpose.msra.mxu0 %v7878
      %8126 = vmatprep.subr.bf16.mxu0 %v7975
      %8127 = vmatpush1.bf16.xpose.msra.mxu0 %v7881
      %8128 = vmatprep.subr.bf16.mxu0 %v7973
      %8129 = vmatpush1.bf16.xpose.msra.mxu0 %v7883
      %8130 = vmatprep.subr.bf16.mxu0 %v7975
      %8131 = vmatpush1.bf16.xpose.msra.mxu0 %v7885
      %8132 = vmatprep.subr.bf16.mxu0 %v7977
      %8133 = vmatpush1.bf16.xpose.msra.mxu0 %v7888
      %8134 = vmatprep.subr.bf16.mxu0 %v7979
      %8135 = vmatpush1.bf16.xpose.msra.mxu0 %v7891
      %8136 = vmatprep.mubr.bf16.mxu0 %v7911
      %8137 = vmatmul.mubr.bf16.gmra.mrb[0].mxu0 %v7907
      %v8138 = vpop.f32.mrb[0].mxu0
      %v8139 = vadd.f32 %v7898, %v8138
      %v8140 = vpop.f32.mrb[0].mxu0
      %v8141 = vadd.f32 %v7898, %v8140
      %v8142 = vpop.f32.mrb[0].mxu0
      %v8143 = vpop.f32.mrb[0].mxu0
      %8144 = vdwg.mxu0
      %v8145 = vsub.f32 0.0, %v8016
      %v8146 = vsub.f32 0.0, %v8018
      %v8147 = vsub.f32 0.0, %v8057
      %v8148 = vsub.f32 0.0, %v8059
      %v8149 = vsub.f32 0.0, %v8098
      %v8150 = vsub.f32 0.0, %v8100
      %v8151 = vsub.f32 0.0, %v8139
      %v8152 = vsub.f32 0.0, %v8141
      %v8153 = vmul.f32 %v8145, 1.442695
      %v8154 = vpow.pop %v8153
      %v8155 = vmul.f32 %v8146, 1.442695
      %v8156 = vpow.pop %v8155
      %v8157 = vmul.f32 %v8147, 1.442695
      %v8158 = vpow.pop %v8157
      %v8159 = vmul.f32 %v8148, 1.442695
      %v8160 = vpow.pop %v8159
      %v8161 = vmul.f32 %v8149, 1.442695
      %v8162 = vpow.pop %v8161
      %v8163 = vmul.f32 %v8150, 1.442695
      %v8164 = vpow.pop %v8163
      %v8165 = vmul.f32 %v8151, 1.442695
      %v8166 = vpow.pop %v8165
      %v8167 = vmul.f32 %v8152, 1.442695
      %v8168 = vpow.pop %v8167
      %v8169 = vadd.f32 %v8154, 1.0
      %v8170 = vadd.f32 %v8156, 1.0
      %v8171 = vadd.f32 %v8158, 1.0
      %v8172 = vadd.f32 %v8160, 1.0
      %v8173 = vadd.f32 %v8162, 1.0
      %v8174 = vadd.f32 %v8164, 1.0
      %v8175 = vadd.f32 %v8166, 1.0
      %v8176 = vadd.f32 %v8168, 1.0
      %v8177 = vrcp.pop %v8169
      %v8178 = vrcp.pop %v8170
      %v8179 = vrcp.pop %v8171
      %v8180 = vrcp.pop %v8172
      %v8181 = vrcp.pop %v8173
      %v8182 = vrcp.pop %v8174
      %v8183 = vrcp.pop %v8175
      %v8184 = vrcp.pop %v8176
      %v8193 = vcombine.low %v8177, %v8178
      %v8194 = vcombine.low %v8179, %v8180
      %v8195 = vcombine.low %v8181, %v8182
      %v8196 = vcombine.low %v8183, %v8184
      %8201 = vst [vmem:[%s224] sm:$0x77] %v8193
      %8202 = vst [vmem:[%s224 + $0x8] sm:$0x77] %v8194
      %8203 = vst [vmem:[%s224 + $0x10] sm:$0x77] %v8195
      %8204 = vst [vmem:[%s224 + $0x18] sm:$0x77] %v8196
      %p8205 = scmp.lt.s32.totalorder %s16, 1
      %s8206 = scalar_select %p8205, %s16, 1
      %s8207 = smul.addr %s8206, 8
      %s8208 = smul.addr %s8207, 4
      %s8209 = scalar_lea.vmem %s5, %s8208
      // Predicated region
      $region41: #{decoder_forward.1} parent=39 // pred_check
        %p8210 = pneg %p144
      $region42: #{decoder_forward.1} parent=39 // pred_check_branch
        %8212 = sbr.rel (%p8210) target = $region44
      $region43: #{decoder_forward.1} parent=39 // pred_region
        _
      $region44: #{decoder_forward.1} parent=39 // pred_fallthru
        _
    $region40: #{decoder_forward.1} parent=5 // pred_fallthru
      _
    %p8213 = scmp.le.s32.totalorder 2, %s11
    // Predicated region
    $region45: #{decoder_forward.1} parent=5 // pred_check
      %p8214 = pneg %p8213
    $region46: #{decoder_forward.1} parent=5 // pred_check_branch
      %8216 = sbr.rel (%p8214) target = $region48
    $region47: #{decoder_forward.1} parent=5 // pred_region
      %s8217 = ssub.s32 %s11, 2
      // Predicated region
      $region49: #{decoder_forward.1} parent=47 // pred_check
        %p8218 = pneg %p150
      $region50: #{decoder_forward.1} parent=47 // pred_check_branch
        %8220 = sbr.rel (%p8218) target = $region52
      $region51: #{decoder_forward.1} parent=47 // pred_region
        %p8221 = scmp.lt.s32.totalorder %s17, 1
        %s8222 = scalar_select %p8221, %s17, 1
        %s8223 = smul.addr %s8222, 8
        %s8224 = smul.addr %s8223, 4
        %s8225 = scalar_lea.vmem %s5, %s8224
      $region52: #{decoder_forward.1} parent=47 // pred_fallthru
        _
    $region48: #{decoder_forward.1} parent=5 // pred_fallthru
      _
  $region6: #{decoder_forward.1} parent=0 // loop_footer
    %s15 = sadd.s32 1, %s11
  $region7: #{decoder_forward.1} parent=0 // loop_footer_branch
    %10 = sbr.rel target = $region3
  $region8: #{decoder_forward.1} parent=0 // loop_exit
    _

</llo_original>
